<compile_context>
chip_gen: v7x
topology: tpu7x:2x2x1
jax: 0.10.0
libtpu: 0.0.40
codegen_flags: <defaults>
</compile_context>

<pallas_src>
import functools

import jax
import jax.numpy as jnp
from jax.experimental import pallas as pl
from jax.experimental.pallas import tpu as pltpu

# Logical layer sizes from the PyTorch module (fc1, fc2, fc3, fc5, fc6, fc4).
DIMS = [42, 500, 350, 200, 100, 20, 2]


def _round_up(x, m):
    return (x + m - 1) // m * m


PAD_DIMS = [_round_up(d, 128) for d in DIMS]   # [128, 512, 384, 256, 128, 128, 128]
IN_DIM = DIMS[0]
IN_PAD = PAD_DIMS[0]
OUT_PAD = PAD_DIMS[-1]

# Batch-tiling policy (see review): the whole network is <1 MiB of bf16 weights
# and ~0.2 GFLOP/tile, so the kernel is weight-DMA / overhead bound until the
# per-step activation I/O (~0.75 KiB/row) rivals the weight bytes.
_SINGLE_TILE_CAP = 1024   # largest batch handled as one resident tile
_SPLIT_ROWS = 2048        # only shard the grid across TCs (v7x) above this


def _is_v5():
    try:
        return "v5" in jax.devices()[0].device_kind.lower()
    except Exception:  # pragma: no cover - defensive, e.g. no devices yet
        return False


def _choose_tiling(b8):
    """Return (batch tile TB, dimension_semantics string) for padded batch b8."""
    if b8 <= _SINGLE_TILE_CAP:
        # One resident tile: weights DMA'd once, no cross-core duplication.
        return max(_round_up(b8, 16), 16), "arbitrary"
    tb = 128 if _is_v5() else 256
    # Only let the grid split across v7x's two TensorCores (each of which would
    # fetch its own copy of the weights) once activation traffic dominates.
    sem = "parallel" if b8 >= _SPLIT_ROWS else "arbitrary"
    return tb, sem


def mlp_kernel(x_ref,
               w1, b1, w2, b2, w3, b3, w5, b5, w6, b6, w4, b4,
               o_ref, xpad_ref):
    """Fused forward pass for one batch tile. All operands live in VMEM.

    x_ref is the raw (TB, 42) f32 block; the 42->128 lane zero-pad and the
    f32->bf16 cast happen here (no padded HBM copy of the input).
    Activations/weights are bf16; accumulation + biases are f32.
    """
    # Zero every step (NOT only on program_id==0: under "parallel" semantics a
    # second TensorCore never sees step 0 and has its own scratch).
    xpad_ref[...] = jnp.zeros_like(xpad_ref)
    xpad_ref[:, :IN_DIM] = x_ref[...].astype(jnp.bfloat16)   # masked lane store
    h = xpad_ref[...]                                         # (TB, 128) bf16

    def linear(a, w_ref, b_ref):
        return jnp.dot(a, w_ref[...], preferred_element_type=jnp.float32) + b_ref[...]

    def linear_relu(a, w_ref, b_ref):
        return jnp.maximum(linear(a, w_ref, b_ref), 0.0).astype(jnp.bfloat16)

    h = linear_relu(h, w1, b1)          # (TB, 512)
    h = linear_relu(h, w2, b2)          # (TB, 384)
    h = linear_relu(h, w3, b3)          # (TB, 256)
    h = linear_relu(h, w5, b5)          # (TB, 128)
    h = linear_relu(h, w6, b6)          # (TB, 128)
    o_ref[...] = linear(h, w4, b4).astype(o_ref.dtype)   # (TB, 128) f32


@functools.partial(jax.jit, static_argnames=("single_buffer",))
def _forward(x, params, *, single_buffer):
    B = x.shape[0]
    B8 = _round_up(max(B, 1), 8)
    TB, sem = _choose_tiling(B8)
    B_pad = _round_up(B8, TB)

    x = x.astype(jnp.float32)
    if B_pad != B:
        x = jnp.pad(x, ((0, B_pad - B), (0, 0)))   # batch pad only (rows of zeros)

    grid = (B_pad // TB,)

    # Weights & biases: full blocks with constant index_map -> DMA'd once and
    # resident across grid steps. Single-buffer them (the second pipeline
    # buffer is never used for a constant block index).
    if single_buffer:
        def full_spec(shape):
            return pl.BlockSpec(shape, lambda i: (0, 0),
                                pipeline_mode=pl.Buffered(1))
    else:
        def full_spec(shape):
            return pl.BlockSpec(shape, lambda i: (0, 0))

    # x block: last dim == full array dim (42), so no HBM lane padding needed.
    in_specs = [pl.BlockSpec((TB, IN_DIM), lambda i: (i, 0))]
    flat_params = []
    for (w, b) in params:
        in_specs.append(full_spec(w.shape))
        in_specs.append(full_spec(b.shape))
        flat_params.extend([w, b])

    out_specs = pl.BlockSpec((TB, OUT_PAD), lambda i: (i, 0))

    out_pad = pl.pallas_call(
        mlp_kernel,
        out_shape=jax.ShapeDtypeStruct((B_pad, OUT_PAD), jnp.float32),
        grid_spec=pltpu.PrefetchScalarGridSpec(
            num_scalar_prefetch=0,
            grid=grid,
            in_specs=in_specs,
            out_specs=out_specs,
            scratch_shapes=[pltpu.VMEM((TB, IN_PAD), jnp.bfloat16)],
        ),
        compiler_params=pltpu.CompilerParams(
            dimension_semantics=(sem,),
        ),
    )(x, *flat_params)

    return out_pad[:B, :DIMS[-1]]


# Cached pipeline-mode capability flag: if pl.Buffered(1) is rejected by this
# jax/Mosaic version, fall back once to default double-buffered weight specs.
_USE_BUFFERED = [True]


def bank_nn_forward(x, params):
    """x: (B, 42) float. params: list of (W_pad bf16 (in,out), b_pad f32 (1,out)).

    Returns (B, 2) float32, matching bankNN.forward.
    """
    if _USE_BUFFERED[0]:
        try:
            return _forward(x, params, single_buffer=True)
        except Exception:
            _USE_BUFFERED[0] = False
    return _forward(x, params, single_buffer=False)


def init_params(key):
    """Deterministic init mimicking PyTorch nn.Linear default (U[-k, k], k=1/sqrt(fan_in)).

    Weights are stored as (in, out), zero-padded to PAD_DIMS, cast to bf16.
    Biases are stored as (1, out_pad) in f32.
    """
    params = []
    for li in range(len(DIMS) - 1):
        fan_in, fan_out = DIMS[li], DIMS[li + 1]
        key, kw, kb = jax.random.split(key, 3)
        bound = 1.0 / jnp.sqrt(fan_in)
        w = jax.random.uniform(kw, (fan_in, fan_out), jnp.float32, -bound, bound)
        b = jax.random.uniform(kb, (fan_out,), jnp.float32, -bound, bound)

        w_pad = jnp.zeros((PAD_DIMS[li], PAD_DIMS[li + 1]), jnp.float32)
        w_pad = w_pad.at[:fan_in, :fan_out].set(w).astype(jnp.bfloat16)
        b_pad = jnp.zeros((1, PAD_DIMS[li + 1]), jnp.float32)
        b_pad = b_pad.at[0, :fan_out].set(b)
        params.append((w_pad, b_pad))
    return params


def reference_forward(x, params):
    """Plain-JAX f32 reference of bankNN.forward using the same (bf16) weights."""
    h = x.astype(jnp.bfloat16).astype(jnp.float32)
    h = jnp.pad(h, ((0, 0), (0, IN_PAD - IN_DIM)))
    for li, (w, b) in enumerate(params):
        h = h @ w.astype(jnp.float32) + b
        if li < len(params) - 1:
            h = jnp.maximum(h, 0.0)
    return h[:, :DIMS[-1]]


if __name__ == "__main__":
    key = jax.random.PRNGKey(0)
    key, kx1, kx2, kx3 = jax.random.split(key, 4)
    params = init_params(key)

    # Tiny batch: single grid step, TB = 16 (native bf16 tile height).
    x1 = jax.random.normal(kx1, (4, 42), jnp.float32)
    o1 = jax.block_until_ready(bank_nn_forward(x1, params))
    r1 = reference_forward(x1, params)
    assert o1.shape == (4, 2), o1.shape
    assert jnp.allclose(o1, r1, atol=2e-2, rtol=2e-2)

    # Medium batch: still one resident tile, weights fetched exactly once.
    x2 = jax.random.normal(kx2, (512, 42), jnp.float32)
    o2 = jax.block_until_ready(bank_nn_forward(x2, params))
    r2 = reference_forward(x2, params)
    assert o2.shape == (512, 2), o2.shape
    assert jnp.allclose(o2, r2, atol=2e-2, rtol=2e-2)

    # Large batch: tiled grid (TB=128 on v5e, 256 otherwise), "parallel"
    # semantics so v7x's two TensorCores split the work.
    x3 = jax.random.normal(kx3, (2176, 42), jnp.float32)
    o3 = jax.block_until_ready(bank_nn_forward(x3, params))
    r3 = reference_forward(x3, params)
    assert o3.shape == (2176, 2), o3.shape
    assert jnp.allclose(o3, r3, atol=2e-2, rtol=2e-2)

    print("KERNEL_OK")
</pallas_src>

<mosaic_0001>
module attributes {stable_mosaic.version = 11 : i64} {
  func.func @mlp_kernel(%arg0: i32, %arg1: memref<16x42xf32, #tpu.memory_space<vmem>>, %arg2: memref<128x512xbf16, #tpu.memory_space<vmem>>, %arg3: memref<1x512xf32, #tpu.memory_space<vmem>>, %arg4: memref<512x384xbf16, #tpu.memory_space<vmem>>, %arg5: memref<1x384xf32, #tpu.memory_space<vmem>>, %arg6: memref<384x256xbf16, #tpu.memory_space<vmem>>, %arg7: memref<1x256xf32, #tpu.memory_space<vmem>>, %arg8: memref<256x128xbf16, #tpu.memory_space<vmem>>, %arg9: memref<1x128xf32, #tpu.memory_space<vmem>>, %arg10: memref<128x128xbf16, #tpu.memory_space<vmem>>, %arg11: memref<1x128xf32, #tpu.memory_space<vmem>>, %arg12: memref<128x128xbf16, #tpu.memory_space<vmem>>, %arg13: memref<1x128xf32, #tpu.memory_space<vmem>>, %arg14: memref<16x128xf32, #tpu.memory_space<vmem>>, %arg15: memref<16x128xbf16, #tpu.memory_space<vmem>>) attributes {dimension_semantics = [#tpu.dimension_semantics<arbitrary>], iteration_bounds = array<i64: 1>, scalar_prefetch = 0 : i64, scratch_operands = 1 : i64, tpu.core_type = #tpu.core_type<tc>, window_params = [{transform_indices = @transform_0, window_bounds = array<i64: 16, 42>}, {pipeline_mode = #tpu.pipeline_mode<synchronous>, transform_indices = @transform_1, window_bounds = array<i64: 128, 512>}, {pipeline_mode = #tpu.pipeline_mode<synchronous>, transform_indices = @transform_2, window_bounds = array<i64: 1, 512>}, {pipeline_mode = #tpu.pipeline_mode<synchronous>, transform_indices = @transform_3, window_bounds = array<i64: 512, 384>}, {pipeline_mode = #tpu.pipeline_mode<synchronous>, transform_indices = @transform_4, window_bounds = array<i64: 1, 384>}, {pipeline_mode = #tpu.pipeline_mode<synchronous>, transform_indices = @transform_5, window_bounds = array<i64: 384, 256>}, {pipeline_mode = #tpu.pipeline_mode<synchronous>, transform_indices = @transform_6, window_bounds = array<i64: 1, 256>}, {pipeline_mode = #tpu.pipeline_mode<synchronous>, transform_indices = @transform_7, window_bounds = array<i64: 256, 128>}, {pipeline_mode = #tpu.pipeline_mode<synchronous>, transform_indices = @transform_8, window_bounds = array<i64: 1, 128>}, {pipeline_mode = #tpu.pipeline_mode<synchronous>, transform_indices = @transform_9, window_bounds = array<i64: 128, 128>}, {pipeline_mode = #tpu.pipeline_mode<synchronous>, transform_indices = @transform_10, window_bounds = array<i64: 1, 128>}, {pipeline_mode = #tpu.pipeline_mode<synchronous>, transform_indices = @transform_11, window_bounds = array<i64: 128, 128>}, {pipeline_mode = #tpu.pipeline_mode<synchronous>, transform_indices = @transform_12, window_bounds = array<i64: 1, 128>}, {transform_indices = @transform_13, window_bounds = array<i64: 16, 128>}]} {
    %cst = arith.constant 0.000000e+00 : bf16
    %0 = vector.broadcast %cst : bf16 to vector<16x128xbf16>
    %c0 = arith.constant 0 : index
    %c0_0 = arith.constant 0 : index
    %1 = vector.load %arg15[%c0, %c0_0] : memref<16x128xbf16, #tpu.memory_space<vmem>>, vector<16x128xbf16>
    tpu.vector_store %arg15[%c0, %c0_0], %0 {strides = array<i32>} : memref<16x128xbf16, #tpu.memory_space<vmem>>, vector<16x128xbf16>,
    %c0_1 = arith.constant 0 : index
    %c0_2 = arith.constant 0 : index
    %2 = vector.load %arg1[%c0_1, %c0_2] : memref<16x42xf32, #tpu.memory_space<vmem>>, vector<16x42xf32>
    %3 = arith.truncf %2 : vector<16x42xf32> to vector<16x42xbf16>
    %c0_3 = arith.constant 0 : index
    %c0_4 = arith.constant 0 : index
    %4 = vector.load %arg15[%c0_3, %c0_4] : memref<16x128xbf16, #tpu.memory_space<vmem>>, vector<16x42xbf16>
    tpu.vector_store %arg15[%c0_3, %c0_4], %3 {strides = array<i32>} : memref<16x128xbf16, #tpu.memory_space<vmem>>, vector<16x42xbf16>,
    %c0_5 = arith.constant 0 : index
    %c0_6 = arith.constant 0 : index
    %5 = vector.load %arg15[%c0_5, %c0_6] : memref<16x128xbf16, #tpu.memory_space<vmem>>, vector<16x128xbf16>
    %c0_7 = arith.constant 0 : index
    %c0_8 = arith.constant 0 : index
    %6 = vector.load %arg2[%c0_7, %c0_8] : memref<128x512xbf16, #tpu.memory_space<vmem>>, vector<128x512xbf16>
    %cst_9 = arith.constant dense<0.000000e+00> : vector<16x512xf32>
    %7 = tpu.matmul %5, %6, %cst_9 {dimension_numbers = #tpu.dot_dimension_numbers<[1], [0], [0], [1], [0, 0, 1, 1], [], []>} : vector<16x128xbf16>, vector<128x512xbf16>, vector<16x512xf32> -> vector<16x512xf32>
    %c0_10 = arith.constant 0 : index
    %c0_11 = arith.constant 0 : index
    %8 = vector.load %arg3[%c0_10, %c0_11] : memref<1x512xf32, #tpu.memory_space<vmem>>, vector<1x512xf32>
    %9 = vector.broadcast %8 : vector<1x512xf32> to vector<16x512xf32>
    %10 = arith.addf %7, %9 : vector<16x512xf32>
    %cst_12 = arith.constant 0.000000e+00 : f32
    %11 = vector.broadcast %cst_12 : f32 to vector<16x512xf32>
    %12 = arith.maximumf %10, %11 : vector<16x512xf32>
    %13 = arith.truncf %12 : vector<16x512xf32> to vector<16x512xbf16>
    %c0_13 = arith.constant 0 : index
    %c0_14 = arith.constant 0 : index
    %14 = vector.load %arg4[%c0_13, %c0_14] : memref<512x384xbf16, #tpu.memory_space<vmem>>, vector<512x384xbf16>
    %cst_15 = arith.constant dense<0.000000e+00> : vector<16x384xf32>
    %15 = tpu.matmul %13, %14, %cst_15 {dimension_numbers = #tpu.dot_dimension_numbers<[1], [0], [0], [1], [0, 0, 1, 1], [], []>} : vector<16x512xbf16>, vector<512x384xbf16>, vector<16x384xf32> -> vector<16x384xf32>
    %c0_16 = arith.constant 0 : index
    %c0_17 = arith.constant 0 : index
    %16 = vector.load %arg5[%c0_16, %c0_17] : memref<1x384xf32, #tpu.memory_space<vmem>>, vector<1x384xf32>
    %17 = vector.broadcast %16 : vector<1x384xf32> to vector<16x384xf32>
    %18 = arith.addf %15, %17 : vector<16x384xf32>
    %cst_18 = arith.constant 0.000000e+00 : f32
    %19 = vector.broadcast %cst_18 : f32 to vector<16x384xf32>
    %20 = arith.maximumf %18, %19 : vector<16x384xf32>
    %21 = arith.truncf %20 : vector<16x384xf32> to vector<16x384xbf16>
    %c0_19 = arith.constant 0 : index
    %c0_20 = arith.constant 0 : index
    %22 = vector.load %arg6[%c0_19, %c0_20] : memref<384x256xbf16, #tpu.memory_space<vmem>>, vector<384x256xbf16>
    %cst_21 = arith.constant dense<0.000000e+00> : vector<16x256xf32>
    %23 = tpu.matmul %21, %22, %cst_21 {dimension_numbers = #tpu.dot_dimension_numbers<[1], [0], [0], [1], [0, 0, 1, 1], [], []>} : vector<16x384xbf16>, vector<384x256xbf16>, vector<16x256xf32> -> vector<16x256xf32>
    %c0_22 = arith.constant 0 : index
    %c0_23 = arith.constant 0 : index
    %24 = vector.load %arg7[%c0_22, %c0_23] : memref<1x256xf32, #tpu.memory_space<vmem>>, vector<1x256xf32>
    %25 = vector.broadcast %24 : vector<1x256xf32> to vector<16x256xf32>
    %26 = arith.addf %23, %25 : vector<16x256xf32>
    %cst_24 = arith.constant 0.000000e+00 : f32
    %27 = vector.broadcast %cst_24 : f32 to vector<16x256xf32>
    %28 = arith.maximumf %26, %27 : vector<16x256xf32>
    %29 = arith.truncf %28 : vector<16x256xf32> to vector<16x256xbf16>
    %c0_25 = arith.constant 0 : index
    %c0_26 = arith.constant 0 : index
    %30 = vector.load %arg8[%c0_25, %c0_26] : memref<256x128xbf16, #tpu.memory_space<vmem>>, vector<256x128xbf16>
    %cst_27 = arith.constant dense<0.000000e+00> : vector<16x128xf32>
    %31 = tpu.matmul %29, %30, %cst_27 {dimension_numbers = #tpu.dot_dimension_numbers<[1], [0], [0], [1], [0, 0, 1, 1], [], []>} : vector<16x256xbf16>, vector<256x128xbf16>, vector<16x128xf32> -> vector<16x128xf32>
    %c0_28 = arith.constant 0 : index
    %c0_29 = arith.constant 0 : index
    %32 = vector.load %arg9[%c0_28, %c0_29] : memref<1x128xf32, #tpu.memory_space<vmem>>, vector<1x128xf32>
    %33 = vector.broadcast %32 : vector<1x128xf32> to vector<16x128xf32>
    %34 = arith.addf %31, %33 : vector<16x128xf32>
    %cst_30 = arith.constant 0.000000e+00 : f32
    %35 = vector.broadcast %cst_30 : f32 to vector<16x128xf32>
    %36 = arith.maximumf %34, %35 : vector<16x128xf32>
    %37 = arith.truncf %36 : vector<16x128xf32> to vector<16x128xbf16>
    %c0_31 = arith.constant 0 : index
    %c0_32 = arith.constant 0 : index
    %38 = vector.load %arg10[%c0_31, %c0_32] : memref<128x128xbf16, #tpu.memory_space<vmem>>, vector<128x128xbf16>
    %cst_33 = arith.constant dense<0.000000e+00> : vector<16x128xf32>
    %39 = tpu.matmul %37, %38, %cst_33 {dimension_numbers = #tpu.dot_dimension_numbers<[1], [0], [0], [1], [0, 0, 1, 1], [], []>} : vector<16x128xbf16>, vector<128x128xbf16>, vector<16x128xf32> -> vector<16x128xf32>
    %c0_34 = arith.constant 0 : index
    %c0_35 = arith.constant 0 : index
    %40 = vector.load %arg11[%c0_34, %c0_35] : memref<1x128xf32, #tpu.memory_space<vmem>>, vector<1x128xf32>
    %41 = vector.broadcast %40 : vector<1x128xf32> to vector<16x128xf32>
    %42 = arith.addf %39, %41 : vector<16x128xf32>
    %cst_36 = arith.constant 0.000000e+00 : f32
    %43 = vector.broadcast %cst_36 : f32 to vector<16x128xf32>
    %44 = arith.maximumf %42, %43 : vector<16x128xf32>
    %45 = arith.truncf %44 : vector<16x128xf32> to vector<16x128xbf16>
    %c0_37 = arith.constant 0 : index
    %c0_38 = arith.constant 0 : index
    %46 = vector.load %arg12[%c0_37, %c0_38] : memref<128x128xbf16, #tpu.memory_space<vmem>>, vector<128x128xbf16>
    %cst_39 = arith.constant dense<0.000000e+00> : vector<16x128xf32>
    %47 = tpu.matmul %45, %46, %cst_39 {dimension_numbers = #tpu.dot_dimension_numbers<[1], [0], [0], [1], [0, 0, 1, 1], [], []>} : vector<16x128xbf16>, vector<128x128xbf16>, vector<16x128xf32> -> vector<16x128xf32>
    %c0_40 = arith.constant 0 : index
    %c0_41 = arith.constant 0 : index
    %48 = vector.load %arg13[%c0_40, %c0_41] : memref<1x128xf32, #tpu.memory_space<vmem>>, vector<1x128xf32>
    %49 = vector.broadcast %48 : vector<1x128xf32> to vector<16x128xf32>
    %50 = arith.addf %47, %49 : vector<16x128xf32>
    %c0_42 = arith.constant 0 : index
    %c0_43 = arith.constant 0 : index
    %51 = vector.load %arg14[%c0_42, %c0_43] : memref<16x128xf32, #tpu.memory_space<vmem>>, vector<16x128xf32>
    tpu.vector_store %arg14[%c0_42, %c0_43], %50 {strides = array<i32>} : memref<16x128xf32, #tpu.memory_space<vmem>>, vector<16x128xf32>,
    return
  }
  func.func @transform_0(%arg0: i32) -> (i32, i32) {
    %c0_i32 = arith.constant 0 : i32
    %c0_i32_0 = arith.constant 0 : i32
    return %arg0, %c0_i32 : i32, i32
  }
  func.func @transform_1(%arg0: i32) -> (i32, i32) {
    %c0_i32 = arith.constant 0 : i32
    %c0_i32_0 = arith.constant 0 : i32
    %c0_i32_1 = arith.constant 0 : i32
    return %c0_i32, %c0_i32_0 : i32, i32
  }
  func.func @transform_2(%arg0: i32) -> (i32, i32) {
    %c0_i32 = arith.constant 0 : i32
    %c0_i32_0 = arith.constant 0 : i32
    %c0_i32_1 = arith.constant 0 : i32
    return %c0_i32, %c0_i32_0 : i32, i32
  }
  func.func @transform_3(%arg0: i32) -> (i32, i32) {
    %c0_i32 = arith.constant 0 : i32
    %c0_i32_0 = arith.constant 0 : i32
    %c0_i32_1 = arith.constant 0 : i32
    return %c0_i32, %c0_i32_0 : i32, i32
  }
  func.func @transform_4(%arg0: i32) -> (i32, i32) {
    %c0_i32 = arith.constant 0 : i32
    %c0_i32_0 = arith.constant 0 : i32
    %c0_i32_1 = arith.constant 0 : i32
    return %c0_i32, %c0_i32_0 : i32, i32
  }
  func.func @transform_5(%arg0: i32) -> (i32, i32) {
    %c0_i32 = arith.constant 0 : i32
    %c0_i32_0 = arith.constant 0 : i32
    %c0_i32_1 = arith.constant 0 : i32
    return %c0_i32, %c0_i32_0 : i32, i32
  }
  func.func @transform_6(%arg0: i32) -> (i32, i32) {
    %c0_i32 = arith.constant 0 : i32
    %c0_i32_0 = arith.constant 0 : i32
    %c0_i32_1 = arith.constant 0 : i32
    return %c0_i32, %c0_i32_0 : i32, i32
  }
  func.func @transform_7(%arg0: i32) -> (i32, i32) {
    %c0_i32 = arith.constant 0 : i32
    %c0_i32_0 = arith.constant 0 : i32
    %c0_i32_1 = arith.constant 0 : i32
    return %c0_i32, %c0_i32_0 : i32, i32
  }
  func.func @transform_8(%arg0: i32) -> (i32, i32) {
    %c0_i32 = arith.constant 0 : i32
    %c0_i32_0 = arith.constant 0 : i32
    %c0_i32_1 = arith.constant 0 : i32
    return %c0_i32, %c0_i32_0 : i32, i32
  }
  func.func @transform_9(%arg0: i32) -> (i32, i32) {
    %c0_i32 = arith.constant 0 : i32
    %c0_i32_0 = arith.constant 0 : i32
    %c0_i32_1 = arith.constant 0 : i32
    return %c0_i32, %c0_i32_0 : i32, i32
  }
  func.func @transform_10(%arg0: i32) -> (i32, i32) {
    %c0_i32 = arith.constant 0 : i32
    %c0_i32_0 = arith.constant 0 : i32
    %c0_i32_1 = arith.constant 0 : i32
    return %c0_i32, %c0_i32_0 : i32, i32
  }
  func.func @transform_11(%arg0: i32) -> (i32, i32) {
    %c0_i32 = arith.constant 0 : i32
    %c0_i32_0 = arith.constant 0 : i32
    %c0_i32_1 = arith.constant 0 : i32
    return %c0_i32, %c0_i32_0 : i32, i32
  }
  func.func @transform_12(%arg0: i32) -> (i32, i32) {
    %c0_i32 = arith.constant 0 : i32
    %c0_i32_0 = arith.constant 0 : i32
    %c0_i32_1 = arith.constant 0 : i32
    return %c0_i32, %c0_i32_0 : i32, i32
  }
  func.func @transform_13(%arg0: i32) -> (i32, i32) {
    %c0_i32 = arith.constant 0 : i32
    %c0_i32_0 = arith.constant 0 : i32
    return %arg0, %c0_i32 : i32, i32
  }
}

module attributes {stable_mosaic.version = 11 : i64} {
  func.func @mlp_kernel(%arg0: i32, %arg1: memref<16x42xf32, #tpu.memory_space<vmem>>, %arg2: memref<128x512xbf16, #tpu.memory_space<vmem>>, %arg3: memref<1x512xf32, #tpu.memory_space<vmem>>, %arg4: memref<512x384xbf16, #tpu.memory_space<vmem>>, %arg5: memref<1x384xf32, #tpu.memory_space<vmem>>, %arg6: memref<384x256xbf16, #tpu.memory_space<vmem>>, %arg7: memref<1x256xf32, #tpu.memory_space<vmem>>, %arg8: memref<256x128xbf16, #tpu.memory_space<vmem>>, %arg9: memref<1x128xf32, #tpu.memory_space<vmem>>, %arg10: memref<128x128xbf16, #tpu.memory_space<vmem>>, %arg11: memref<1x128xf32, #tpu.memory_space<vmem>>, %arg12: memref<128x128xbf16, #tpu.memory_space<vmem>>, %arg13: memref<1x128xf32, #tpu.memory_space<vmem>>, %arg14: memref<16x128xf32, #tpu.memory_space<vmem>>, %arg15: memref<16x128xbf16, #tpu.memory_space<vmem>>) attributes {dimension_semantics = [#tpu.dimension_semantics<arbitrary>], iteration_bounds = array<i64: 1>, scalar_prefetch = 0 : i64, scratch_operands = 1 : i64, tpu.core_type = #tpu.core_type<tc>, window_params = [{transform_indices = @transform_0, window_bounds = array<i64: 16, 42>}, {pipeline_mode = #tpu.pipeline_mode<synchronous>, transform_indices = @transform_1, window_bounds = array<i64: 128, 512>}, {pipeline_mode = #tpu.pipeline_mode<synchronous>, transform_indices = @transform_2, window_bounds = array<i64: 1, 512>}, {pipeline_mode = #tpu.pipeline_mode<synchronous>, transform_indices = @transform_3, window_bounds = array<i64: 512, 384>}, {pipeline_mode = #tpu.pipeline_mode<synchronous>, transform_indices = @transform_4, window_bounds = array<i64: 1, 384>}, {pipeline_mode = #tpu.pipeline_mode<synchronous>, transform_indices = @transform_5, window_bounds = array<i64: 384, 256>}, {pipeline_mode = #tpu.pipeline_mode<synchronous>, transform_indices = @transform_6, window_bounds = array<i64: 1, 256>}, {pipeline_mode = #tpu.pipeline_mode<synchronous>, transform_indices = @transform_7, window_bounds = array<i64: 256, 128>}, {pipeline_mode = #tpu.pipeline_mode<synchronous>, transform_indices = @transform_8, window_bounds = array<i64: 1, 128>}, {pipeline_mode = #tpu.pipeline_mode<synchronous>, transform_indices = @transform_9, window_bounds = array<i64: 128, 128>}, {pipeline_mode = #tpu.pipeline_mode<synchronous>, transform_indices = @transform_10, window_bounds = array<i64: 1, 128>}, {pipeline_mode = #tpu.pipeline_mode<synchronous>, transform_indices = @transform_11, window_bounds = array<i64: 128, 128>}, {pipeline_mode = #tpu.pipeline_mode<synchronous>, transform_indices = @transform_12, window_bounds = array<i64: 1, 128>}, {transform_indices = @transform_13, window_bounds = array<i64: 16, 128>}]} {
    %cst = arith.constant 0.000000e+00 : bf16
    %0 = vector.broadcast %cst : bf16 to vector<16x128xbf16>
    %c0 = arith.constant 0 : index
    %c0_0 = arith.constant 0 : index
    %1 = vector.load %arg15[%c0, %c0_0] : memref<16x128xbf16, #tpu.memory_space<vmem>>, vector<16x128xbf16>
    tpu.vector_store %arg15[%c0, %c0_0], %0 {strides = array<i32>} : memref<16x128xbf16, #tpu.memory_space<vmem>>, vector<16x128xbf16>,
    %c0_1 = arith.constant 0 : index
    %c0_2 = arith.constant 0 : index
    %2 = vector.load %arg1[%c0_1, %c0_2] : memref<16x42xf32, #tpu.memory_space<vmem>>, vector<16x42xf32>
    %3 = arith.truncf %2 : vector<16x42xf32> to vector<16x42xbf16>
    %c0_3 = arith.constant 0 : index
    %c0_4 = arith.constant 0 : index
    %4 = vector.load %arg15[%c0_3, %c0_4] : memref<16x128xbf16, #tpu.memory_space<vmem>>, vector<16x42xbf16>
    tpu.vector_store %arg15[%c0_3, %c0_4], %3 {strides = array<i32>} : memref<16x128xbf16, #tpu.memory_space<vmem>>, vector<16x42xbf16>,
    %c0_5 = arith.constant 0 : index
    %c0_6 = arith.constant 0 : index
    %5 = vector.load %arg15[%c0_5, %c0_6] : memref<16x128xbf16, #tpu.memory_space<vmem>>, vector<16x128xbf16>
    %c0_7 = arith.constant 0 : index
    %c0_8 = arith.constant 0 : index
    %6 = vector.load %arg2[%c0_7, %c0_8] : memref<128x512xbf16, #tpu.memory_space<vmem>>, vector<128x512xbf16>
    %cst_9 = arith.constant dense<0.000000e+00> : vector<16x512xf32>
    %7 = tpu.matmul %5, %6, %cst_9 {dimension_numbers = #tpu.dot_dimension_numbers<[1], [0], [0], [1], [0, 0, 1, 1], [], []>} : vector<16x128xbf16>, vector<128x512xbf16>, vector<16x512xf32> -> vector<16x512xf32>
    %c0_10 = arith.constant 0 : index
    %c0_11 = arith.constant 0 : index
    %8 = vector.load %arg3[%c0_10, %c0_11] : memref<1x512xf32, #tpu.memory_space<vmem>>, vector<1x512xf32>
    %9 = vector.broadcast %8 : vector<1x512xf32> to vector<16x512xf32>
    %10 = arith.addf %7, %9 : vector<16x512xf32>
    %cst_12 = arith.constant 0.000000e+00 : f32
    %11 = vector.broadcast %cst_12 : f32 to vector<16x512xf32>
    %12 = arith.maximumf %10, %11 : vector<16x512xf32>
    %13 = arith.truncf %12 : vector<16x512xf32> to vector<16x512xbf16>
    %c0_13 = arith.constant 0 : index
    %c0_14 = arith.constant 0 : index
    %14 = vector.load %arg4[%c0_13, %c0_14] : memref<512x384xbf16, #tpu.memory_space<vmem>>, vector<512x384xbf16>
    %cst_15 = arith.constant dense<0.000000e+00> : vector<16x384xf32>
    %15 = tpu.matmul %13, %14, %cst_15 {dimension_numbers = #tpu.dot_dimension_numbers<[1], [0], [0], [1], [0, 0, 1, 1], [], []>} : vector<16x512xbf16>, vector<512x384xbf16>, vector<16x384xf32> -> vector<16x384xf32>
    %c0_16 = arith.constant 0 : index
    %c0_17 = arith.constant 0 : index
    %16 = vector.load %arg5[%c0_16, %c0_17] : memref<1x384xf32, #tpu.memory_space<vmem>>, vector<1x384xf32>
    %17 = vector.broadcast %16 : vector<1x384xf32> to vector<16x384xf32>
    %18 = arith.addf %15, %17 : vector<16x384xf32>
    %cst_18 = arith.constant 0.000000e+00 : f32
    %19 = vector.broadcast %cst_18 : f32 to vector<16x384xf32>
    %20 = arith.maximumf %18, %19 : vector<16x384xf32>
    %21 = arith.truncf %20 : vector<16x384xf32> to vector<16x384xbf16>
    %c0_19 = arith.constant 0 : index
    %c0_20 = arith.constant 0 : index
    %22 = vector.load %arg6[%c0_19, %c0_20] : memref<384x256xbf16, #tpu.memory_space<vmem>>, vector<384x256xbf16>
    %cst_21 = arith.constant dense<0.000000e+00> : vector<16x256xf32>
    %23 = tpu.matmul %21, %22, %cst_21 {dimension_numbers = #tpu.dot_dimension_numbers<[1], [0], [0], [1], [0, 0, 1, 1], [], []>} : vector<16x384xbf16>, vector<384x256xbf16>, vector<16x256xf32> -> vector<16x256xf32>
    %c0_22 = arith.constant 0 : index
    %c0_23 = arith.constant 0 : index
    %24 = vector.load %arg7[%c0_22, %c0_23] : memref<1x256xf32, #tpu.memory_space<vmem>>, vector<1x256xf32>
    %25 = vector.broadcast %24 : vector<1x256xf32> to vector<16x256xf32>
    %26 = arith.addf %23, %25 : vector<16x256xf32>
    %cst_24 = arith.constant 0.000000e+00 : f32
    %27 = vector.broadcast %cst_24 : f32 to vector<16x256xf32>
    %28 = arith.maximumf %26, %27 : vector<16x256xf32>
    %29 = arith.truncf %28 : vector<16x256xf32> to vector<16x256xbf16>
    %c0_25 = arith.constant 0 : index
    %c0_26 = arith.constant 0 : index
    %30 = vector.load %arg8[%c0_25, %c0_26] : memref<256x128xbf16, #tpu.memory_space<vmem>>, vector<256x128xbf16>
    %cst_27 = arith.constant dense<0.000000e+00> : vector<16x128xf32>
    %31 = tpu.matmul %29, %30, %cst_27 {dimension_numbers = #tpu.dot_dimension_numbers<[1], [0], [0], [1], [0, 0, 1, 1], [], []>} : vector<16x256xbf16>, vector<256x128xbf16>, vector<16x128xf32> -> vector<16x128xf32>
    %c0_28 = arith.constant 0 : index
    %c0_29 = arith.constant 0 : index
    %32 = vector.load %arg9[%c0_28, %c0_29] : memref<1x128xf32, #tpu.memory_space<vmem>>, vector<1x128xf32>
    %33 = vector.broadcast %32 : vector<1x128xf32> to vector<16x128xf32>
    %34 = arith.addf %31, %33 : vector<16x128xf32>
    %cst_30 = arith.constant 0.000000e+00 : f32
    %35 = vector.broadcast %cst_30 : f32 to vector<16x128xf32>
    %36 = arith.maximumf %34, %35 : vector<16x128xf32>
    %37 = arith.truncf %36 : vector<16x128xf32> to vector<16x128xbf16>
    %c0_31 = arith.constant 0 : index
    %c0_32 = arith.constant 0 : index
    %38 = vector.load %arg10[%c0_31, %c0_32] : memref<128x128xbf16, #tpu.memory_space<vmem>>, vector<128x128xbf16>
    %cst_33 = arith.constant dense<0.000000e+00> : vector<16x128xf32>
    %39 = tpu.matmul %37, %38, %cst_33 {dimension_numbers = #tpu.dot_dimension_numbers<[1], [0], [0], [1], [0, 0, 1, 1], [], []>} : vector<16x128xbf16>, vector<128x128xbf16>, vector<16x128xf32> -> vector<16x128xf32>
    %c0_34 = arith.constant 0 : index
    %c0_35 = arith.constant 0 : index
    %40 = vector.load %arg11[%c0_34, %c0_35] : memref<1x128xf32, #tpu.memory_space<vmem>>, vector<1x128xf32>
    %41 = vector.broadcast %40 : vector<1x128xf32> to vector<16x128xf32>
    %42 = arith.addf %39, %41 : vector<16x128xf32>
    %cst_36 = arith.constant 0.000000e+00 : f32
    %43 = vector.broadcast %cst_36 : f32 to vector<16x128xf32>
    %44 = arith.maximumf %42, %43 : vector<16x128xf32>
    %45 = arith.truncf %44 : vector<16x128xf32> to vector<16x128xbf16>
    %c0_37 = arith.constant 0 : index
    %c0_38 = arith.constant 0 : index
    %46 = vector.load %arg12[%c0_37, %c0_38] : memref<128x128xbf16, #tpu.memory_space<vmem>>, vector<128x128xbf16>
    %cst_39 = arith.constant dense<0.000000e+00> : vector<16x128xf32>
    %47 = tpu.matmul %45, %46, %cst_39 {dimension_numbers = #tpu.dot_dimension_numbers<[1], [0], [0], [1], [0, 0, 1, 1], [], []>} : vector<16x128xbf16>, vector<128x128xbf16>, vector<16x128xf32> -> vector<16x128xf32>
    %c0_40 = arith.constant 0 : index
    %c0_41 = arith.constant 0 : index
    %48 = vector.load %arg13[%c0_40, %c0_41] : memref<1x128xf32, #tpu.memory_space<vmem>>, vector<1x128xf32>
    %49 = vector.broadcast %48 : vector<1x128xf32> to vector<16x128xf32>
    %50 = arith.addf %47, %49 : vector<16x128xf32>
    %c0_42 = arith.constant 0 : index
    %c0_43 = arith.constant 0 : index
    %51 = vector.load %arg14[%c0_42, %c0_43] : memref<16x128xf32, #tpu.memory_space<vmem>>, vector<16x128xf32>
    tpu.vector_store %arg14[%c0_42, %c0_43], %50 {strides = array<i32>} : memref<16x128xf32, #tpu.memory_space<vmem>>, vector<16x128xf32>,
    return
  }
  func.func @transform_0(%arg0: i32) -> (i32, i32) {
    %c0_i32 = arith.constant 0 : i32
    %c0_i32_0 = arith.constant 0 : i32
    return %arg0, %c0_i32 : i32, i32
  }
  func.func @transform_1(%arg0: i32) -> (i32, i32) {
    %c0_i32 = arith.constant 0 : i32
    %c0_i32_0 = arith.constant 0 : i32
    %c0_i32_1 = arith.constant 0 : i32
    return %c0_i32, %c0_i32_0 : i32, i32
  }
  func.func @transform_2(%arg0: i32) -> (i32, i32) {
    %c0_i32 = arith.constant 0 : i32
    %c0_i32_0 = arith.constant 0 : i32
    %c0_i32_1 = arith.constant 0 : i32
    return %c0_i32, %c0_i32_0 : i32, i32
  }
  func.func @transform_3(%arg0: i32) -> (i32, i32) {
    %c0_i32 = arith.constant 0 : i32
    %c0_i32_0 = arith.constant 0 : i32
    %c0_i32_1 = arith.constant 0 : i32
    return %c0_i32, %c0_i32_0 : i32, i32
  }
  func.func @transform_4(%arg0: i32) -> (i32, i32) {
    %c0_i32 = arith.constant 0 : i32
    %c0_i32_0 = arith.constant 0 : i32
    %c0_i32_1 = arith.constant 0 : i32
    return %c0_i32, %c0_i32_0 : i32, i32
  }
  func.func @transform_5(%arg0: i32) -> (i32, i32) {
    %c0_i32 = arith.constant 0 : i32
    %c0_i32_0 = arith.constant 0 : i32
    %c0_i32_1 = arith.constant 0 : i32
    return %c0_i32, %c0_i32_0 : i32, i32
  }
  func.func @transform_6(%arg0: i32) -> (i32, i32) {
    %c0_i32 = arith.constant 0 : i32
    %c0_i32_0 = arith.constant 0 : i32
    %c0_i32_1 = arith.constant 0 : i32
    return %c0_i32, %c0_i32_0 : i32, i32
  }
  func.func @transform_7(%arg0: i32) -> (i32, i32) {
    %c0_i32 = arith.constant 0 : i32
    %c0_i32_0 = arith.constant 0 : i32
    %c0_i32_1 = arith.constant 0 : i32
    return %c0_i32, %c0_i32_0 : i32, i32
  }
  func.func @transform_8(%arg0: i32) -> (i32, i32) {
    %c0_i32 = arith.constant 0 : i32
    %c0_i32_0 = arith.constant 0 : i32
    %c0_i32_1 = arith.constant 0 : i32
    return %c0_i32, %c0_i32_0 : i32, i32
  }
  func.func @transform_9(%arg0: i32) -> (i32, i32) {
    %c0_i32 = arith.constant 0 : i32
    %c0_i32_0 = arith.constant 0 : i32
    %c0_i32_1 = arith.constant 0 : i32
    return %c0_i32, %c0_i32_0 : i32, i32
  }
  func.func @transform_10(%arg0: i32) -> (i32, i32) {
    %c0_i32 = arith.constant 0 : i32
    %c0_i32_0 = arith.constant 0 : i32
    %c0_i32_1 = arith.constant 0 : i32
    return %c0_i32, %c0_i32_0 : i32, i32
  }
  func.func @transform_11(%arg0: i32) -> (i32, i32) {
    %c0_i32 = arith.constant 0 : i32
    %c0_i32_0 = arith.constant 0 : i32
    %c0_i32_1 = arith.constant 0 : i32
    return %c0_i32, %c0_i32_0 : i32, i32
  }
  func.func @transform_12(%arg0: i32) -> (i32, i32) {
    %c0_i32 = arith.constant 0 : i32
    %c0_i32_0 = arith.constant 0 : i32
    %c0_i32_1 = arith.constant 0 : i32
    return %c0_i32, %c0_i32_0 : i32, i32
  }
  func.func @transform_13(%arg0: i32) -> (i32, i32) {
    %c0_i32 = arith.constant 0 : i32
    %c0_i32_0 = arith.constant 0 : i32
    return %arg0, %c0_i32 : i32, i32
  }
}

</mosaic_0001>

<llo_original>
// kernel: _forward.1
$region0: #{_forward.1}
  #allocation0 [shape = 'u32[]', space=smem, size = 0x4, offset = 0x4, fixed_abs, tag = 'smem constant byte address 0x4 - core index']
  #allocation1 [shape = 'u32[144,128]{1,0:T(1,128)}', space=vmem, size = 0x12000, scoped, tag = 'internal scratch']
  #allocation2 [shape = 'bf16[16,128]{1,0:T(16,128)(2,1)}', space=vmem, size = 0x1000, scoped, tag = 'scratch operand']
  %s0 = inlined_call_operand.vmem [shape: f32[16,42], index: 0, kind: input, shape index: {}]
  %s1 = inlined_call_operand.hbm [shape: bf16[128,512], index: 1, kind: input, shape index: {}]
  %s2 = inlined_call_operand.vmem [shape: f32[1,512], index: 2, kind: input, shape index: {}]
  %s3 = inlined_call_operand.hbm [shape: bf16[512,384], index: 3, kind: input, shape index: {}]
  %s4 = inlined_call_operand.vmem [shape: f32[1,384], index: 4, kind: input, shape index: {}]
  %s5 = inlined_call_operand.hbm [shape: bf16[384,256], index: 5, kind: input, shape index: {}]
  %s6 = inlined_call_operand.vmem [shape: f32[1,256], index: 6, kind: input, shape index: {}]
  %s7 = inlined_call_operand.hbm [shape: bf16[256,128], index: 7, kind: input, shape index: {}]
  %s8 = inlined_call_operand.vmem [shape: f32[1,128], index: 8, kind: input, shape index: {}]
  %s9 = inlined_call_operand.hbm [shape: bf16[128,128], index: 9, kind: input, shape index: {}]
  %s10 = inlined_call_operand.vmem [shape: f32[1,128], index: 10, kind: input, shape index: {}]
  %s11 = inlined_call_operand.hbm [shape: bf16[128,128], index: 11, kind: input, shape index: {}]
  %s12 = inlined_call_operand.vmem [shape: f32[1,128], index: 12, kind: input, shape index: {}]
  %s13 = inlined_call_operand.vmem [shape: f32[16,128], index: 13, kind: output, shape index: {}]
  %s14 = sld [smem:[#allocation0]]
  $region86: #{_forward.1} parent=0
    _
  %s16 = ssub.s32 1, %s14
  %s17 = scalar_select 0, %s16, %s14
  $region1: #{_forward.1} parent=0
    #allocation3 [shape = 'u8[131072]{0}', space=vmem, size = 0x20000, scoped, tag = 'input window, operand 1, single buffered']
    #allocation4 [shape = 's32[1]{0}', space=sflag, size = 0x4, scoped, tag = 'scoped memory for _forward.1']
    #allocation5 [shape = 'u8[393216]{0}', space=vmem, size = 0x60000, scoped, tag = 'input window, operand 3, single buffered']
    #allocation6 [shape = 's32[1]{0}', space=sflag, size = 0x4, scoped, tag = 'scoped memory for _forward.1']
    #allocation7 [shape = 'u8[196608]{0}', space=vmem, size = 0x30000, scoped, tag = 'input window, operand 5, single buffered']
    #allocation8 [shape = 'u8[65536]{0}', space=vmem, size = 0x10000, scoped, tag = 'input window, operand 7, single buffered']
    #allocation9 [shape = 's32[1]{0}', space=sflag, size = 0x4, scoped, tag = 'scoped memory for _forward.1']
    #allocation10 [shape = 'u8[32768]{0}', space=vmem, size = 0x8000, scoped, tag = 'input window, operand 9, single buffered']
    #allocation11 [shape = 'u8[32768]{0}', space=vmem, size = 0x8000, scoped, tag = 'input window, operand 11, single buffered']
    #allocation12 [shape = 's32[1]{0}', space=sflag, size = 0x4, scoped, tag = 'scoped memory for _forward.1']
    %18 = vsyncpa [#allocation4], 0
    %19 = vsyncpa [#allocation6], 0
    %20 = vsyncpa [#allocation9], 0
    %21 = vsyncpa [#allocation12], 0
    // Predicated region
    $region2: #{_forward.1} parent=1 // pred_check
      _
    $region3: #{_forward.1} parent=1 // pred_check_branch
      %23 = sbr.rel (0) target = $region5
    $region4: #{_forward.1} parent=1 // pred_region
      _
    $region5: #{_forward.1} parent=1 // pred_fallthru
      _
    // Predicated region
    $region6: #{_forward.1} parent=1 // pred_check
      _
    $region7: #{_forward.1} parent=1 // pred_check_branch
      %25 = sbr.rel (0) target = $region9
    $region8: #{_forward.1} parent=1 // pred_region
      %s27 = ssub.s32 4096, 4096
      %28 = vsyncadd [#allocation4], %s27
      %s29 = sshll.u32 [#allocation3], 4
      %s30 = int_to_ptr.vmem [resolvable:$true] %s29
      %35 = dma.hbm_to_vmem [thread:$0]  %s1, 4096, %s30, [#allocation4], 256, 256, 16
    $region9: #{_forward.1} parent=1 // pred_fallthru
      _
    // Predicated region
    $region10: #{_forward.1} parent=1 // pred_check
      _
    $region11: #{_forward.1} parent=1 // pred_check_branch
      %37 = sbr.rel (0) target = $region13
    $region12: #{_forward.1} parent=1 // pred_region
      _
    $region13: #{_forward.1} parent=1 // pred_fallthru
      _
    // Predicated region
    $region14: #{_forward.1} parent=1 // pred_check
      _
    $region15: #{_forward.1} parent=1 // pred_check_branch
      %39 = sbr.rel (0) target = $region17
    $region16: #{_forward.1} parent=1 // pred_region
      %s41 = ssub.s32 12288, 12288
      %42 = vsyncadd [#allocation6], %s41
      %s43 = sshll.u32 [#allocation5], 4
      %s44 = int_to_ptr.vmem [resolvable:$true] %s43
      %49 = dma.hbm_to_vmem [thread:$0]  %s3, 12288, %s44, [#allocation6], 192, 192, 12
    $region17: #{_forward.1} parent=1 // pred_fallthru
      _
    // Predicated region
    $region18: #{_forward.1} parent=1 // pred_check
      _
    $region19: #{_forward.1} parent=1 // pred_check_branch
      %51 = sbr.rel (0) target = $region21
    $region20: #{_forward.1} parent=1 // pred_region
      _
    $region21: #{_forward.1} parent=1 // pred_fallthru
      _
    // Predicated region
    $region22: #{_forward.1} parent=1 // pred_check
      _
    $region23: #{_forward.1} parent=1 // pred_check_branch
      %53 = sbr.rel (0) target = $region25
    $region24: #{_forward.1} parent=1 // pred_region
      %s55 = ssub.s32 6144, 6144
      %56 = vsyncadd [#allocation6], %s55
      %s57 = sshll.u32 [#allocation7], 4
      %s58 = int_to_ptr.vmem [resolvable:$true] %s57
      %63 = dma.hbm_to_vmem [thread:$0]  %s5, 6144, %s58, [#allocation6], 128, 128, 8
    $region25: #{_forward.1} parent=1 // pred_fallthru
      _
    // Predicated region
    $region26: #{_forward.1} parent=1 // pred_check
      _
    $region27: #{_forward.1} parent=1 // pred_check_branch
      %65 = sbr.rel (0) target = $region29
    $region28: #{_forward.1} parent=1 // pred_region
      _
    $region29: #{_forward.1} parent=1 // pred_fallthru
      _
    // Predicated region
    $region30: #{_forward.1} parent=1 // pred_check
      _
    $region31: #{_forward.1} parent=1 // pred_check_branch
      %67 = sbr.rel (0) target = $region33
    $region32: #{_forward.1} parent=1 // pred_region
      %s69 = ssub.s32 2048, 2048
      %70 = vsyncadd [#allocation9], %s69
      %s71 = sshll.u32 [#allocation8], 4
      %s72 = int_to_ptr.vmem [resolvable:$true] %s71
      %77 = dma.hbm_to_vmem [thread:$0]  %s7, 2048, %s72, [#allocation9], 64, 64, 4
    $region33: #{_forward.1} parent=1 // pred_fallthru
      _
    // Predicated region
    $region34: #{_forward.1} parent=1 // pred_check
      _
    $region35: #{_forward.1} parent=1 // pred_check_branch
      %79 = sbr.rel (0) target = $region37
    $region36: #{_forward.1} parent=1 // pred_region
      _
    $region37: #{_forward.1} parent=1 // pred_fallthru
      _
    // Predicated region
    $region38: #{_forward.1} parent=1 // pred_check
      _
    $region39: #{_forward.1} parent=1 // pred_check_branch
      %81 = sbr.rel (0) target = $region41
    $region40: #{_forward.1} parent=1 // pred_region
      %s83 = ssub.s32 1024, 1024
      %84 = vsyncadd [#allocation9], %s83
      %s85 = sshll.u32 [#allocation10], 4
      %s86 = int_to_ptr.vmem [resolvable:$true] %s85
      %91 = dma.hbm_to_vmem [thread:$0]  %s9, 1024, %s86, [#allocation9], 64, 64, 4
    $region41: #{_forward.1} parent=1 // pred_fallthru
      _
    // Predicated region
    $region42: #{_forward.1} parent=1 // pred_check
      _
    $region43: #{_forward.1} parent=1 // pred_check_branch
      %93 = sbr.rel (0) target = $region45
    $region44: #{_forward.1} parent=1 // pred_region
      _
    $region45: #{_forward.1} parent=1 // pred_fallthru
      _
    // Predicated region
    $region46: #{_forward.1} parent=1 // pred_check
      _
    $region47: #{_forward.1} parent=1 // pred_check_branch
      %95 = sbr.rel (0) target = $region49
    $region48: #{_forward.1} parent=1 // pred_region
      %s97 = ssub.s32 1024, 1024
      %98 = vsyncadd [#allocation12], %s97
      %s99 = sshll.u32 [#allocation11], 4
      %s100 = int_to_ptr.vmem [resolvable:$true] %s99
      %105 = dma.hbm_to_vmem [thread:$0]  %s11, 1024, %s100, [#allocation12], 64, 64, 4
    $region49: #{_forward.1} parent=1 // pred_fallthru
      _
    // Predicated region
    $region50: #{_forward.1} parent=1 // pred_check
      _
    $region51: #{_forward.1} parent=1 // pred_check_branch
      %107 = sbr.rel (0) target = $region53
    $region52: #{_forward.1} parent=1 // pred_region
      _
    $region53: #{_forward.1} parent=1 // pred_fallthru
      _
    // Predicated region
    $region54: #{_forward.1} parent=1 // pred_check
      _
    $region55: #{_forward.1} parent=1 // pred_check_branch
      %109 = sbr.rel (0) target = $region57
    $region56: #{_forward.1} parent=1 // pred_region
      %110 = dma.done [#allocation4], 4096
    $region57: #{_forward.1} parent=1 // pred_fallthru
      _
    // Predicated region
    $region58: #{_forward.1} parent=1 // pred_check
      _
    $region59: #{_forward.1} parent=1 // pred_check_branch
      %112 = sbr.rel (0) target = $region61
    $region60: #{_forward.1} parent=1 // pred_region
      %113 = dma.done [#allocation6], 12288
    $region61: #{_forward.1} parent=1 // pred_fallthru
      _
    // Predicated region
    $region62: #{_forward.1} parent=1 // pred_check
      _
    $region63: #{_forward.1} parent=1 // pred_check_branch
      %115 = sbr.rel (0) target = $region65
    $region64: #{_forward.1} parent=1 // pred_region
      %116 = dma.done [#allocation6], 6144
    $region65: #{_forward.1} parent=1 // pred_fallthru
      _
    // Predicated region
    $region66: #{_forward.1} parent=1 // pred_check
      _
    $region67: #{_forward.1} parent=1 // pred_check_branch
      %118 = sbr.rel (0) target = $region69
    $region68: #{_forward.1} parent=1 // pred_region
      %119 = dma.done [#allocation9], 2048
    $region69: #{_forward.1} parent=1 // pred_fallthru
      _
    // Predicated region
    $region70: #{_forward.1} parent=1 // pred_check
      _
    $region71: #{_forward.1} parent=1 // pred_check_branch
      %121 = sbr.rel (0) target = $region73
    $region72: #{_forward.1} parent=1 // pred_region
      %122 = dma.done [#allocation9], 1024
    $region73: #{_forward.1} parent=1 // pred_fallthru
      _
    // Predicated region
    $region74: #{_forward.1} parent=1 // pred_check
      _
    $region75: #{_forward.1} parent=1 // pred_check_branch
      %124 = sbr.rel (0) target = $region77
    $region76: #{_forward.1} parent=1 // pred_region
      %125 = dma.done [#allocation12], 1024
    $region77: #{_forward.1} parent=1 // pred_fallthru
      _
    %127 = vst [vmem:[#allocation2] sm:$0xff] 0
    %v128 = vld [vmem:[%s0] sm:$0xff]
    %v129 = vld [vmem:[%s0 + $0x8] sm:$0xff]
    %v130 = vpack.c.bf16 %v129, %v128
    %vm131 = vcmask 343040
    %132 = vst.msk [vmem:[#allocation2] sm:$0xff] %vm131, %v130
    %v133 = vld [vmem:[#allocation2] sm:$0xff]
    %v134 = vld [vmem:[#allocation3] sm:$0xff]
    %v135 = vld [vmem:[#allocation3 + $0x8] sm:$0xff]
    %v136 = vld [vmem:[#allocation3 + $0x10] sm:$0xff]
    %v137 = vld [vmem:[#allocation3 + $0x18] sm:$0xff]
    %v138 = vld [vmem:[#allocation3 + $0x20] sm:$0xff]
    %v139 = vld [vmem:[#allocation3 + $0x28] sm:$0xff]
    %v140 = vld [vmem:[#allocation3 + $0x30] sm:$0xff]
    %v141 = vld [vmem:[#allocation3 + $0x38] sm:$0xff]
    %v142 = vld [vmem:[#allocation3 + $0x40] sm:$0xff]
    %v143 = vld [vmem:[#allocation3 + $0x48] sm:$0xff]
    %v144 = vld [vmem:[#allocation3 + $0x50] sm:$0xff]
    %v145 = vld [vmem:[#allocation3 + $0x58] sm:$0xff]
    %v146 = vld [vmem:[#allocation3 + $0x60] sm:$0xff]
    %v147 = vld [vmem:[#allocation3 + $0x68] sm:$0xff]
    %v148 = vld [vmem:[#allocation3 + $0x70] sm:$0xff]
    %v149 = vld [vmem:[#allocation3 + $0x78] sm:$0xff]
    %v150 = vld [vmem:[#allocation3 + $0x80] sm:$0xff]
    %v151 = vld [vmem:[#allocation3 + $0x88] sm:$0xff]
    %v152 = vld [vmem:[#allocation3 + $0x90] sm:$0xff]
    %v153 = vld [vmem:[#allocation3 + $0x98] sm:$0xff]
    %v154 = vld [vmem:[#allocation3 + $0xa0] sm:$0xff]
    %v155 = vld [vmem:[#allocation3 + $0xa8] sm:$0xff]
    %v156 = vld [vmem:[#allocation3 + $0xb0] sm:$0xff]
    %v157 = vld [vmem:[#allocation3 + $0xb8] sm:$0xff]
    %v158 = vld [vmem:[#allocation3 + $0xc0] sm:$0xff]
    %v159 = vld [vmem:[#allocation3 + $0xc8] sm:$0xff]
    %v160 = vld [vmem:[#allocation3 + $0xd0] sm:$0xff]
    %v161 = vld [vmem:[#allocation3 + $0xd8] sm:$0xff]
    %v162 = vld [vmem:[#allocation3 + $0xe0] sm:$0xff]
    %v163 = vld [vmem:[#allocation3 + $0xe8] sm:$0xff]
    %v164 = vld [vmem:[#allocation3 + $0xf0] sm:$0xff]
    %v165 = vld [vmem:[#allocation3 + $0xf8] sm:$0xff]
    %v166 = vld [vmem:[%s2] sm:$0xf]
    %v168 = vlaneseq
    %v169 = vshrl.u32 %v168, 7
    %v170 = vsub.s32 0, %v169
    %v171 = vrot.slane %v166, %v170
    %v172 = vlaneseq
    %v173 = vshrl.u32 %v172, 7
    %v174 = vsub.s32 1, %v173
    %v175 = vrot.slane %v166, %v174
    %v176 = vlaneseq
    %v177 = vshrl.u32 %v176, 7
    %v178 = vsub.s32 2, %v177
    %v179 = vrot.slane %v166, %v178
    %v180 = vlaneseq
    %v181 = vshrl.u32 %v180, 7
    %v182 = vsub.s32 3, %v181
    %v183 = vrot.slane %v166, %v182
    %v220 = vunpack.c.l.b16 %v134
    %v221 = vunpack.c.h.b16 %v134
    %v222 = vunpack.c.l.b16 %v135
    %v223 = vunpack.c.h.b16 %v135
    %v224 = vunpack.c.l.b16 %v136
    %v225 = vunpack.c.h.b16 %v136
    %v226 = vunpack.c.l.b16 %v137
    %v227 = vunpack.c.h.b16 %v137
    %v228 = vunpack.c.l.b16 %v138
    %v229 = vunpack.c.h.b16 %v138
    %v230 = vunpack.c.l.b16 %v139
    %v231 = vunpack.c.h.b16 %v139
    %v232 = vunpack.c.l.b16 %v140
    %v233 = vunpack.c.h.b16 %v140
    %v234 = vunpack.c.l.b16 %v141
    %v235 = vunpack.c.h.b16 %v141
    %v236 = vunpack.c.l.b16 %v142
    %v237 = vunpack.c.h.b16 %v142
    %v238 = vunpack.c.l.b16 %v143
    %v239 = vunpack.c.h.b16 %v143
    %v240 = vunpack.c.l.b16 %v144
    %v241 = vunpack.c.h.b16 %v144
    %v242 = vunpack.c.l.b16 %v145
    %v243 = vunpack.c.h.b16 %v145
    %v244 = vunpack.c.l.b16 %v146
    %v245 = vunpack.c.h.b16 %v146
    %v246 = vunpack.c.l.b16 %v147
    %v247 = vunpack.c.h.b16 %v147
    %v248 = vunpack.c.l.b16 %v148
    %v249 = vunpack.c.h.b16 %v148
    %v250 = vunpack.c.l.b16 %v149
    %v251 = vunpack.c.h.b16 %v149
    %v252 = vunpack.c.l.b16 %v150
    %v253 = vunpack.c.h.b16 %v150
    %v254 = vunpack.c.l.b16 %v151
    %v255 = vunpack.c.h.b16 %v151
    %v256 = vunpack.c.l.b16 %v152
    %v257 = vunpack.c.h.b16 %v152
    %v258 = vunpack.c.l.b16 %v153
    %v259 = vunpack.c.h.b16 %v153
    %v260 = vunpack.c.l.b16 %v154
    %v261 = vunpack.c.h.b16 %v154
    %v262 = vunpack.c.l.b16 %v155
    %v263 = vunpack.c.h.b16 %v155
    %v264 = vunpack.c.l.b16 %v156
    %v265 = vunpack.c.h.b16 %v156
    %v266 = vunpack.c.l.b16 %v157
    %v267 = vunpack.c.h.b16 %v157
    %v268 = vunpack.c.l.b16 %v158
    %v269 = vunpack.c.h.b16 %v158
    %v270 = vunpack.c.l.b16 %v159
    %v271 = vunpack.c.h.b16 %v159
    %v272 = vunpack.c.l.b16 %v160
    %v273 = vunpack.c.h.b16 %v160
    %v274 = vunpack.c.l.b16 %v161
    %v275 = vunpack.c.h.b16 %v161
    %v276 = vunpack.c.l.b16 %v162
    %v277 = vunpack.c.h.b16 %v162
    %v278 = vunpack.c.l.b16 %v163
    %v279 = vunpack.c.h.b16 %v163
    %v280 = vunpack.c.l.b16 %v164
    %v281 = vunpack.c.h.b16 %v164
    %v282 = vunpack.c.l.b16 %v165
    %v283 = vunpack.c.h.b16 %v165
    %v284 = vpack.c.b16 %v224, %v220
    %v285 = vpack.c.b16 %v225, %v221
    %v286 = vpack.c.b16 %v226, %v222
    %v287 = vpack.c.b16 %v227, %v223
    %v288 = vpack.c.b16 %v232, %v228
    %v289 = vpack.c.b16 %v233, %v229
    %v290 = vpack.c.b16 %v234, %v230
    %v291 = vpack.c.b16 %v235, %v231
    %v292 = vpack.c.b16 %v240, %v236
    %v293 = vpack.c.b16 %v241, %v237
    %v294 = vpack.c.b16 %v242, %v238
    %v295 = vpack.c.b16 %v243, %v239
    %v296 = vpack.c.b16 %v248, %v244
    %v297 = vpack.c.b16 %v249, %v245
    %v298 = vpack.c.b16 %v250, %v246
    %v299 = vpack.c.b16 %v251, %v247
    %v300 = vpack.c.b16 %v256, %v252
    %v301 = vpack.c.b16 %v257, %v253
    %v302 = vpack.c.b16 %v258, %v254
    %v303 = vpack.c.b16 %v259, %v255
    %v304 = vpack.c.b16 %v264, %v260
    %v305 = vpack.c.b16 %v265, %v261
    %v306 = vpack.c.b16 %v266, %v262
    %v307 = vpack.c.b16 %v267, %v263
    %v308 = vpack.c.b16 %v272, %v268
    %v309 = vpack.c.b16 %v273, %v269
    %v310 = vpack.c.b16 %v274, %v270
    %v311 = vpack.c.b16 %v275, %v271
    %v312 = vpack.c.b16 %v280, %v276
    %v313 = vpack.c.b16 %v281, %v277
    %v314 = vpack.c.b16 %v282, %v278
    %v315 = vpack.c.b16 %v283, %v279
    %348 = vmatprep.subr.bf16.mxu0 %v285
    %349 = vmatpush1.bf16.msra.mxu0 %v284
    %350 = vmatprep.subr.bf16.mxu0 %v289
    %351 = vmatpush1.bf16.msra.mxu0 %v288
    %352 = vmatprep.subr.bf16.mxu0 %v293
    %353 = vmatpush1.bf16.msra.mxu0 %v292
    %354 = vmatprep.subr.bf16.mxu0 %v297
    %355 = vmatpush1.bf16.msra.mxu0 %v296
    %356 = vmatprep.subr.bf16.mxu0 %v301
    %357 = vmatpush1.bf16.msra.mxu0 %v300
    %358 = vmatprep.subr.bf16.mxu0 %v305
    %359 = vmatpush1.bf16.msra.mxu0 %v304
    %360 = vmatprep.subr.bf16.mxu0 %v309
    %361 = vmatpush1.bf16.msra.mxu0 %v308
    %362 = vmatprep.subr.bf16.mxu0 %v313
    %363 = vmatpush1.bf16.msra.mxu0 %v312
    %364 = vmatprep.subr.bf16.mxu0 0
    %365 = vmatpush1.bf16.msra.mxu0 0
    %366 = vmatprep.subr.bf16.mxu0 0
    %367 = vmatpush1.bf16.msra.mxu0 0
    %368 = vmatprep.subr.bf16.mxu0 0
    %369 = vmatpush1.bf16.msra.mxu0 0
    %370 = vmatprep.subr.bf16.mxu0 0
    %371 = vmatpush1.bf16.msra.mxu0 0
    %372 = vmatprep.subr.bf16.mxu0 0
    %373 = vmatpush1.bf16.msra.mxu0 0
    %374 = vmatprep.subr.bf16.mxu0 0
    %375 = vmatpush1.bf16.msra.mxu0 0
    %376 = vmatprep.subr.bf16.mxu0 0
    %377 = vmatpush1.bf16.msra.mxu0 0
    %378 = vmatprep.subr.bf16.mxu0 0
    %379 = vmatpush1.bf16.msra.mxu0 0
    %380 = vmatprep.mubr.bf16.mxu0 0
    %381 = vmatmul.mubr.bf16.gmra.mrb[0].mxu0 %v133
    %v382 = vpop.f32.mrb[0].mxu0
    %v383 = vadd.f32 %v171, %v382
    %v384 = vpop.f32.mrb[0].mxu0
    %v385 = vadd.f32 %v175, %v384
    %v386 = vpop.f32.mrb[0].mxu0
    %v387 = vadd.f32 %v171, %v386
    %v388 = vpop.f32.mrb[0].mxu0
    %v389 = vadd.f32 %v175, %v388
    %390 = vdwg.mxu0
    %391 = vmatprep.subr.bf16.mxu0 %v287
    %392 = vmatpush1.bf16.msra.mxu0 %v286
    %393 = vmatprep.subr.bf16.mxu0 %v291
    %394 = vmatpush1.bf16.msra.mxu0 %v290
    %395 = vmatprep.subr.bf16.mxu0 %v295
    %396 = vmatpush1.bf16.msra.mxu0 %v294
    %397 = vmatprep.subr.bf16.mxu0 %v299
    %398 = vmatpush1.bf16.msra.mxu0 %v298
    %399 = vmatprep.subr.bf16.mxu0 %v303
    %400 = vmatpush1.bf16.msra.mxu0 %v302
    %401 = vmatprep.subr.bf16.mxu0 %v307
    %402 = vmatpush1.bf16.msra.mxu0 %v306
    %403 = vmatprep.subr.bf16.mxu0 %v311
    %404 = vmatpush1.bf16.msra.mxu0 %v310
    %405 = vmatprep.subr.bf16.mxu0 %v315
    %406 = vmatpush1.bf16.msra.mxu0 %v314
    %407 = vmatprep.subr.bf16.mxu0 0
    %408 = vmatpush1.bf16.msra.mxu0 0
    %409 = vmatprep.subr.bf16.mxu0 0
    %410 = vmatpush1.bf16.msra.mxu0 0
    %411 = vmatprep.subr.bf16.mxu0 0
    %412 = vmatpush1.bf16.msra.mxu0 0
    %413 = vmatprep.subr.bf16.mxu0 0
    %414 = vmatpush1.bf16.msra.mxu0 0
    %415 = vmatprep.subr.bf16.mxu0 0
    %416 = vmatpush1.bf16.msra.mxu0 0
    %417 = vmatprep.subr.bf16.mxu0 0
    %418 = vmatpush1.bf16.msra.mxu0 0
    %419 = vmatprep.subr.bf16.mxu0 0
    %420 = vmatpush1.bf16.msra.mxu0 0
    %421 = vmatprep.subr.bf16.mxu0 0
    %422 = vmatpush1.bf16.msra.mxu0 0
    %423 = vmatprep.mubr.bf16.mxu0 0
    %424 = vmatmul.mubr.bf16.gmra.mrb[0].mxu0 %v133
    %v425 = vpop.f32.mrb[0].mxu0
    %v426 = vadd.f32 %v179, %v425
    %v427 = vpop.f32.mrb[0].mxu0
    %v428 = vadd.f32 %v183, %v427
    %v429 = vpop.f32.mrb[0].mxu0
    %v430 = vadd.f32 %v179, %v429
    %v431 = vpop.f32.mrb[0].mxu0
    %v432 = vadd.f32 %v183, %v431
    %433 = vdwg.mxu0
    %v434 = vmax.f32 %v383, 0.0
    %v435 = vmax.f32 %v385, 0.0
    %v436 = vmax.f32 %v426, 0.0
    %v437 = vmax.f32 %v428, 0.0
    %v438 = vmax.f32 %v387, 0.0
    %v439 = vmax.f32 %v389, 0.0
    %v440 = vmax.f32 %v430, 0.0
    %v441 = vmax.f32 %v432, 0.0
    %v442 = vpack.c.bf16 %v438, %v434
    %v443 = vpack.c.bf16 %v439, %v435
    %v444 = vpack.c.bf16 %v440, %v436
    %v445 = vpack.c.bf16 %v441, %v437
    %v446 = vld [vmem:[#allocation5] sm:$0xff]
    %v447 = vld [vmem:[#allocation5 + $0x8] sm:$0xf]
    %v448 = vld [vmem:[#allocation5 + $0xc] sm:$0xff]
    %v449 = vld [vmem:[#allocation5 + $0x14] sm:$0xf]
    %v450 = vld [vmem:[#allocation5 + $0x18] sm:$0xff]
    %v451 = vld [vmem:[#allocation5 + $0x20] sm:$0xf]
    %v452 = vld [vmem:[#allocation5 + $0x24] sm:$0xff]
    %v453 = vld [vmem:[#allocation5 + $0x2c] sm:$0xf]
    %v454 = vld [vmem:[#allocation5 + $0x30] sm:$0xff]
    %v455 = vld [vmem:[#allocation5 + $0x38] sm:$0xf]
    %v456 = vld [vmem:[#allocation5 + $0x3c] sm:$0xff]
    %v457 = vld [vmem:[#allocation5 + $0x44] sm:$0xf]
    %v458 = vld [vmem:[#allocation5 + $0x48] sm:$0xff]
    %v459 = vld [vmem:[#allocation5 + $0x50] sm:$0xf]
    %v460 = vld [vmem:[#allocation5 + $0x54] sm:$0xff]
    %v461 = vld [vmem:[#allocation5 + $0x5c] sm:$0xf]
    %v462 = vld [vmem:[#allocation5 + $0x60] sm:$0xff]
    %v463 = vld [vmem:[#allocation5 + $0x68] sm:$0xf]
    %v464 = vld [vmem:[#allocation5 + $0x6c] sm:$0xff]
    %v465 = vld [vmem:[#allocation5 + $0x74] sm:$0xf]
    %v466 = vld [vmem:[#allocation5 + $0x78] sm:$0xff]
    %v467 = vld [vmem:[#allocation5 + $0x80] sm:$0xf]
    %v468 = vld [vmem:[#allocation5 + $0x84] sm:$0xff]
    %v469 = vld [vmem:[#allocation5 + $0x8c] sm:$0xf]
    %v470 = vld [vmem:[#allocation5 + $0x90] sm:$0xff]
    %v471 = vld [vmem:[#allocation5 + $0x98] sm:$0xf]
    %v472 = vld [vmem:[#allocation5 + $0x9c] sm:$0xff]
    %v473 = vld [vmem:[#allocation5 + $0xa4] sm:$0xf]
    %v474 = vld [vmem:[#allocation5 + $0xa8] sm:$0xff]
    %v475 = vld [vmem:[#allocation5 + $0xb0] sm:$0xf]
    %v476 = vld [vmem:[#allocation5 + $0xb4] sm:$0xff]
    %v477 = vld [vmem:[#allocation5 + $0xbc] sm:$0xf]
    %v478 = vld [vmem:[#allocation5 + $0xc0] sm:$0xff]
    %v479 = vld [vmem:[#allocation5 + $0xc8] sm:$0xf]
    %v480 = vld [vmem:[#allocation5 + $0xcc] sm:$0xff]
    %v481 = vld [vmem:[#allocation5 + $0xd4] sm:$0xf]
    %v482 = vld [vmem:[#allocation5 + $0xd8] sm:$0xff]
    %v483 = vld [vmem:[#allocation5 + $0xe0] sm:$0xf]
    %v484 = vld [vmem:[#allocation5 + $0xe4] sm:$0xff]
    %v485 = vld [vmem:[#allocation5 + $0xec] sm:$0xf]
    %v486 = vld [vmem:[#allocation5 + $0xf0] sm:$0xff]
    %v487 = vld [vmem:[#allocation5 + $0xf8] sm:$0xf]
    %v488 = vld [vmem:[#allocation5 + $0xfc] sm:$0xff]
    %v489 = vld [vmem:[#allocation5 + $0x104] sm:$0xf]
    %v490 = vld [vmem:[#allocation5 + $0x108] sm:$0xff]
    %v491 = vld [vmem:[#allocation5 + $0x110] sm:$0xf]
    %v492 = vld [vmem:[#allocation5 + $0x114] sm:$0xff]
    %v493 = vld [vmem:[#allocation5 + $0x11c] sm:$0xf]
    %v494 = vld [vmem:[#allocation5 + $0x120] sm:$0xff]
    %v495 = vld [vmem:[#allocation5 + $0x128] sm:$0xf]
    %v496 = vld [vmem:[#allocation5 + $0x12c] sm:$0xff]
    %v497 = vld [vmem:[#allocation5 + $0x134] sm:$0xf]
    %v498 = vld [vmem:[#allocation5 + $0x138] sm:$0xff]
    %v499 = vld [vmem:[#allocation5 + $0x140] sm:$0xf]
    %v500 = vld [vmem:[#allocation5 + $0x144] sm:$0xff]
    %v501 = vld [vmem:[#allocation5 + $0x14c] sm:$0xf]
    %v502 = vld [vmem:[#allocation5 + $0x150] sm:$0xff]
    %v503 = vld [vmem:[#allocation5 + $0x158] sm:$0xf]
    %v504 = vld [vmem:[#allocation5 + $0x15c] sm:$0xff]
    %v505 = vld [vmem:[#allocation5 + $0x164] sm:$0xf]
    %v506 = vld [vmem:[#allocation5 + $0x168] sm:$0xff]
    %v507 = vld [vmem:[#allocation5 + $0x170] sm:$0xf]
    %v508 = vld [vmem:[#allocation5 + $0x174] sm:$0xff]
    %v509 = vld [vmem:[#allocation5 + $0x17c] sm:$0xf]
    %v510 = vld [vmem:[#allocation5 + $0x180] sm:$0xff]
    %v511 = vld [vmem:[#allocation5 + $0x188] sm:$0xf]
    %v512 = vld [vmem:[#allocation5 + $0x18c] sm:$0xff]
    %v513 = vld [vmem:[#allocation5 + $0x194] sm:$0xf]
    %v514 = vld [vmem:[#allocation5 + $0x198] sm:$0xff]
    %v515 = vld [vmem:[#allocation5 + $0x1a0] sm:$0xf]
    %v516 = vld [vmem:[#allocation5 + $0x1a4] sm:$0xff]
    %v517 = vld [vmem:[#allocation5 + $0x1ac] sm:$0xf]
    %v518 = vld [vmem:[#allocation5 + $0x1b0] sm:$0xff]
    %v519 = vld [vmem:[#allocation5 + $0x1b8] sm:$0xf]
    %v520 = vld [vmem:[#allocation5 + $0x1bc] sm:$0xff]
    %v521 = vld [vmem:[#allocation5 + $0x1c4] sm:$0xf]
    %v522 = vld [vmem:[#allocation5 + $0x1c8] sm:$0xff]
    %v523 = vld [vmem:[#allocation5 + $0x1d0] sm:$0xf]
    %v524 = vld [vmem:[#allocation5 + $0x1d4] sm:$0xff]
    %v525 = vld [vmem:[#allocation5 + $0x1dc] sm:$0xf]
    %v526 = vld [vmem:[#allocation5 + $0x1e0] sm:$0xff]
    %v527 = vld [vmem:[#allocation5 + $0x1e8] sm:$0xf]
    %v528 = vld [vmem:[#allocation5 + $0x1ec] sm:$0xff]
    %v529 = vld [vmem:[#allocation5 + $0x1f4] sm:$0xf]
    %v530 = vld [vmem:[#allocation5 + $0x1f8] sm:$0xff]
    %v531 = vld [vmem:[#allocation5 + $0x200] sm:$0xf]
    %v532 = vld [vmem:[#allocation5 + $0x204] sm:$0xff]
    %v533 = vld [vmem:[#allocation5 + $0x20c] sm:$0xf]
    %v534 = vld [vmem:[#allocation5 + $0x210] sm:$0xff]
    %v535 = vld [vmem:[#allocation5 + $0x218] sm:$0xf]
    %v536 = vld [vmem:[#allocation5 + $0x21c] sm:$0xff]
    %v537 = vld [vmem:[#allocation5 + $0x224] sm:$0xf]
    %v538 = vld [vmem:[#allocation5 + $0x228] sm:$0xff]
    %v539 = vld [vmem:[#allocation5 + $0x230] sm:$0xf]
    %v540 = vld [vmem:[#allocation5 + $0x234] sm:$0xff]
    %v541 = vld [vmem:[#allocation5 + $0x23c] sm:$0xf]
    %v542 = vld [vmem:[#allocation5 + $0x240] sm:$0xff]
    %v543 = vld [vmem:[#allocation5 + $0x248] sm:$0xf]
    %v544 = vld [vmem:[#allocation5 + $0x24c] sm:$0xff]
    %v545 = vld [vmem:[#allocation5 + $0x254] sm:$0xf]
    %v546 = vld [vmem:[#allocation5 + $0x258] sm:$0xff]
    %v547 = vld [vmem:[#allocation5 + $0x260] sm:$0xf]
    %v548 = vld [vmem:[#allocation5 + $0x264] sm:$0xff]
    %v549 = vld [vmem:[#allocation5 + $0x26c] sm:$0xf]
    %v550 = vld [vmem:[#allocation5 + $0x270] sm:$0xff]
    %v551 = vld [vmem:[#allocation5 + $0x278] sm:$0xf]
    %v552 = vld [vmem:[#allocation5 + $0x27c] sm:$0xff]
    %v553 = vld [vmem:[#allocation5 + $0x284] sm:$0xf]
    %v554 = vld [vmem:[#allocation5 + $0x288] sm:$0xff]
    %v555 = vld [vmem:[#allocation5 + $0x290] sm:$0xf]
    %v556 = vld [vmem:[#allocation5 + $0x294] sm:$0xff]
    %v557 = vld [vmem:[#allocation5 + $0x29c] sm:$0xf]
    %v558 = vld [vmem:[#allocation5 + $0x2a0] sm:$0xff]
    %v559 = vld [vmem:[#allocation5 + $0x2a8] sm:$0xf]
    %v560 = vld [vmem:[#allocation5 + $0x2ac] sm:$0xff]
    %v561 = vld [vmem:[#allocation5 + $0x2b4] sm:$0xf]
    %v562 = vld [vmem:[#allocation5 + $0x2b8] sm:$0xff]
    %v563 = vld [vmem:[#allocation5 + $0x2c0] sm:$0xf]
    %v564 = vld [vmem:[#allocation5 + $0x2c4] sm:$0xff]
    %v565 = vld [vmem:[#allocation5 + $0x2cc] sm:$0xf]
    %v566 = vld [vmem:[#allocation5 + $0x2d0] sm:$0xff]
    %v567 = vld [vmem:[#allocation5 + $0x2d8] sm:$0xf]
    %v568 = vld [vmem:[#allocation5 + $0x2dc] sm:$0xff]
    %v569 = vld [vmem:[#allocation5 + $0x2e4] sm:$0xf]
    %v570 = vld [vmem:[#allocation5 + $0x2e8] sm:$0xff]
    %v571 = vld [vmem:[#allocation5 + $0x2f0] sm:$0xf]
    %v572 = vld [vmem:[#allocation5 + $0x2f4] sm:$0xff]
    %v573 = vld [vmem:[#allocation5 + $0x2fc] sm:$0xf]
    %v574 = vld [vmem:[%s4] sm:$0x7]
    %v576 = vlaneseq
    %v577 = vshrl.u32 %v576, 7
    %v578 = vsub.s32 0, %v577
    %v579 = vrot.slane %v574, %v578
    %v580 = vlaneseq
    %v581 = vshrl.u32 %v580, 7
    %v582 = vsub.s32 1, %v581
    %v583 = vrot.slane %v574, %v582
    %v584 = vlaneseq
    %v585 = vshrl.u32 %v584, 7
    %v586 = vsub.s32 2, %v585
    %v587 = vrot.slane %v574, %v586
    %v719 = vunpack.c.l.b16 %v446
    %v720 = vunpack.c.h.b16 %v446
    %v721 = vunpack.c.l.b16 %v447
    %v722 = vunpack.c.l.b16 %v448
    %v723 = vunpack.c.h.b16 %v448
    %v724 = vunpack.c.l.b16 %v449
    %v725 = vunpack.c.l.b16 %v450
    %v726 = vunpack.c.h.b16 %v450
    %v727 = vunpack.c.l.b16 %v451
    %v728 = vunpack.c.l.b16 %v452
    %v729 = vunpack.c.h.b16 %v452
    %v730 = vunpack.c.l.b16 %v453
    %v731 = vunpack.c.l.b16 %v454
    %v732 = vunpack.c.h.b16 %v454
    %v733 = vunpack.c.l.b16 %v455
    %v734 = vunpack.c.l.b16 %v456
    %v735 = vunpack.c.h.b16 %v456
    %v736 = vunpack.c.l.b16 %v457
    %v737 = vunpack.c.l.b16 %v458
    %v738 = vunpack.c.h.b16 %v458
    %v739 = vunpack.c.l.b16 %v459
    %v740 = vunpack.c.l.b16 %v460
    %v741 = vunpack.c.h.b16 %v460
    %v742 = vunpack.c.l.b16 %v461
    %v743 = vunpack.c.l.b16 %v462
    %v744 = vunpack.c.h.b16 %v462
    %v745 = vunpack.c.l.b16 %v463
    %v746 = vunpack.c.l.b16 %v464
    %v747 = vunpack.c.h.b16 %v464
    %v748 = vunpack.c.l.b16 %v465
    %v749 = vunpack.c.l.b16 %v466
    %v750 = vunpack.c.h.b16 %v466
    %v751 = vunpack.c.l.b16 %v467
    %v752 = vunpack.c.l.b16 %v468
    %v753 = vunpack.c.h.b16 %v468
    %v754 = vunpack.c.l.b16 %v469
    %v755 = vunpack.c.l.b16 %v470
    %v756 = vunpack.c.h.b16 %v470
    %v757 = vunpack.c.l.b16 %v471
    %v758 = vunpack.c.l.b16 %v472
    %v759 = vunpack.c.h.b16 %v472
    %v760 = vunpack.c.l.b16 %v473
    %v761 = vunpack.c.l.b16 %v474
    %v762 = vunpack.c.h.b16 %v474
    %v763 = vunpack.c.l.b16 %v475
    %v764 = vunpack.c.l.b16 %v476
    %v765 = vunpack.c.h.b16 %v476
    %v766 = vunpack.c.l.b16 %v477
    %v767 = vunpack.c.l.b16 %v478
    %v768 = vunpack.c.h.b16 %v478
    %v769 = vunpack.c.l.b16 %v479
    %v770 = vunpack.c.l.b16 %v480
    %v771 = vunpack.c.h.b16 %v480
    %v772 = vunpack.c.l.b16 %v481
    %v773 = vunpack.c.l.b16 %v482
    %v774 = vunpack.c.h.b16 %v482
    %v775 = vunpack.c.l.b16 %v483
    %v776 = vunpack.c.l.b16 %v484
    %v777 = vunpack.c.h.b16 %v484
    %v778 = vunpack.c.l.b16 %v485
    %v779 = vunpack.c.l.b16 %v486
    %v780 = vunpack.c.h.b16 %v486
    %v781 = vunpack.c.l.b16 %v487
    %v782 = vunpack.c.l.b16 %v488
    %v783 = vunpack.c.h.b16 %v488
    %v784 = vunpack.c.l.b16 %v489
    %v785 = vunpack.c.l.b16 %v490
    %v786 = vunpack.c.h.b16 %v490
    %v787 = vunpack.c.l.b16 %v491
    %v788 = vunpack.c.l.b16 %v492
    %v789 = vunpack.c.h.b16 %v492
    %v790 = vunpack.c.l.b16 %v493
    %v791 = vunpack.c.l.b16 %v494
    %v792 = vunpack.c.h.b16 %v494
    %v793 = vunpack.c.l.b16 %v495
    %v794 = vunpack.c.l.b16 %v496
    %v795 = vunpack.c.h.b16 %v496
    %v796 = vunpack.c.l.b16 %v497
    %v797 = vunpack.c.l.b16 %v498
    %v798 = vunpack.c.h.b16 %v498
    %v799 = vunpack.c.l.b16 %v499
    %v800 = vunpack.c.l.b16 %v500
    %v801 = vunpack.c.h.b16 %v500
    %v802 = vunpack.c.l.b16 %v501
    %v803 = vunpack.c.l.b16 %v502
    %v804 = vunpack.c.h.b16 %v502
    %v805 = vunpack.c.l.b16 %v503
    %v806 = vunpack.c.l.b16 %v504
    %v807 = vunpack.c.h.b16 %v504
    %v808 = vunpack.c.l.b16 %v505
    %v809 = vunpack.c.l.b16 %v506
    %v810 = vunpack.c.h.b16 %v506
    %v811 = vunpack.c.l.b16 %v507
    %v812 = vunpack.c.l.b16 %v508
    %v813 = vunpack.c.h.b16 %v508
    %v814 = vunpack.c.l.b16 %v509
    %v815 = vunpack.c.l.b16 %v510
    %v816 = vunpack.c.h.b16 %v510
    %v817 = vunpack.c.l.b16 %v511
    %v818 = vunpack.c.l.b16 %v512
    %v819 = vunpack.c.h.b16 %v512
    %v820 = vunpack.c.l.b16 %v513
    %v821 = vunpack.c.l.b16 %v514
    %v822 = vunpack.c.h.b16 %v514
    %v823 = vunpack.c.l.b16 %v515
    %v824 = vunpack.c.l.b16 %v516
    %v825 = vunpack.c.h.b16 %v516
    %v826 = vunpack.c.l.b16 %v517
    %v827 = vunpack.c.l.b16 %v518
    %v828 = vunpack.c.h.b16 %v518
    %v829 = vunpack.c.l.b16 %v519
    %v830 = vunpack.c.l.b16 %v520
    %v831 = vunpack.c.h.b16 %v520
    %v832 = vunpack.c.l.b16 %v521
    %v833 = vunpack.c.l.b16 %v522
    %v834 = vunpack.c.h.b16 %v522
    %v835 = vunpack.c.l.b16 %v523
    %v836 = vunpack.c.l.b16 %v524
    %v837 = vunpack.c.h.b16 %v524
    %v838 = vunpack.c.l.b16 %v525
    %v839 = vunpack.c.l.b16 %v526
    %v840 = vunpack.c.h.b16 %v526
    %v841 = vunpack.c.l.b16 %v527
    %v842 = vunpack.c.l.b16 %v528
    %v843 = vunpack.c.h.b16 %v528
    %v844 = vunpack.c.l.b16 %v529
    %v845 = vunpack.c.l.b16 %v530
    %v846 = vunpack.c.h.b16 %v530
    %v847 = vunpack.c.l.b16 %v531
    %v848 = vunpack.c.l.b16 %v532
    %v849 = vunpack.c.h.b16 %v532
    %v850 = vunpack.c.l.b16 %v533
    %v851 = vunpack.c.l.b16 %v534
    %v852 = vunpack.c.h.b16 %v534
    %v853 = vunpack.c.l.b16 %v535
    %v854 = vunpack.c.l.b16 %v536
    %v855 = vunpack.c.h.b16 %v536
    %v856 = vunpack.c.l.b16 %v537
    %v857 = vunpack.c.l.b16 %v538
    %v858 = vunpack.c.h.b16 %v538
    %v859 = vunpack.c.l.b16 %v539
    %v860 = vunpack.c.l.b16 %v540
    %v861 = vunpack.c.h.b16 %v540
    %v862 = vunpack.c.l.b16 %v541
    %v863 = vunpack.c.l.b16 %v542
    %v864 = vunpack.c.h.b16 %v542
    %v865 = vunpack.c.l.b16 %v543
    %v866 = vunpack.c.l.b16 %v544
    %v867 = vunpack.c.h.b16 %v544
    %v868 = vunpack.c.l.b16 %v545
    %v869 = vunpack.c.l.b16 %v546
    %v870 = vunpack.c.h.b16 %v546
    %v871 = vunpack.c.l.b16 %v547
    %v872 = vunpack.c.l.b16 %v548
    %v873 = vunpack.c.h.b16 %v548
    %v874 = vunpack.c.l.b16 %v549
    %v875 = vunpack.c.l.b16 %v550
    %v876 = vunpack.c.h.b16 %v550
    %v877 = vunpack.c.l.b16 %v551
    %v878 = vunpack.c.l.b16 %v552
    %v879 = vunpack.c.h.b16 %v552
    %v880 = vunpack.c.l.b16 %v553
    %v881 = vunpack.c.l.b16 %v554
    %v882 = vunpack.c.h.b16 %v554
    %v883 = vunpack.c.l.b16 %v555
    %v884 = vunpack.c.l.b16 %v556
    %v885 = vunpack.c.h.b16 %v556
    %v886 = vunpack.c.l.b16 %v557
    %v887 = vunpack.c.l.b16 %v558
    %v888 = vunpack.c.h.b16 %v558
    %v889 = vunpack.c.l.b16 %v559
    %v890 = vunpack.c.l.b16 %v560
    %v891 = vunpack.c.h.b16 %v560
    %v892 = vunpack.c.l.b16 %v561
    %v893 = vunpack.c.l.b16 %v562
    %v894 = vunpack.c.h.b16 %v562
    %v895 = vunpack.c.l.b16 %v563
    %v896 = vunpack.c.l.b16 %v564
    %v897 = vunpack.c.h.b16 %v564
    %v898 = vunpack.c.l.b16 %v565
    %v899 = vunpack.c.l.b16 %v566
    %v900 = vunpack.c.h.b16 %v566
    %v901 = vunpack.c.l.b16 %v567
    %v902 = vunpack.c.l.b16 %v568
    %v903 = vunpack.c.h.b16 %v568
    %v904 = vunpack.c.l.b16 %v569
    %v905 = vunpack.c.l.b16 %v570
    %v906 = vunpack.c.h.b16 %v570
    %v907 = vunpack.c.l.b16 %v571
    %v908 = vunpack.c.l.b16 %v572
    %v909 = vunpack.c.h.b16 %v572
    %v910 = vunpack.c.l.b16 %v573
    %v911 = vpack.c.b16 %v722, %v719
    %v912 = vpack.c.b16 %v723, %v720
    %v913 = vpack.c.b16 %v724, %v721
    %v914 = vpack.c.b16 %v728, %v725
    %v915 = vpack.c.b16 %v729, %v726
    %v916 = vpack.c.b16 %v730, %v727
    %v917 = vpack.c.b16 %v734, %v731
    %v918 = vpack.c.b16 %v735, %v732
    %v919 = vpack.c.b16 %v736, %v733
    %v920 = vpack.c.b16 %v740, %v737
    %v921 = vpack.c.b16 %v741, %v738
    %v922 = vpack.c.b16 %v742, %v739
    %v923 = vpack.c.b16 %v746, %v743
    %v924 = vpack.c.b16 %v747, %v744
    %v925 = vpack.c.b16 %v748, %v745
    %v926 = vpack.c.b16 %v752, %v749
    %v927 = vpack.c.b16 %v753, %v750
    %v928 = vpack.c.b16 %v754, %v751
    %v929 = vpack.c.b16 %v758, %v755
    %v930 = vpack.c.b16 %v759, %v756
    %v931 = vpack.c.b16 %v760, %v757
    %v932 = vpack.c.b16 %v764, %v761
    %v933 = vpack.c.b16 %v765, %v762
    %v934 = vpack.c.b16 %v766, %v763
    %v935 = vpack.c.b16 %v770, %v767
    %v936 = vpack.c.b16 %v771, %v768
    %v937 = vpack.c.b16 %v772, %v769
    %v938 = vpack.c.b16 %v776, %v773
    %v939 = vpack.c.b16 %v777, %v774
    %v940 = vpack.c.b16 %v778, %v775
    %v941 = vpack.c.b16 %v782, %v779
    %v942 = vpack.c.b16 %v783, %v780
    %v943 = vpack.c.b16 %v784, %v781
    %v944 = vpack.c.b16 %v788, %v785
    %v945 = vpack.c.b16 %v789, %v786
    %v946 = vpack.c.b16 %v790, %v787
    %v947 = vpack.c.b16 %v794, %v791
    %v948 = vpack.c.b16 %v795, %v792
    %v949 = vpack.c.b16 %v796, %v793
    %v950 = vpack.c.b16 %v800, %v797
    %v951 = vpack.c.b16 %v801, %v798
    %v952 = vpack.c.b16 %v802, %v799
    %v953 = vpack.c.b16 %v806, %v803
    %v954 = vpack.c.b16 %v807, %v804
    %v955 = vpack.c.b16 %v808, %v805
    %v956 = vpack.c.b16 %v812, %v809
    %v957 = vpack.c.b16 %v813, %v810
    %v958 = vpack.c.b16 %v814, %v811
    %v959 = vpack.c.b16 %v818, %v815
    %v960 = vpack.c.b16 %v819, %v816
    %v961 = vpack.c.b16 %v820, %v817
    %v962 = vpack.c.b16 %v824, %v821
    %v963 = vpack.c.b16 %v825, %v822
    %v964 = vpack.c.b16 %v826, %v823
    %v965 = vpack.c.b16 %v830, %v827
    %v966 = vpack.c.b16 %v831, %v828
    %v967 = vpack.c.b16 %v832, %v829
    %v968 = vpack.c.b16 %v836, %v833
    %v969 = vpack.c.b16 %v837, %v834
    %v970 = vpack.c.b16 %v838, %v835
    %v971 = vpack.c.b16 %v842, %v839
    %v972 = vpack.c.b16 %v843, %v840
    %v973 = vpack.c.b16 %v844, %v841
    %v974 = vpack.c.b16 %v848, %v845
    %v975 = vpack.c.b16 %v849, %v846
    %v976 = vpack.c.b16 %v850, %v847
    %v977 = vpack.c.b16 %v854, %v851
    %v978 = vpack.c.b16 %v855, %v852
    %v979 = vpack.c.b16 %v856, %v853
    %v980 = vpack.c.b16 %v860, %v857
    %v981 = vpack.c.b16 %v861, %v858
    %v982 = vpack.c.b16 %v862, %v859
    %v983 = vpack.c.b16 %v866, %v863
    %v984 = vpack.c.b16 %v867, %v864
    %v985 = vpack.c.b16 %v868, %v865
    %v986 = vpack.c.b16 %v872, %v869
    %v987 = vpack.c.b16 %v873, %v870
    %v988 = vpack.c.b16 %v874, %v871
    %v989 = vpack.c.b16 %v878, %v875
    %v990 = vpack.c.b16 %v879, %v876
    %v991 = vpack.c.b16 %v880, %v877
    %v992 = vpack.c.b16 %v884, %v881
    %v993 = vpack.c.b16 %v885, %v882
    %v994 = vpack.c.b16 %v886, %v883
    %v995 = vpack.c.b16 %v890, %v887
    %v996 = vpack.c.b16 %v891, %v888
    %v997 = vpack.c.b16 %v892, %v889
    %v998 = vpack.c.b16 %v896, %v893
    %v999 = vpack.c.b16 %v897, %v894
    %v1000 = vpack.c.b16 %v898, %v895
    %v1001 = vpack.c.b16 %v902, %v899
    %v1002 = vpack.c.b16 %v903, %v900
    %v1003 = vpack.c.b16 %v904, %v901
    %v1004 = vpack.c.b16 %v908, %v905
    %v1005 = vpack.c.b16 %v909, %v906
    %v1006 = vpack.c.b16 %v910, %v907
    %1103 = vmatprep.subr.bf16.mxu0 %v912
    %1104 = vmatpush1.bf16.msra.mxu0 %v911
    %1105 = vmatprep.subr.bf16.mxu0 %v915
    %1106 = vmatpush1.bf16.msra.mxu0 %v914
    %1107 = vmatprep.subr.bf16.mxu0 %v918
    %1108 = vmatpush1.bf16.msra.mxu0 %v917
    %1109 = vmatprep.subr.bf16.mxu0 %v921
    %1110 = vmatpush1.bf16.msra.mxu0 %v920
    %1111 = vmatprep.subr.bf16.mxu0 %v924
    %1112 = vmatpush1.bf16.msra.mxu0 %v923
    %1113 = vmatprep.subr.bf16.mxu0 %v927
    %1114 = vmatpush1.bf16.msra.mxu0 %v926
    %1115 = vmatprep.subr.bf16.mxu0 %v930
    %1116 = vmatpush1.bf16.msra.mxu0 %v929
    %1117 = vmatprep.subr.bf16.mxu0 %v933
    %1118 = vmatpush1.bf16.msra.mxu0 %v932
    %1119 = vmatprep.subr.bf16.mxu0 %v936
    %1120 = vmatpush1.bf16.msra.mxu0 %v935
    %1121 = vmatprep.subr.bf16.mxu0 %v939
    %1122 = vmatpush1.bf16.msra.mxu0 %v938
    %1123 = vmatprep.subr.bf16.mxu0 %v942
    %1124 = vmatpush1.bf16.msra.mxu0 %v941
    %1125 = vmatprep.subr.bf16.mxu0 %v945
    %1126 = vmatpush1.bf16.msra.mxu0 %v944
    %1127 = vmatprep.subr.bf16.mxu0 %v948
    %1128 = vmatpush1.bf16.msra.mxu0 %v947
    %1129 = vmatprep.subr.bf16.mxu0 %v951
    %1130 = vmatpush1.bf16.msra.mxu0 %v950
    %1131 = vmatprep.subr.bf16.mxu0 %v954
    %1132 = vmatpush1.bf16.msra.mxu0 %v953
    %1133 = vmatprep.subr.bf16.mxu0 %v957
    %1134 = vmatpush1.bf16.msra.mxu0 %v956
    %1135 = vmatprep.mubr.bf16.mxu0 %v443
    %1136 = vmatmul.mubr.bf16.gmra.mrb[0].mxu0 %v442
    %v1137 = vpop.f32.mrb[0].mxu0
    %v1138 = vadd.f32 %v579, %v1137
    %v1139 = vpop.f32.mrb[0].mxu0
    %v1140 = vadd.f32 %v583, %v1139
    %v1141 = vpop.f32.mrb[0].mxu0
    %v1142 = vadd.f32 %v579, %v1141
    %v1143 = vpop.f32.mrb[0].mxu0
    %v1144 = vadd.f32 %v583, %v1143
    %1145 = vdwg.mxu0
    %1146 = vmatprep.subr.bf16.mxu0 %v960
    %1147 = vmatpush1.bf16.msra.mxu0 %v959
    %1148 = vmatprep.subr.bf16.mxu0 %v963
    %1149 = vmatpush1.bf16.msra.mxu0 %v962
    %1150 = vmatprep.subr.bf16.mxu0 %v966
    %1151 = vmatpush1.bf16.msra.mxu0 %v965
    %1152 = vmatprep.subr.bf16.mxu0 %v969
    %1153 = vmatpush1.bf16.msra.mxu0 %v968
    %1154 = vmatprep.subr.bf16.mxu0 %v972
    %1155 = vmatpush1.bf16.msra.mxu0 %v971
    %1156 = vmatprep.subr.bf16.mxu0 %v975
    %1157 = vmatpush1.bf16.msra.mxu0 %v974
    %1158 = vmatprep.subr.bf16.mxu0 %v978
    %1159 = vmatpush1.bf16.msra.mxu0 %v977
    %1160 = vmatprep.subr.bf16.mxu0 %v981
    %1161 = vmatpush1.bf16.msra.mxu0 %v980
    %1162 = vmatprep.subr.bf16.mxu0 %v984
    %1163 = vmatpush1.bf16.msra.mxu0 %v983
    %1164 = vmatprep.subr.bf16.mxu0 %v987
    %1165 = vmatpush1.bf16.msra.mxu0 %v986
    %1166 = vmatprep.subr.bf16.mxu0 %v990
    %1167 = vmatpush1.bf16.msra.mxu0 %v989
    %1168 = vmatprep.subr.bf16.mxu0 %v993
    %1169 = vmatpush1.bf16.msra.mxu0 %v992
    %1170 = vmatprep.subr.bf16.mxu0 %v996
    %1171 = vmatpush1.bf16.msra.mxu0 %v995
    %1172 = vmatprep.subr.bf16.mxu0 %v999
    %1173 = vmatpush1.bf16.msra.mxu0 %v998
    %1174 = vmatprep.subr.bf16.mxu0 %v1002
    %1175 = vmatpush1.bf16.msra.mxu0 %v1001
    %1176 = vmatprep.subr.bf16.mxu0 %v1005
    %1177 = vmatpush1.bf16.msra.mxu0 %v1004
    %1178 = vmatprep.mubr.bf16.mxu0 %v445
    %1179 = vmatmul.mubr.bf16.gmra.mrb[0].mxu0 %v444
    %v1180 = vpop.f32.mrb[0].mxu0
    %v1181 = vadd.f32 %v1138, %v1180
    %v1182 = vpop.f32.mrb[0].mxu0
    %v1183 = vadd.f32 %v1140, %v1182
    %v1184 = vpop.f32.mrb[0].mxu0
    %v1185 = vadd.f32 %v1142, %v1184
    %v1186 = vpop.f32.mrb[0].mxu0
    %v1187 = vadd.f32 %v1144, %v1186
    %1188 = vdwg.mxu0
    %1189 = vmatprep.subr.bf16.mxu0 0
    %1190 = vmatpush1.bf16.msra.mxu0 %v913
    %1191 = vmatprep.subr.bf16.mxu0 0
    %1192 = vmatpush1.bf16.msra.mxu0 %v916
    %1193 = vmatprep.subr.bf16.mxu0 0
    %1194 = vmatpush1.bf16.msra.mxu0 %v919
    %1195 = vmatprep.subr.bf16.mxu0 0
    %1196 = vmatpush1.bf16.msra.mxu0 %v922
    %1197 = vmatprep.subr.bf16.mxu0 0
    %1198 = vmatpush1.bf16.msra.mxu0 %v925
    %1199 = vmatprep.subr.bf16.mxu0 0
    %1200 = vmatpush1.bf16.msra.mxu0 %v928
    %1201 = vmatprep.subr.bf16.mxu0 0
    %1202 = vmatpush1.bf16.msra.mxu0 %v931
    %1203 = vmatprep.subr.bf16.mxu0 0
    %1204 = vmatpush1.bf16.msra.mxu0 %v934
    %1205 = vmatprep.subr.bf16.mxu0 0
    %1206 = vmatpush1.bf16.msra.mxu0 %v937
    %1207 = vmatprep.subr.bf16.mxu0 0
    %1208 = vmatpush1.bf16.msra.mxu0 %v940
    %1209 = vmatprep.subr.bf16.mxu0 0
    %1210 = vmatpush1.bf16.msra.mxu0 %v943
    %1211 = vmatprep.subr.bf16.mxu0 0
    %1212 = vmatpush1.bf16.msra.mxu0 %v946
    %1213 = vmatprep.subr.bf16.mxu0 0
    %1214 = vmatpush1.bf16.msra.mxu0 %v949
    %1215 = vmatprep.subr.bf16.mxu0 0
    %1216 = vmatpush1.bf16.msra.mxu0 %v952
    %1217 = vmatprep.subr.bf16.mxu0 0
    %1218 = vmatpush1.bf16.msra.mxu0 %v955
    %1219 = vmatprep.subr.bf16.mxu0 0
    %1220 = vmatpush1.bf16.msra.mxu0 %v958
    %1221 = vmatprep.mubr.bf16.mxu0 %v443
    %1222 = vmatmul.mubr.bf16.gmra.mrb[0].mxu0 %v442
    %v1223 = vpop.f32.mrb[0].mxu0
    %v1224 = vadd.f32 %v587, %v1223
    %v1225 = vpop.f32.mrb[0].mxu0
    %v1226 = vpop.f32.mrb[0].mxu0
    %v1227 = vadd.f32 %v587, %v1226
    %v1228 = vpop.f32.mrb[0].mxu0
    %1229 = vdwg.mxu0
    %1230 = vmatprep.subr.bf16.mxu0 0
    %1231 = vmatpush1.bf16.msra.mxu0 %v961
    %1232 = vmatprep.subr.bf16.mxu0 0
    %1233 = vmatpush1.bf16.msra.mxu0 %v964
    %1234 = vmatprep.subr.bf16.mxu0 0
    %1235 = vmatpush1.bf16.msra.mxu0 %v967
    %1236 = vmatprep.subr.bf16.mxu0 0
    %1237 = vmatpush1.bf16.msra.mxu0 %v970
    %1238 = vmatprep.subr.bf16.mxu0 0
    %1239 = vmatpush1.bf16.msra.mxu0 %v973
    %1240 = vmatprep.subr.bf16.mxu0 0
    %1241 = vmatpush1.bf16.msra.mxu0 %v976
    %1242 = vmatprep.subr.bf16.mxu0 0
    %1243 = vmatpush1.bf16.msra.mxu0 %v979
    %1244 = vmatprep.subr.bf16.mxu0 0
    %1245 = vmatpush1.bf16.msra.mxu0 %v982
    %1246 = vmatprep.subr.bf16.mxu0 0
    %1247 = vmatpush1.bf16.msra.mxu0 %v985
    %1248 = vmatprep.subr.bf16.mxu0 0
    %1249 = vmatpush1.bf16.msra.mxu0 %v988
    %1250 = vmatprep.subr.bf16.mxu0 0
    %1251 = vmatpush1.bf16.msra.mxu0 %v991
    %1252 = vmatprep.subr.bf16.mxu0 0
    %1253 = vmatpush1.bf16.msra.mxu0 %v994
    %1254 = vmatprep.subr.bf16.mxu0 0
    %1255 = vmatpush1.bf16.msra.mxu0 %v997
    %1256 = vmatprep.subr.bf16.mxu0 0
    %1257 = vmatpush1.bf16.msra.mxu0 %v1000
    %1258 = vmatprep.subr.bf16.mxu0 0
    %1259 = vmatpush1.bf16.msra.mxu0 %v1003
    %1260 = vmatprep.subr.bf16.mxu0 0
    %1261 = vmatpush1.bf16.msra.mxu0 %v1006
    %1262 = vmatprep.mubr.bf16.mxu0 %v445
    %1263 = vmatmul.mubr.bf16.gmra.mrb[0].mxu0 %v444
    %v1264 = vpop.f32.mrb[0].mxu0
    %v1265 = vadd.f32 %v1224, %v1264
    %v1266 = vpop.f32.mrb[0].mxu0
    %v1267 = vpop.f32.mrb[0].mxu0
    %v1268 = vadd.f32 %v1227, %v1267
    %v1269 = vpop.f32.mrb[0].mxu0
    %1270 = vdwg.mxu0
    %v1271 = vmax.f32 %v1181, 0.0
    %v1272 = vmax.f32 %v1183, 0.0
    %v1273 = vmax.f32 %v1265, 0.0
    %v1274 = vmax.f32 %v1185, 0.0
    %v1275 = vmax.f32 %v1187, 0.0
    %v1276 = vmax.f32 %v1268, 0.0
    %v1277 = vpack.c.bf16 %v1274, %v1271
    %v1278 = vpack.c.bf16 %v1275, %v1272
    %v1279 = vpack.c.bf16 %v1276, %v1273
    %v1280 = vld [vmem:[#allocation7] sm:$0xff]
    %v1281 = vld [vmem:[#allocation7 + $0x8] sm:$0xff]
    %v1282 = vld [vmem:[#allocation7 + $0x10] sm:$0xff]
    %v1283 = vld [vmem:[#allocation7 + $0x18] sm:$0xff]
    %v1284 = vld [vmem:[#allocation7 + $0x20] sm:$0xff]
    %v1285 = vld [vmem:[#allocation7 + $0x28] sm:$0xff]
    %v1286 = vld [vmem:[#allocation7 + $0x30] sm:$0xff]
    %v1287 = vld [vmem:[#allocation7 + $0x38] sm:$0xff]
    %v1288 = vld [vmem:[#allocation7 + $0x40] sm:$0xff]
    %v1289 = vld [vmem:[#allocation7 + $0x48] sm:$0xff]
    %v1290 = vld [vmem:[#allocation7 + $0x50] sm:$0xff]
    %v1291 = vld [vmem:[#allocation7 + $0x58] sm:$0xff]
    %v1292 = vld [vmem:[#allocation7 + $0x60] sm:$0xff]
    %v1293 = vld [vmem:[#allocation7 + $0x68] sm:$0xff]
    %v1294 = vld [vmem:[#allocation7 + $0x70] sm:$0xff]
    %v1295 = vld [vmem:[#allocation7 + $0x78] sm:$0xff]
    %v1296 = vld [vmem:[#allocation7 + $0x80] sm:$0xff]
    %v1297 = vld [vmem:[#allocation7 + $0x88] sm:$0xff]
    %v1298 = vld [vmem:[#allocation7 + $0x90] sm:$0xff]
    %v1299 = vld [vmem:[#allocation7 + $0x98] sm:$0xff]
    %v1300 = vld [vmem:[#allocation7 + $0xa0] sm:$0xff]
    %v1301 = vld [vmem:[#allocation7 + $0xa8] sm:$0xff]
    %v1302 = vld [vmem:[#allocation7 + $0xb0] sm:$0xff]
    %v1303 = vld [vmem:[#allocation7 + $0xb8] sm:$0xff]
    %v1304 = vld [vmem:[#allocation7 + $0xc0] sm:$0xff]
    %v1305 = vld [vmem:[#allocation7 + $0xc8] sm:$0xff]
    %v1306 = vld [vmem:[#allocation7 + $0xd0] sm:$0xff]
    %v1307 = vld [vmem:[#allocation7 + $0xd8] sm:$0xff]
    %v1308 = vld [vmem:[#allocation7 + $0xe0] sm:$0xff]
    %v1309 = vld [vmem:[#allocation7 + $0xe8] sm:$0xff]
    %v1310 = vld [vmem:[#allocation7 + $0xf0] sm:$0xff]
    %v1311 = vld [vmem:[#allocation7 + $0xf8] sm:$0xff]
    %v1312 = vld [vmem:[#allocation7 + $0x100] sm:$0xff]
    %v1313 = vld [vmem:[#allocation7 + $0x108] sm:$0xff]
    %v1314 = vld [vmem:[#allocation7 + $0x110] sm:$0xff]
    %v1315 = vld [vmem:[#allocation7 + $0x118] sm:$0xff]
    %v1316 = vld [vmem:[#allocation7 + $0x120] sm:$0xff]
    %v1317 = vld [vmem:[#allocation7 + $0x128] sm:$0xff]
    %v1318 = vld [vmem:[#allocation7 + $0x130] sm:$0xff]
    %v1319 = vld [vmem:[#allocation7 + $0x138] sm:$0xff]
    %v1320 = vld [vmem:[#allocation7 + $0x140] sm:$0xff]
    %v1321 = vld [vmem:[#allocation7 + $0x148] sm:$0xff]
    %v1322 = vld [vmem:[#allocation7 + $0x150] sm:$0xff]
    %v1323 = vld [vmem:[#allocation7 + $0x158] sm:$0xff]
    %v1324 = vld [vmem:[#allocation7 + $0x160] sm:$0xff]
    %v1325 = vld [vmem:[#allocation7 + $0x168] sm:$0xff]
    %v1326 = vld [vmem:[#allocation7 + $0x170] sm:$0xff]
    %v1327 = vld [vmem:[#allocation7 + $0x178] sm:$0xff]
    %v1328 = vld [vmem:[%s6] sm:$0x3]
    %v1330 = vlaneseq
    %v1331 = vshrl.u32 %v1330, 7
    %v1332 = vsub.s32 0, %v1331
    %v1333 = vrot.slane %v1328, %v1332
    %v1334 = vlaneseq
    %v1335 = vshrl.u32 %v1334, 7
    %v1336 = vsub.s32 1, %v1335
    %v1337 = vrot.slane %v1328, %v1336
    %v1388 = vunpack.c.l.b16 %v1280
    %v1389 = vunpack.c.h.b16 %v1280
    %v1390 = vunpack.c.l.b16 %v1281
    %v1391 = vunpack.c.h.b16 %v1281
    %v1392 = vunpack.c.l.b16 %v1282
    %v1393 = vunpack.c.h.b16 %v1282
    %v1394 = vunpack.c.l.b16 %v1283
    %v1395 = vunpack.c.h.b16 %v1283
    %v1396 = vunpack.c.l.b16 %v1284
    %v1397 = vunpack.c.h.b16 %v1284
    %v1398 = vunpack.c.l.b16 %v1285
    %v1399 = vunpack.c.h.b16 %v1285
    %v1400 = vunpack.c.l.b16 %v1286
    %v1401 = vunpack.c.h.b16 %v1286
    %v1402 = vunpack.c.l.b16 %v1287
    %v1403 = vunpack.c.h.b16 %v1287
    %v1404 = vunpack.c.l.b16 %v1288
    %v1405 = vunpack.c.h.b16 %v1288
    %v1406 = vunpack.c.l.b16 %v1289
    %v1407 = vunpack.c.h.b16 %v1289
    %v1408 = vunpack.c.l.b16 %v1290
    %v1409 = vunpack.c.h.b16 %v1290
    %v1410 = vunpack.c.l.b16 %v1291
    %v1411 = vunpack.c.h.b16 %v1291
    %v1412 = vunpack.c.l.b16 %v1292
    %v1413 = vunpack.c.h.b16 %v1292
    %v1414 = vunpack.c.l.b16 %v1293
    %v1415 = vunpack.c.h.b16 %v1293
    %v1416 = vunpack.c.l.b16 %v1294
    %v1417 = vunpack.c.h.b16 %v1294
    %v1418 = vunpack.c.l.b16 %v1295
    %v1419 = vunpack.c.h.b16 %v1295
    %v1420 = vunpack.c.l.b16 %v1296
    %v1421 = vunpack.c.h.b16 %v1296
    %v1422 = vunpack.c.l.b16 %v1297
    %v1423 = vunpack.c.h.b16 %v1297
    %v1424 = vunpack.c.l.b16 %v1298
    %v1425 = vunpack.c.h.b16 %v1298
    %v1426 = vunpack.c.l.b16 %v1299
    %v1427 = vunpack.c.h.b16 %v1299
    %v1428 = vunpack.c.l.b16 %v1300
    %v1429 = vunpack.c.h.b16 %v1300
    %v1430 = vunpack.c.l.b16 %v1301
    %v1431 = vunpack.c.h.b16 %v1301
    %v1432 = vunpack.c.l.b16 %v1302
    %v1433 = vunpack.c.h.b16 %v1302
    %v1434 = vunpack.c.l.b16 %v1303
    %v1435 = vunpack.c.h.b16 %v1303
    %v1436 = vunpack.c.l.b16 %v1304
    %v1437 = vunpack.c.h.b16 %v1304
    %v1438 = vunpack.c.l.b16 %v1305
    %v1439 = vunpack.c.h.b16 %v1305
    %v1440 = vunpack.c.l.b16 %v1306
    %v1441 = vunpack.c.h.b16 %v1306
    %v1442 = vunpack.c.l.b16 %v1307
    %v1443 = vunpack.c.h.b16 %v1307
    %v1444 = vunpack.c.l.b16 %v1308
    %v1445 = vunpack.c.h.b16 %v1308
    %v1446 = vunpack.c.l.b16 %v1309
    %v1447 = vunpack.c.h.b16 %v1309
    %v1448 = vunpack.c.l.b16 %v1310
    %v1449 = vunpack.c.h.b16 %v1310
    %v1450 = vunpack.c.l.b16 %v1311
    %v1451 = vunpack.c.h.b16 %v1311
    %v1452 = vunpack.c.l.b16 %v1312
    %v1453 = vunpack.c.h.b16 %v1312
    %v1454 = vunpack.c.l.b16 %v1313
    %v1455 = vunpack.c.h.b16 %v1313
    %v1456 = vunpack.c.l.b16 %v1314
    %v1457 = vunpack.c.h.b16 %v1314
    %v1458 = vunpack.c.l.b16 %v1315
    %v1459 = vunpack.c.h.b16 %v1315
    %v1460 = vunpack.c.l.b16 %v1316
    %v1461 = vunpack.c.h.b16 %v1316
    %v1462 = vunpack.c.l.b16 %v1317
    %v1463 = vunpack.c.h.b16 %v1317
    %v1464 = vunpack.c.l.b16 %v1318
    %v1465 = vunpack.c.h.b16 %v1318
    %v1466 = vunpack.c.l.b16 %v1319
    %v1467 = vunpack.c.h.b16 %v1319
    %v1468 = vunpack.c.l.b16 %v1320
    %v1469 = vunpack.c.h.b16 %v1320
    %v1470 = vunpack.c.l.b16 %v1321
    %v1471 = vunpack.c.h.b16 %v1321
    %v1472 = vunpack.c.l.b16 %v1322
    %v1473 = vunpack.c.h.b16 %v1322
    %v1474 = vunpack.c.l.b16 %v1323
    %v1475 = vunpack.c.h.b16 %v1323
    %v1476 = vunpack.c.l.b16 %v1324
    %v1477 = vunpack.c.h.b16 %v1324
    %v1478 = vunpack.c.l.b16 %v1325
    %v1479 = vunpack.c.h.b16 %v1325
    %v1480 = vunpack.c.l.b16 %v1326
    %v1481 = vunpack.c.h.b16 %v1326
    %v1482 = vunpack.c.l.b16 %v1327
    %v1483 = vunpack.c.h.b16 %v1327
    %v1484 = vpack.c.b16 %v1390, %v1388
    %v1485 = vpack.c.b16 %v1391, %v1389
    %v1486 = vpack.c.b16 %v1394, %v1392
    %v1487 = vpack.c.b16 %v1395, %v1393
    %v1488 = vpack.c.b16 %v1398, %v1396
    %v1489 = vpack.c.b16 %v1399, %v1397
    %v1490 = vpack.c.b16 %v1402, %v1400
    %v1491 = vpack.c.b16 %v1403, %v1401
    %v1492 = vpack.c.b16 %v1406, %v1404
    %v1493 = vpack.c.b16 %v1407, %v1405
    %v1494 = vpack.c.b16 %v1410, %v1408
    %v1495 = vpack.c.b16 %v1411, %v1409
    %v1496 = vpack.c.b16 %v1414, %v1412
    %v1497 = vpack.c.b16 %v1415, %v1413
    %v1498 = vpack.c.b16 %v1418, %v1416
    %v1499 = vpack.c.b16 %v1419, %v1417
    %v1500 = vpack.c.b16 %v1422, %v1420
    %v1501 = vpack.c.b16 %v1423, %v1421
    %v1502 = vpack.c.b16 %v1426, %v1424
    %v1503 = vpack.c.b16 %v1427, %v1425
    %v1504 = vpack.c.b16 %v1430, %v1428
    %v1505 = vpack.c.b16 %v1431, %v1429
    %v1506 = vpack.c.b16 %v1434, %v1432
    %v1507 = vpack.c.b16 %v1435, %v1433
    %v1508 = vpack.c.b16 %v1438, %v1436
    %v1509 = vpack.c.b16 %v1439, %v1437
    %v1510 = vpack.c.b16 %v1442, %v1440
    %v1511 = vpack.c.b16 %v1443, %v1441
    %v1512 = vpack.c.b16 %v1446, %v1444
    %v1513 = vpack.c.b16 %v1447, %v1445
    %v1514 = vpack.c.b16 %v1450, %v1448
    %v1515 = vpack.c.b16 %v1451, %v1449
    %v1516 = vpack.c.b16 %v1454, %v1452
    %v1517 = vpack.c.b16 %v1455, %v1453
    %v1518 = vpack.c.b16 %v1458, %v1456
    %v1519 = vpack.c.b16 %v1459, %v1457
    %v1520 = vpack.c.b16 %v1462, %v1460
    %v1521 = vpack.c.b16 %v1463, %v1461
    %v1522 = vpack.c.b16 %v1466, %v1464
    %v1523 = vpack.c.b16 %v1467, %v1465
    %v1524 = vpack.c.b16 %v1470, %v1468
    %v1525 = vpack.c.b16 %v1471, %v1469
    %v1526 = vpack.c.b16 %v1474, %v1472
    %v1527 = vpack.c.b16 %v1475, %v1473
    %v1528 = vpack.c.b16 %v1478, %v1476
    %v1529 = vpack.c.b16 %v1479, %v1477
    %v1530 = vpack.c.b16 %v1482, %v1480
    %v1531 = vpack.c.b16 %v1483, %v1481
    %1580 = vmatprep.subr.bf16.mxu0 %v1485
    %1581 = vmatpush1.bf16.msra.mxu0 %v1484
    %1582 = vmatprep.subr.bf16.mxu0 %v1487
    %1583 = vmatpush1.bf16.msra.mxu0 %v1486
    %1584 = vmatprep.subr.bf16.mxu0 %v1489
    %1585 = vmatpush1.bf16.msra.mxu0 %v1488
    %1586 = vmatprep.subr.bf16.mxu0 %v1491
    %1587 = vmatpush1.bf16.msra.mxu0 %v1490
    %1588 = vmatprep.subr.bf16.mxu0 %v1493
    %1589 = vmatpush1.bf16.msra.mxu0 %v1492
    %1590 = vmatprep.subr.bf16.mxu0 %v1495
    %1591 = vmatpush1.bf16.msra.mxu0 %v1494
    %1592 = vmatprep.subr.bf16.mxu0 %v1497
    %1593 = vmatpush1.bf16.msra.mxu0 %v1496
    %1594 = vmatprep.subr.bf16.mxu0 %v1499
    %1595 = vmatpush1.bf16.msra.mxu0 %v1498
    %1596 = vmatprep.subr.bf16.mxu0 %v1501
    %1597 = vmatpush1.bf16.msra.mxu0 %v1500
    %1598 = vmatprep.subr.bf16.mxu0 %v1503
    %1599 = vmatpush1.bf16.msra.mxu0 %v1502
    %1600 = vmatprep.subr.bf16.mxu0 %v1505
    %1601 = vmatpush1.bf16.msra.mxu0 %v1504
    %1602 = vmatprep.subr.bf16.mxu0 %v1507
    %1603 = vmatpush1.bf16.msra.mxu0 %v1506
    %1604 = vmatprep.subr.bf16.mxu0 %v1509
    %1605 = vmatpush1.bf16.msra.mxu0 %v1508
    %1606 = vmatprep.subr.bf16.mxu0 %v1511
    %1607 = vmatpush1.bf16.msra.mxu0 %v1510
    %1608 = vmatprep.subr.bf16.mxu0 %v1513
    %1609 = vmatpush1.bf16.msra.mxu0 %v1512
    %1610 = vmatprep.subr.bf16.mxu0 %v1515
    %1611 = vmatpush1.bf16.msra.mxu0 %v1514
    %1612 = vmatprep.mubr.bf16.mxu0 %v1278
    %1613 = vmatmul.mubr.bf16.gmra.mrb[0].mxu0 %v1277
    %v1614 = vpop.f32.mrb[0].mxu0
    %v1615 = vadd.f32 %v1333, %v1614
    %v1616 = vpop.f32.mrb[0].mxu0
    %v1617 = vadd.f32 %v1337, %v1616
    %v1618 = vpop.f32.mrb[0].mxu0
    %v1619 = vadd.f32 %v1333, %v1618
    %v1620 = vpop.f32.mrb[0].mxu0
    %v1621 = vadd.f32 %v1337, %v1620
    %1622 = vdwg.mxu0
    %1623 = vmatprep.subr.bf16.mxu0 %v1517
    %1624 = vmatpush1.bf16.msra.mxu0 %v1516
    %1625 = vmatprep.subr.bf16.mxu0 %v1519
    %1626 = vmatpush1.bf16.msra.mxu0 %v1518
    %1627 = vmatprep.subr.bf16.mxu0 %v1521
    %1628 = vmatpush1.bf16.msra.mxu0 %v1520
    %1629 = vmatprep.subr.bf16.mxu0 %v1523
    %1630 = vmatpush1.bf16.msra.mxu0 %v1522
    %1631 = vmatprep.subr.bf16.mxu0 %v1525
    %1632 = vmatpush1.bf16.msra.mxu0 %v1524
    %1633 = vmatprep.subr.bf16.mxu0 %v1527
    %1634 = vmatpush1.bf16.msra.mxu0 %v1526
    %1635 = vmatprep.subr.bf16.mxu0 %v1529
    %1636 = vmatpush1.bf16.msra.mxu0 %v1528
    %1637 = vmatprep.subr.bf16.mxu0 %v1531
    %1638 = vmatpush1.bf16.msra.mxu0 %v1530
    %1639 = vmatprep.subr.bf16.mxu0 0
    %1640 = vmatpush1.bf16.msra.mxu0 0
    %1641 = vmatprep.subr.bf16.mxu0 0
    %1642 = vmatpush1.bf16.msra.mxu0 0
    %1643 = vmatprep.subr.bf16.mxu0 0
    %1644 = vmatpush1.bf16.msra.mxu0 0
    %1645 = vmatprep.subr.bf16.mxu0 0
    %1646 = vmatpush1.bf16.msra.mxu0 0
    %1647 = vmatprep.subr.bf16.mxu0 0
    %1648 = vmatpush1.bf16.msra.mxu0 0
    %1649 = vmatprep.subr.bf16.mxu0 0
    %1650 = vmatpush1.bf16.msra.mxu0 0
    %1651 = vmatprep.subr.bf16.mxu0 0
    %1652 = vmatpush1.bf16.msra.mxu0 0
    %1653 = vmatprep.subr.bf16.mxu0 0
    %1654 = vmatpush1.bf16.msra.mxu0 0
    %1655 = vmatprep.mubr.bf16.mxu0 0
    %1656 = vmatmul.mubr.bf16.gmra.mrb[0].mxu0 %v1279
    %v1657 = vpop.f32.mrb[0].mxu0
    %v1658 = vadd.f32 %v1615, %v1657
    %v1659 = vpop.f32.mrb[0].mxu0
    %v1660 = vadd.f32 %v1617, %v1659
    %v1661 = vpop.f32.mrb[0].mxu0
    %v1662 = vadd.f32 %v1619, %v1661
    %v1663 = vpop.f32.mrb[0].mxu0
    %v1664 = vadd.f32 %v1621, %v1663
    %1665 = vdwg.mxu0
    %v1666 = vmax.f32 %v1658, 0.0
    %v1667 = vmax.f32 %v1660, 0.0
    %v1668 = vmax.f32 %v1662, 0.0
    %v1669 = vmax.f32 %v1664, 0.0
    %v1670 = vpack.c.bf16 %v1668, %v1666
    %v1671 = vpack.c.bf16 %v1669, %v1667
    %v1672 = vld [vmem:[#allocation8] sm:$0xf]
    %v1673 = vld [vmem:[#allocation8 + $0x4] sm:$0xf]
    %v1674 = vld [vmem:[#allocation8 + $0x8] sm:$0xf]
    %v1675 = vld [vmem:[#allocation8 + $0xc] sm:$0xf]
    %v1676 = vld [vmem:[#allocation8 + $0x10] sm:$0xf]
    %v1677 = vld [vmem:[#allocation8 + $0x14] sm:$0xf]
    %v1678 = vld [vmem:[#allocation8 + $0x18] sm:$0xf]
    %v1679 = vld [vmem:[#allocation8 + $0x1c] sm:$0xf]
    %v1680 = vld [vmem:[#allocation8 + $0x20] sm:$0xf]
    %v1681 = vld [vmem:[#allocation8 + $0x24] sm:$0xf]
    %v1682 = vld [vmem:[#allocation8 + $0x28] sm:$0xf]
    %v1683 = vld [vmem:[#allocation8 + $0x2c] sm:$0xf]
    %v1684 = vld [vmem:[#allocation8 + $0x30] sm:$0xf]
    %v1685 = vld [vmem:[#allocation8 + $0x34] sm:$0xf]
    %v1686 = vld [vmem:[#allocation8 + $0x38] sm:$0xf]
    %v1687 = vld [vmem:[#allocation8 + $0x3c] sm:$0xf]
    %v1688 = vld [vmem:[#allocation8 + $0x40] sm:$0xf]
    %v1689 = vld [vmem:[#allocation8 + $0x44] sm:$0xf]
    %v1690 = vld [vmem:[#allocation8 + $0x48] sm:$0xf]
    %v1691 = vld [vmem:[#allocation8 + $0x4c] sm:$0xf]
    %v1692 = vld [vmem:[#allocation8 + $0x50] sm:$0xf]
    %v1693 = vld [vmem:[#allocation8 + $0x54] sm:$0xf]
    %v1694 = vld [vmem:[#allocation8 + $0x58] sm:$0xf]
    %v1695 = vld [vmem:[#allocation8 + $0x5c] sm:$0xf]
    %v1696 = vld [vmem:[#allocation8 + $0x60] sm:$0xf]
    %v1697 = vld [vmem:[#allocation8 + $0x64] sm:$0xf]
    %v1698 = vld [vmem:[#allocation8 + $0x68] sm:$0xf]
    %v1699 = vld [vmem:[#allocation8 + $0x6c] sm:$0xf]
    %v1700 = vld [vmem:[#allocation8 + $0x70] sm:$0xf]
    %v1701 = vld [vmem:[#allocation8 + $0x74] sm:$0xf]
    %v1702 = vld [vmem:[#allocation8 + $0x78] sm:$0xf]
    %v1703 = vld [vmem:[#allocation8 + $0x7c] sm:$0xf]
    %v1704 = vld [vmem:[%s8] sm:$0x1]
    %v1706 = vlaneseq
    %v1707 = vshrl.u32 %v1706, 7
    %v1708 = vsub.s32 0, %v1707
    %v1709 = vrot.slane %v1704, %v1708
    %v1743 = vunpack.c.l.b16 %v1672
    %v1744 = vunpack.c.l.b16 %v1673
    %v1745 = vunpack.c.l.b16 %v1674
    %v1746 = vunpack.c.l.b16 %v1675
    %v1747 = vunpack.c.l.b16 %v1676
    %v1748 = vunpack.c.l.b16 %v1677
    %v1749 = vunpack.c.l.b16 %v1678
    %v1750 = vunpack.c.l.b16 %v1679
    %v1751 = vunpack.c.l.b16 %v1680
    %v1752 = vunpack.c.l.b16 %v1681
    %v1753 = vunpack.c.l.b16 %v1682
    %v1754 = vunpack.c.l.b16 %v1683
    %v1755 = vunpack.c.l.b16 %v1684
    %v1756 = vunpack.c.l.b16 %v1685
    %v1757 = vunpack.c.l.b16 %v1686
    %v1758 = vunpack.c.l.b16 %v1687
    %v1759 = vunpack.c.l.b16 %v1688
    %v1760 = vunpack.c.l.b16 %v1689
    %v1761 = vunpack.c.l.b16 %v1690
    %v1762 = vunpack.c.l.b16 %v1691
    %v1763 = vunpack.c.l.b16 %v1692
    %v1764 = vunpack.c.l.b16 %v1693
    %v1765 = vunpack.c.l.b16 %v1694
    %v1766 = vunpack.c.l.b16 %v1695
    %v1767 = vunpack.c.l.b16 %v1696
    %v1768 = vunpack.c.l.b16 %v1697
    %v1769 = vunpack.c.l.b16 %v1698
    %v1770 = vunpack.c.l.b16 %v1699
    %v1771 = vunpack.c.l.b16 %v1700
    %v1772 = vunpack.c.l.b16 %v1701
    %v1773 = vunpack.c.l.b16 %v1702
    %v1774 = vunpack.c.l.b16 %v1703
    %v1775 = vpack.c.b16 %v1744, %v1743
    %v1776 = vpack.c.b16 %v1746, %v1745
    %v1777 = vpack.c.b16 %v1748, %v1747
    %v1778 = vpack.c.b16 %v1750, %v1749
    %v1779 = vpack.c.b16 %v1752, %v1751
    %v1780 = vpack.c.b16 %v1754, %v1753
    %v1781 = vpack.c.b16 %v1756, %v1755
    %v1782 = vpack.c.b16 %v1758, %v1757
    %v1783 = vpack.c.b16 %v1760, %v1759
    %v1784 = vpack.c.b16 %v1762, %v1761
    %v1785 = vpack.c.b16 %v1764, %v1763
    %v1786 = vpack.c.b16 %v1766, %v1765
    %v1787 = vpack.c.b16 %v1768, %v1767
    %v1788 = vpack.c.b16 %v1770, %v1769
    %v1789 = vpack.c.b16 %v1772, %v1771
    %v1790 = vpack.c.b16 %v1774, %v1773
    %1807 = vmatprep.subr.bf16.mxu0 0
    %1808 = vmatpush1.bf16.msra.mxu0 %v1775
    %1809 = vmatprep.subr.bf16.mxu0 0
    %1810 = vmatpush1.bf16.msra.mxu0 %v1776
    %1811 = vmatprep.subr.bf16.mxu0 0
    %1812 = vmatpush1.bf16.msra.mxu0 %v1777
    %1813 = vmatprep.subr.bf16.mxu0 0
    %1814 = vmatpush1.bf16.msra.mxu0 %v1778
    %1815 = vmatprep.subr.bf16.mxu0 0
    %1816 = vmatpush1.bf16.msra.mxu0 %v1779
    %1817 = vmatprep.subr.bf16.mxu0 0
    %1818 = vmatpush1.bf16.msra.mxu0 %v1780
    %1819 = vmatprep.subr.bf16.mxu0 0
    %1820 = vmatpush1.bf16.msra.mxu0 %v1781
    %1821 = vmatprep.subr.bf16.mxu0 0
    %1822 = vmatpush1.bf16.msra.mxu0 %v1782
    %1823 = vmatprep.subr.bf16.mxu0 0
    %1824 = vmatpush1.bf16.msra.mxu0 %v1783
    %1825 = vmatprep.subr.bf16.mxu0 0
    %1826 = vmatpush1.bf16.msra.mxu0 %v1784
    %1827 = vmatprep.subr.bf16.mxu0 0
    %1828 = vmatpush1.bf16.msra.mxu0 %v1785
    %1829 = vmatprep.subr.bf16.mxu0 0
    %1830 = vmatpush1.bf16.msra.mxu0 %v1786
    %1831 = vmatprep.subr.bf16.mxu0 0
    %1832 = vmatpush1.bf16.msra.mxu0 %v1787
    %1833 = vmatprep.subr.bf16.mxu0 0
    %1834 = vmatpush1.bf16.msra.mxu0 %v1788
    %1835 = vmatprep.subr.bf16.mxu0 0
    %1836 = vmatpush1.bf16.msra.mxu0 %v1789
    %1837 = vmatprep.subr.bf16.mxu0 0
    %1838 = vmatpush1.bf16.msra.mxu0 %v1790
    %1839 = vmatprep.mubr.bf16.mxu0 %v1671
    %1840 = vmatmul.mubr.bf16.gmra.mrb[0].mxu0 %v1670
    %v1841 = vpop.f32.mrb[0].mxu0
    %v1842 = vadd.f32 %v1709, %v1841
    %v1843 = vpop.f32.mrb[0].mxu0
    %v1844 = vpop.f32.mrb[0].mxu0
    %v1845 = vadd.f32 %v1709, %v1844
    %v1846 = vpop.f32.mrb[0].mxu0
    %1847 = vdwg.mxu0
    %v1848 = vmax.f32 %v1842, 0.0
    %v1849 = vmax.f32 %v1845, 0.0
    %v1850 = vpack.c.bf16 %v1849, %v1848
    %v1851 = vld [vmem:[#allocation10] sm:$0xf]
    %v1852 = vld [vmem:[#allocation10 + $0x4] sm:$0xf]
    %v1853 = vld [vmem:[#allocation10 + $0x8] sm:$0xf]
    %v1854 = vld [vmem:[#allocation10 + $0xc] sm:$0xf]
    %v1855 = vld [vmem:[#allocation10 + $0x10] sm:$0xf]
    %v1856 = vld [vmem:[#allocation10 + $0x14] sm:$0xf]
    %v1857 = vld [vmem:[#allocation10 + $0x18] sm:$0xf]
    %v1858 = vld [vmem:[#allocation10 + $0x1c] sm:$0xf]
    %v1859 = vld [vmem:[#allocation10 + $0x20] sm:$0xf]
    %v1860 = vld [vmem:[#allocation10 + $0x24] sm:$0xf]
    %v1861 = vld [vmem:[#allocation10 + $0x28] sm:$0xf]
    %v1862 = vld [vmem:[#allocation10 + $0x2c] sm:$0xf]
    %v1863 = vld [vmem:[#allocation10 + $0x30] sm:$0xf]
    %v1864 = vld [vmem:[#allocation10 + $0x34] sm:$0xf]
    %v1865 = vld [vmem:[#allocation10 + $0x38] sm:$0xf]
    %v1866 = vld [vmem:[#allocation10 + $0x3c] sm:$0xf]
    %v1867 = vld [vmem:[%s10] sm:$0x1]
    %v1869 = vlaneseq
    %v1870 = vshrl.u32 %v1869, 7
    %v1871 = vsub.s32 0, %v1870
    %v1872 = vrot.slane %v1867, %v1871
    %v1890 = vunpack.c.l.b16 %v1851
    %v1891 = vunpack.c.l.b16 %v1852
    %v1892 = vunpack.c.l.b16 %v1853
    %v1893 = vunpack.c.l.b16 %v1854
    %v1894 = vunpack.c.l.b16 %v1855
    %v1895 = vunpack.c.l.b16 %v1856
    %v1896 = vunpack.c.l.b16 %v1857
    %v1897 = vunpack.c.l.b16 %v1858
    %v1898 = vunpack.c.l.b16 %v1859
    %v1899 = vunpack.c.l.b16 %v1860
    %v1900 = vunpack.c.l.b16 %v1861
    %v1901 = vunpack.c.l.b16 %v1862
    %v1902 = vunpack.c.l.b16 %v1863
    %v1903 = vunpack.c.l.b16 %v1864
    %v1904 = vunpack.c.l.b16 %v1865
    %v1905 = vunpack.c.l.b16 %v1866
    %v1906 = vpack.c.b16 %v1891, %v1890
    %v1907 = vpack.c.b16 %v1893, %v1892
    %v1908 = vpack.c.b16 %v1895, %v1894
    %v1909 = vpack.c.b16 %v1897, %v1896
    %v1910 = vpack.c.b16 %v1899, %v1898
    %v1911 = vpack.c.b16 %v1901, %v1900
    %v1912 = vpack.c.b16 %v1903, %v1902
    %v1913 = vpack.c.b16 %v1905, %v1904
    %1922 = vmatprep.subr.bf16.mxu0 0
    %1923 = vmatpush1.bf16.msra.mxu0 %v1906
    %1924 = vmatprep.subr.bf16.mxu0 0
    %1925 = vmatpush1.bf16.msra.mxu0 %v1907
    %1926 = vmatprep.subr.bf16.mxu0 0
    %1927 = vmatpush1.bf16.msra.mxu0 %v1908
    %1928 = vmatprep.subr.bf16.mxu0 0
    %1929 = vmatpush1.bf16.msra.mxu0 %v1909
    %1930 = vmatprep.subr.bf16.mxu0 0
    %1931 = vmatpush1.bf16.msra.mxu0 %v1910
    %1932 = vmatprep.subr.bf16.mxu0 0
    %1933 = vmatpush1.bf16.msra.mxu0 %v1911
    %1934 = vmatprep.subr.bf16.mxu0 0
    %1935 = vmatpush1.bf16.msra.mxu0 %v1912
    %1936 = vmatprep.subr.bf16.mxu0 0
    %1937 = vmatpush1.bf16.msra.mxu0 %v1913
    %1938 = vmatprep.subr.bf16.mxu0 0
    %1939 = vmatpush1.bf16.msra.mxu0 0
    %1940 = vmatprep.subr.bf16.mxu0 0
    %1941 = vmatpush1.bf16.msra.mxu0 0
    %1942 = vmatprep.subr.bf16.mxu0 0
    %1943 = vmatpush1.bf16.msra.mxu0 0
    %1944 = vmatprep.subr.bf16.mxu0 0
    %1945 = vmatpush1.bf16.msra.mxu0 0
    %1946 = vmatprep.subr.bf16.mxu0 0
    %1947 = vmatpush1.bf16.msra.mxu0 0
    %1948 = vmatprep.subr.bf16.mxu0 0
    %1949 = vmatpush1.bf16.msra.mxu0 0
    %1950 = vmatprep.subr.bf16.mxu0 0
    %1951 = vmatpush1.bf16.msra.mxu0 0
    %1952 = vmatprep.subr.bf16.mxu0 0
    %1953 = vmatpush1.bf16.msra.mxu0 0
    %1954 = vmatprep.mubr.bf16.mxu0 0
    %1955 = vmatmul.mubr.bf16.gmra.mrb[0].mxu0 %v1850
    %v1956 = vpop.f32.mrb[0].mxu0
    %v1957 = vadd.f32 %v1872, %v1956
    %v1958 = vpop.f32.mrb[0].mxu0
    %v1959 = vpop.f32.mrb[0].mxu0
    %v1960 = vadd.f32 %v1872, %v1959
    %v1961 = vpop.f32.mrb[0].mxu0
    %1962 = vdwg.mxu0
    %v1963 = vmax.f32 %v1957, 0.0
    %v1964 = vmax.f32 %v1960, 0.0
    %v1965 = vpack.c.bf16 %v1964, %v1963
    %v1966 = vld [vmem:[#allocation11] sm:$0xf]
    %v1967 = vld [vmem:[#allocation11 + $0x4] sm:$0xf]
    %v1968 = vld [vmem:[#allocation11 + $0x8] sm:$0xf]
    %v1969 = vld [vmem:[#allocation11 + $0xc] sm:$0xf]
    %v1970 = vld [vmem:[#allocation11 + $0x10] sm:$0xf]
    %v1971 = vld [vmem:[#allocation11 + $0x14] sm:$0xf]
    %v1972 = vld [vmem:[#allocation11 + $0x18] sm:$0xf]
    %v1973 = vld [vmem:[#allocation11 + $0x1c] sm:$0xf]
    %v1974 = vld [vmem:[#allocation11 + $0x20] sm:$0xf]
    %v1975 = vld [vmem:[#allocation11 + $0x24] sm:$0xf]
    %v1976 = vld [vmem:[#allocation11 + $0x28] sm:$0xf]
    %v1977 = vld [vmem:[#allocation11 + $0x2c] sm:$0xf]
    %v1978 = vld [vmem:[#allocation11 + $0x30] sm:$0xf]
    %v1979 = vld [vmem:[#allocation11 + $0x34] sm:$0xf]
    %v1980 = vld [vmem:[#allocation11 + $0x38] sm:$0xf]
    %v1981 = vld [vmem:[#allocation11 + $0x3c] sm:$0xf]
    %v1982 = vld [vmem:[%s12] sm:$0x1]
    %v1984 = vlaneseq
    %v1985 = vshrl.u32 %v1984, 7
    %v1986 = vsub.s32 0, %v1985
    %v1987 = vrot.slane %v1982, %v1986
    %v2005 = vunpack.c.l.b16 %v1966
    %v2006 = vunpack.c.l.b16 %v1967
    %v2007 = vunpack.c.l.b16 %v1968
    %v2008 = vunpack.c.l.b16 %v1969
    %v2009 = vunpack.c.l.b16 %v1970
    %v2010 = vunpack.c.l.b16 %v1971
    %v2011 = vunpack.c.l.b16 %v1972
    %v2012 = vunpack.c.l.b16 %v1973
    %v2013 = vunpack.c.l.b16 %v1974
    %v2014 = vunpack.c.l.b16 %v1975
    %v2015 = vunpack.c.l.b16 %v1976
    %v2016 = vunpack.c.l.b16 %v1977
    %v2017 = vunpack.c.l.b16 %v1978
    %v2018 = vunpack.c.l.b16 %v1979
    %v2019 = vunpack.c.l.b16 %v1980
    %v2020 = vunpack.c.l.b16 %v1981
    %v2021 = vpack.c.b16 %v2006, %v2005
    %v2022 = vpack.c.b16 %v2008, %v2007
    %v2023 = vpack.c.b16 %v2010, %v2009
    %v2024 = vpack.c.b16 %v2012, %v2011
    %v2025 = vpack.c.b16 %v2014, %v2013
    %v2026 = vpack.c.b16 %v2016, %v2015
    %v2027 = vpack.c.b16 %v2018, %v2017
    %v2028 = vpack.c.b16 %v2020, %v2019
    %2037 = vmatprep.subr.bf16.mxu0 0
    %2038 = vmatpush1.bf16.msra.mxu0 %v2021
    %2039 = vmatprep.subr.bf16.mxu0 0
    %2040 = vmatpush1.bf16.msra.mxu0 %v2022
    %2041 = vmatprep.subr.bf16.mxu0 0
    %2042 = vmatpush1.bf16.msra.mxu0 %v2023
    %2043 = vmatprep.subr.bf16.mxu0 0
    %2044 = vmatpush1.bf16.msra.mxu0 %v2024
    %2045 = vmatprep.subr.bf16.mxu0 0
    %2046 = vmatpush1.bf16.msra.mxu0 %v2025
    %2047 = vmatprep.subr.bf16.mxu0 0
    %2048 = vmatpush1.bf16.msra.mxu0 %v2026
    %2049 = vmatprep.subr.bf16.mxu0 0
    %2050 = vmatpush1.bf16.msra.mxu0 %v2027
    %2051 = vmatprep.subr.bf16.mxu0 0
    %2052 = vmatpush1.bf16.msra.mxu0 %v2028
    %2053 = vmatprep.subr.bf16.mxu0 0
    %2054 = vmatpush1.bf16.msra.mxu0 0
    %2055 = vmatprep.subr.bf16.mxu0 0
    %2056 = vmatpush1.bf16.msra.mxu0 0
    %2057 = vmatprep.subr.bf16.mxu0 0
    %2058 = vmatpush1.bf16.msra.mxu0 0
    %2059 = vmatprep.subr.bf16.mxu0 0
    %2060 = vmatpush1.bf16.msra.mxu0 0
    %2061 = vmatprep.subr.bf16.mxu0 0
    %2062 = vmatpush1.bf16.msra.mxu0 0
    %2063 = vmatprep.subr.bf16.mxu0 0
    %2064 = vmatpush1.bf16.msra.mxu0 0
    %2065 = vmatprep.subr.bf16.mxu0 0
    %2066 = vmatpush1.bf16.msra.mxu0 0
    %2067 = vmatprep.subr.bf16.mxu0 0
    %2068 = vmatpush1.bf16.msra.mxu0 0
    %2069 = vmatprep.mubr.bf16.mxu0 0
    %2070 = vmatmul.mubr.bf16.gmra.mrb[0].mxu0 %v1965
    %v2071 = vpop.f32.mrb[0].mxu0
    %v2072 = vadd.f32 %v1987, %v2071
    %v2073 = vpop.f32.mrb[0].mxu0
    %v2074 = vpop.f32.mrb[0].mxu0
    %v2075 = vadd.f32 %v1987, %v2074
    %v2076 = vpop.f32.mrb[0].mxu0
    %2077 = vdwg.mxu0
    %2078 = vst [vmem:[%s13] sm:$0xff] %v2072
    %2079 = vst [vmem:[%s13 + $0x8] sm:$0xff] %v2075
    // Predicated region
    $region78: #{_forward.1} parent=1 // pred_check
      _
    $region79: #{_forward.1} parent=1 // pred_check_branch
      %2081 = sbr.rel (0) target = $region81
    $region80: #{_forward.1} parent=1 // pred_region
      _
    $region81: #{_forward.1} parent=1 // pred_fallthru
      _
    // Predicated region
    $region82: #{_forward.1} parent=1 // pred_check
      _
    $region83: #{_forward.1} parent=1 // pred_check_branch
      %2083 = sbr.rel (0) target = $region85
    $region84: #{_forward.1} parent=1 // pred_region
      _
    $region85: #{_forward.1} parent=1 // pred_fallthru
      _
    %2084 = vsyncpa [#allocation4], 1
    %2085 = vsyncpa [#allocation6], 1
    %2086 = vsyncpa [#allocation9], 1
    %2087 = vsyncpa [#allocation12], 1

// kernel: _forward.1
$region0: #{_forward.1}
  #allocation0 [shape = 'u32[]', space=smem, size = 0x4, offset = 0x4, fixed_abs, tag = 'smem constant byte address 0x4 - core index']
  #allocation1 [shape = 'u32[144,128]{1,0:T(1,128)}', space=vmem, size = 0x12000, scoped, tag = 'internal scratch']
  #allocation2 [shape = 'bf16[16,128]{1,0:T(16,128)(2,1)}', space=vmem, size = 0x1000, scoped, tag = 'scratch operand']
  %s0 = inlined_call_operand.vmem [shape: f32[16,42], index: 0, kind: input, shape index: {}]
  %s1 = inlined_call_operand.hbm [shape: bf16[128,512], index: 1, kind: input, shape index: {}]
  %s2 = inlined_call_operand.vmem [shape: f32[1,512], index: 2, kind: input, shape index: {}]
  %s3 = inlined_call_operand.hbm [shape: bf16[512,384], index: 3, kind: input, shape index: {}]
  %s4 = inlined_call_operand.vmem [shape: f32[1,384], index: 4, kind: input, shape index: {}]
  %s5 = inlined_call_operand.hbm [shape: bf16[384,256], index: 5, kind: input, shape index: {}]
  %s6 = inlined_call_operand.vmem [shape: f32[1,256], index: 6, kind: input, shape index: {}]
  %s7 = inlined_call_operand.hbm [shape: bf16[256,128], index: 7, kind: input, shape index: {}]
  %s8 = inlined_call_operand.vmem [shape: f32[1,128], index: 8, kind: input, shape index: {}]
  %s9 = inlined_call_operand.hbm [shape: bf16[128,128], index: 9, kind: input, shape index: {}]
  %s10 = inlined_call_operand.vmem [shape: f32[1,128], index: 10, kind: input, shape index: {}]
  %s11 = inlined_call_operand.hbm [shape: bf16[128,128], index: 11, kind: input, shape index: {}]
  %s12 = inlined_call_operand.vmem [shape: f32[1,128], index: 12, kind: input, shape index: {}]
  %s13 = inlined_call_operand.vmem [shape: f32[16,128], index: 13, kind: output, shape index: {}]
  %s14 = sld [smem:[#allocation0]]
  $region86: #{_forward.1} parent=0
    _
  %s16 = ssub.s32 1, %s14
  %s17 = scalar_select 0, %s16, %s14
  $region1: #{_forward.1} parent=0
    #allocation3 [shape = 'u8[131072]{0}', space=vmem, size = 0x20000, scoped, tag = 'input window, operand 1, single buffered']
    #allocation4 [shape = 's32[1]{0}', space=sflag, size = 0x4, scoped, tag = 'scoped memory for _forward.1']
    #allocation5 [shape = 'u8[393216]{0}', space=vmem, size = 0x60000, scoped, tag = 'input window, operand 3, single buffered']
    #allocation6 [shape = 's32[1]{0}', space=sflag, size = 0x4, scoped, tag = 'scoped memory for _forward.1']
    #allocation7 [shape = 'u8[196608]{0}', space=vmem, size = 0x30000, scoped, tag = 'input window, operand 5, single buffered']
    #allocation8 [shape = 'u8[65536]{0}', space=vmem, size = 0x10000, scoped, tag = 'input window, operand 7, single buffered']
    #allocation9 [shape = 's32[1]{0}', space=sflag, size = 0x4, scoped, tag = 'scoped memory for _forward.1']
    #allocation10 [shape = 'u8[32768]{0}', space=vmem, size = 0x8000, scoped, tag = 'input window, operand 9, single buffered']
    #allocation11 [shape = 'u8[32768]{0}', space=vmem, size = 0x8000, scoped, tag = 'input window, operand 11, single buffered']
    #allocation12 [shape = 's32[1]{0}', space=sflag, size = 0x4, scoped, tag = 'scoped memory for _forward.1']
    %18 = vsyncpa [#allocation4], 0
    %19 = vsyncpa [#allocation6], 0
    %20 = vsyncpa [#allocation9], 0
    %21 = vsyncpa [#allocation12], 0
    // Predicated region
    $region2: #{_forward.1} parent=1 // pred_check
      _
    $region3: #{_forward.1} parent=1 // pred_check_branch
      %23 = sbr.rel (0) target = $region5
    $region4: #{_forward.1} parent=1 // pred_region
      _
    $region5: #{_forward.1} parent=1 // pred_fallthru
      _
    // Predicated region
    $region6: #{_forward.1} parent=1 // pred_check
      _
    $region7: #{_forward.1} parent=1 // pred_check_branch
      %25 = sbr.rel (0) target = $region9
    $region8: #{_forward.1} parent=1 // pred_region
      %s27 = ssub.s32 4096, 4096
      %28 = vsyncadd [#allocation4], %s27
      %s29 = sshll.u32 [#allocation3], 4
      %s30 = int_to_ptr.vmem [resolvable:$true] %s29
      %35 = dma.hbm_to_vmem [thread:$0]  %s1, 4096, %s30, [#allocation4], 256, 256, 16
    $region9: #{_forward.1} parent=1 // pred_fallthru
      _
    // Predicated region
    $region10: #{_forward.1} parent=1 // pred_check
      _
    $region11: #{_forward.1} parent=1 // pred_check_branch
      %37 = sbr.rel (0) target = $region13
    $region12: #{_forward.1} parent=1 // pred_region
      _
    $region13: #{_forward.1} parent=1 // pred_fallthru
      _
    // Predicated region
    $region14: #{_forward.1} parent=1 // pred_check
      _
    $region15: #{_forward.1} parent=1 // pred_check_branch
      %39 = sbr.rel (0) target = $region17
    $region16: #{_forward.1} parent=1 // pred_region
      %s41 = ssub.s32 12288, 12288
      %42 = vsyncadd [#allocation6], %s41
      %s43 = sshll.u32 [#allocation5], 4
      %s44 = int_to_ptr.vmem [resolvable:$true] %s43
      %49 = dma.hbm_to_vmem [thread:$0]  %s3, 12288, %s44, [#allocation6], 192, 192, 12
    $region17: #{_forward.1} parent=1 // pred_fallthru
      _
    // Predicated region
    $region18: #{_forward.1} parent=1 // pred_check
      _
    $region19: #{_forward.1} parent=1 // pred_check_branch
      %51 = sbr.rel (0) target = $region21
    $region20: #{_forward.1} parent=1 // pred_region
      _
    $region21: #{_forward.1} parent=1 // pred_fallthru
      _
    // Predicated region
    $region22: #{_forward.1} parent=1 // pred_check
      _
    $region23: #{_forward.1} parent=1 // pred_check_branch
      %53 = sbr.rel (0) target = $region25
    $region24: #{_forward.1} parent=1 // pred_region
      %s55 = ssub.s32 6144, 6144
      %56 = vsyncadd [#allocation6], %s55
      %s57 = sshll.u32 [#allocation7], 4
      %s58 = int_to_ptr.vmem [resolvable:$true] %s57
      %63 = dma.hbm_to_vmem [thread:$0]  %s5, 6144, %s58, [#allocation6], 128, 128, 8
    $region25: #{_forward.1} parent=1 // pred_fallthru
      _
    // Predicated region
    $region26: #{_forward.1} parent=1 // pred_check
      _
    $region27: #{_forward.1} parent=1 // pred_check_branch
      %65 = sbr.rel (0) target = $region29
    $region28: #{_forward.1} parent=1 // pred_region
      _
    $region29: #{_forward.1} parent=1 // pred_fallthru
      _
    // Predicated region
    $region30: #{_forward.1} parent=1 // pred_check
      _
    $region31: #{_forward.1} parent=1 // pred_check_branch
      %67 = sbr.rel (0) target = $region33
    $region32: #{_forward.1} parent=1 // pred_region
      %s69 = ssub.s32 2048, 2048
      %70 = vsyncadd [#allocation9], %s69
      %s71 = sshll.u32 [#allocation8], 4
      %s72 = int_to_ptr.vmem [resolvable:$true] %s71
      %77 = dma.hbm_to_vmem [thread:$0]  %s7, 2048, %s72, [#allocation9], 64, 64, 4
    $region33: #{_forward.1} parent=1 // pred_fallthru
      _
    // Predicated region
    $region34: #{_forward.1} parent=1 // pred_check
      _
    $region35: #{_forward.1} parent=1 // pred_check_branch
      %79 = sbr.rel (0) target = $region37
    $region36: #{_forward.1} parent=1 // pred_region
      _
    $region37: #{_forward.1} parent=1 // pred_fallthru
      _
    // Predicated region
    $region38: #{_forward.1} parent=1 // pred_check
      _
    $region39: #{_forward.1} parent=1 // pred_check_branch
      %81 = sbr.rel (0) target = $region41
    $region40: #{_forward.1} parent=1 // pred_region
      %s83 = ssub.s32 1024, 1024
      %84 = vsyncadd [#allocation9], %s83
      %s85 = sshll.u32 [#allocation10], 4
      %s86 = int_to_ptr.vmem [resolvable:$true] %s85
      %91 = dma.hbm_to_vmem [thread:$0]  %s9, 1024, %s86, [#allocation9], 64, 64, 4
    $region41: #{_forward.1} parent=1 // pred_fallthru
      _
    // Predicated region
    $region42: #{_forward.1} parent=1 // pred_check
      _
    $region43: #{_forward.1} parent=1 // pred_check_branch
      %93 = sbr.rel (0) target = $region45
    $region44: #{_forward.1} parent=1 // pred_region
      _
    $region45: #{_forward.1} parent=1 // pred_fallthru
      _
    // Predicated region
    $region46: #{_forward.1} parent=1 // pred_check
      _
    $region47: #{_forward.1} parent=1 // pred_check_branch
      %95 = sbr.rel (0) target = $region49
    $region48: #{_forward.1} parent=1 // pred_region
      %s97 = ssub.s32 1024, 1024
      %98 = vsyncadd [#allocation12], %s97
      %s99 = sshll.u32 [#allocation11], 4
      %s100 = int_to_ptr.vmem [resolvable:$true] %s99
      %105 = dma.hbm_to_vmem [thread:$0]  %s11, 1024, %s100, [#allocation12], 64, 64, 4
    $region49: #{_forward.1} parent=1 // pred_fallthru
      _
    // Predicated region
    $region50: #{_forward.1} parent=1 // pred_check
      _
    $region51: #{_forward.1} parent=1 // pred_check_branch
      %107 = sbr.rel (0) target = $region53
    $region52: #{_forward.1} parent=1 // pred_region
      _
    $region53: #{_forward.1} parent=1 // pred_fallthru
      _
    // Predicated region
    $region54: #{_forward.1} parent=1 // pred_check
      _
    $region55: #{_forward.1} parent=1 // pred_check_branch
      %109 = sbr.rel (0) target = $region57
    $region56: #{_forward.1} parent=1 // pred_region
      %110 = dma.done [#allocation4], 4096
    $region57: #{_forward.1} parent=1 // pred_fallthru
      _
    // Predicated region
    $region58: #{_forward.1} parent=1 // pred_check
      _
    $region59: #{_forward.1} parent=1 // pred_check_branch
      %112 = sbr.rel (0) target = $region61
    $region60: #{_forward.1} parent=1 // pred_region
      %113 = dma.done [#allocation6], 12288
    $region61: #{_forward.1} parent=1 // pred_fallthru
      _
    // Predicated region
    $region62: #{_forward.1} parent=1 // pred_check
      _
    $region63: #{_forward.1} parent=1 // pred_check_branch
      %115 = sbr.rel (0) target = $region65
    $region64: #{_forward.1} parent=1 // pred_region
      %116 = dma.done [#allocation6], 6144
    $region65: #{_forward.1} parent=1 // pred_fallthru
      _
    // Predicated region
    $region66: #{_forward.1} parent=1 // pred_check
      _
    $region67: #{_forward.1} parent=1 // pred_check_branch
      %118 = sbr.rel (0) target = $region69
    $region68: #{_forward.1} parent=1 // pred_region
      %119 = dma.done [#allocation9], 2048
    $region69: #{_forward.1} parent=1 // pred_fallthru
      _
    // Predicated region
    $region70: #{_forward.1} parent=1 // pred_check
      _
    $region71: #{_forward.1} parent=1 // pred_check_branch
      %121 = sbr.rel (0) target = $region73
    $region72: #{_forward.1} parent=1 // pred_region
      %122 = dma.done [#allocation9], 1024
    $region73: #{_forward.1} parent=1 // pred_fallthru
      _
    // Predicated region
    $region74: #{_forward.1} parent=1 // pred_check
      _
    $region75: #{_forward.1} parent=1 // pred_check_branch
      %124 = sbr.rel (0) target = $region77
    $region76: #{_forward.1} parent=1 // pred_region
      %125 = dma.done [#allocation12], 1024
    $region77: #{_forward.1} parent=1 // pred_fallthru
      _
    %127 = vst [vmem:[#allocation2] sm:$0xff] 0
    %v128 = vld [vmem:[%s0] sm:$0xff]
    %v129 = vld [vmem:[%s0 + $0x8] sm:$0xff]
    %v130 = vpack.c.bf16 %v129, %v128
    %vm131 = vcmask 343040
    %132 = vst.msk [vmem:[#allocation2] sm:$0xff] %vm131, %v130
    %v133 = vld [vmem:[#allocation2] sm:$0xff]
    %v134 = vld [vmem:[#allocation3] sm:$0xff]
    %v135 = vld [vmem:[#allocation3 + $0x8] sm:$0xff]
    %v136 = vld [vmem:[#allocation3 + $0x10] sm:$0xff]
    %v137 = vld [vmem:[#allocation3 + $0x18] sm:$0xff]
    %v138 = vld [vmem:[#allocation3 + $0x20] sm:$0xff]
    %v139 = vld [vmem:[#allocation3 + $0x28] sm:$0xff]
    %v140 = vld [vmem:[#allocation3 + $0x30] sm:$0xff]
    %v141 = vld [vmem:[#allocation3 + $0x38] sm:$0xff]
    %v142 = vld [vmem:[#allocation3 + $0x40] sm:$0xff]
    %v143 = vld [vmem:[#allocation3 + $0x48] sm:$0xff]
    %v144 = vld [vmem:[#allocation3 + $0x50] sm:$0xff]
    %v145 = vld [vmem:[#allocation3 + $0x58] sm:$0xff]
    %v146 = vld [vmem:[#allocation3 + $0x60] sm:$0xff]
    %v147 = vld [vmem:[#allocation3 + $0x68] sm:$0xff]
    %v148 = vld [vmem:[#allocation3 + $0x70] sm:$0xff]
    %v149 = vld [vmem:[#allocation3 + $0x78] sm:$0xff]
    %v150 = vld [vmem:[#allocation3 + $0x80] sm:$0xff]
    %v151 = vld [vmem:[#allocation3 + $0x88] sm:$0xff]
    %v152 = vld [vmem:[#allocation3 + $0x90] sm:$0xff]
    %v153 = vld [vmem:[#allocation3 + $0x98] sm:$0xff]
    %v154 = vld [vmem:[#allocation3 + $0xa0] sm:$0xff]
    %v155 = vld [vmem:[#allocation3 + $0xa8] sm:$0xff]
    %v156 = vld [vmem:[#allocation3 + $0xb0] sm:$0xff]
    %v157 = vld [vmem:[#allocation3 + $0xb8] sm:$0xff]
    %v158 = vld [vmem:[#allocation3 + $0xc0] sm:$0xff]
    %v159 = vld [vmem:[#allocation3 + $0xc8] sm:$0xff]
    %v160 = vld [vmem:[#allocation3 + $0xd0] sm:$0xff]
    %v161 = vld [vmem:[#allocation3 + $0xd8] sm:$0xff]
    %v162 = vld [vmem:[#allocation3 + $0xe0] sm:$0xff]
    %v163 = vld [vmem:[#allocation3 + $0xe8] sm:$0xff]
    %v164 = vld [vmem:[#allocation3 + $0xf0] sm:$0xff]
    %v165 = vld [vmem:[#allocation3 + $0xf8] sm:$0xff]
    %v166 = vld [vmem:[%s2] sm:$0xf]
    %v168 = vlaneseq
    %v169 = vshrl.u32 %v168, 7
    %v170 = vsub.s32 0, %v169
    %v171 = vrot.slane %v166, %v170
    %v172 = vlaneseq
    %v173 = vshrl.u32 %v172, 7
    %v174 = vsub.s32 1, %v173
    %v175 = vrot.slane %v166, %v174
    %v176 = vlaneseq
    %v177 = vshrl.u32 %v176, 7
    %v178 = vsub.s32 2, %v177
    %v179 = vrot.slane %v166, %v178
    %v180 = vlaneseq
    %v181 = vshrl.u32 %v180, 7
    %v182 = vsub.s32 3, %v181
    %v183 = vrot.slane %v166, %v182
    %v220 = vunpack.c.l.b16 %v134
    %v221 = vunpack.c.h.b16 %v134
    %v222 = vunpack.c.l.b16 %v135
    %v223 = vunpack.c.h.b16 %v135
    %v224 = vunpack.c.l.b16 %v136
    %v225 = vunpack.c.h.b16 %v136
    %v226 = vunpack.c.l.b16 %v137
    %v227 = vunpack.c.h.b16 %v137
    %v228 = vunpack.c.l.b16 %v138
    %v229 = vunpack.c.h.b16 %v138
    %v230 = vunpack.c.l.b16 %v139
    %v231 = vunpack.c.h.b16 %v139
    %v232 = vunpack.c.l.b16 %v140
    %v233 = vunpack.c.h.b16 %v140
    %v234 = vunpack.c.l.b16 %v141
    %v235 = vunpack.c.h.b16 %v141
    %v236 = vunpack.c.l.b16 %v142
    %v237 = vunpack.c.h.b16 %v142
    %v238 = vunpack.c.l.b16 %v143
    %v239 = vunpack.c.h.b16 %v143
    %v240 = vunpack.c.l.b16 %v144
    %v241 = vunpack.c.h.b16 %v144
    %v242 = vunpack.c.l.b16 %v145
    %v243 = vunpack.c.h.b16 %v145
    %v244 = vunpack.c.l.b16 %v146
    %v245 = vunpack.c.h.b16 %v146
    %v246 = vunpack.c.l.b16 %v147
    %v247 = vunpack.c.h.b16 %v147
    %v248 = vunpack.c.l.b16 %v148
    %v249 = vunpack.c.h.b16 %v148
    %v250 = vunpack.c.l.b16 %v149
    %v251 = vunpack.c.h.b16 %v149
    %v252 = vunpack.c.l.b16 %v150
    %v253 = vunpack.c.h.b16 %v150
    %v254 = vunpack.c.l.b16 %v151
    %v255 = vunpack.c.h.b16 %v151
    %v256 = vunpack.c.l.b16 %v152
    %v257 = vunpack.c.h.b16 %v152
    %v258 = vunpack.c.l.b16 %v153
    %v259 = vunpack.c.h.b16 %v153
    %v260 = vunpack.c.l.b16 %v154
    %v261 = vunpack.c.h.b16 %v154
    %v262 = vunpack.c.l.b16 %v155
    %v263 = vunpack.c.h.b16 %v155
    %v264 = vunpack.c.l.b16 %v156
    %v265 = vunpack.c.h.b16 %v156
    %v266 = vunpack.c.l.b16 %v157
    %v267 = vunpack.c.h.b16 %v157
    %v268 = vunpack.c.l.b16 %v158
    %v269 = vunpack.c.h.b16 %v158
    %v270 = vunpack.c.l.b16 %v159
    %v271 = vunpack.c.h.b16 %v159
    %v272 = vunpack.c.l.b16 %v160
    %v273 = vunpack.c.h.b16 %v160
    %v274 = vunpack.c.l.b16 %v161
    %v275 = vunpack.c.h.b16 %v161
    %v276 = vunpack.c.l.b16 %v162
    %v277 = vunpack.c.h.b16 %v162
    %v278 = vunpack.c.l.b16 %v163
    %v279 = vunpack.c.h.b16 %v163
    %v280 = vunpack.c.l.b16 %v164
    %v281 = vunpack.c.h.b16 %v164
    %v282 = vunpack.c.l.b16 %v165
    %v283 = vunpack.c.h.b16 %v165
    %v284 = vpack.c.b16 %v224, %v220
    %v285 = vpack.c.b16 %v225, %v221
    %v286 = vpack.c.b16 %v226, %v222
    %v287 = vpack.c.b16 %v227, %v223
    %v288 = vpack.c.b16 %v232, %v228
    %v289 = vpack.c.b16 %v233, %v229
    %v290 = vpack.c.b16 %v234, %v230
    %v291 = vpack.c.b16 %v235, %v231
    %v292 = vpack.c.b16 %v240, %v236
    %v293 = vpack.c.b16 %v241, %v237
    %v294 = vpack.c.b16 %v242, %v238
    %v295 = vpack.c.b16 %v243, %v239
    %v296 = vpack.c.b16 %v248, %v244
    %v297 = vpack.c.b16 %v249, %v245
    %v298 = vpack.c.b16 %v250, %v246
    %v299 = vpack.c.b16 %v251, %v247
    %v300 = vpack.c.b16 %v256, %v252
    %v301 = vpack.c.b16 %v257, %v253
    %v302 = vpack.c.b16 %v258, %v254
    %v303 = vpack.c.b16 %v259, %v255
    %v304 = vpack.c.b16 %v264, %v260
    %v305 = vpack.c.b16 %v265, %v261
    %v306 = vpack.c.b16 %v266, %v262
    %v307 = vpack.c.b16 %v267, %v263
    %v308 = vpack.c.b16 %v272, %v268
    %v309 = vpack.c.b16 %v273, %v269
    %v310 = vpack.c.b16 %v274, %v270
    %v311 = vpack.c.b16 %v275, %v271
    %v312 = vpack.c.b16 %v280, %v276
    %v313 = vpack.c.b16 %v281, %v277
    %v314 = vpack.c.b16 %v282, %v278
    %v315 = vpack.c.b16 %v283, %v279
    %348 = vmatprep.subr.bf16.mxu0 %v285
    %349 = vmatpush1.bf16.msra.mxu0 %v284
    %350 = vmatprep.subr.bf16.mxu0 %v289
    %351 = vmatpush1.bf16.msra.mxu0 %v288
    %352 = vmatprep.subr.bf16.mxu0 %v293
    %353 = vmatpush1.bf16.msra.mxu0 %v292
    %354 = vmatprep.subr.bf16.mxu0 %v297
    %355 = vmatpush1.bf16.msra.mxu0 %v296
    %356 = vmatprep.subr.bf16.mxu0 %v301
    %357 = vmatpush1.bf16.msra.mxu0 %v300
    %358 = vmatprep.subr.bf16.mxu0 %v305
    %359 = vmatpush1.bf16.msra.mxu0 %v304
    %360 = vmatprep.subr.bf16.mxu0 %v309
    %361 = vmatpush1.bf16.msra.mxu0 %v308
    %362 = vmatprep.subr.bf16.mxu0 %v313
    %363 = vmatpush1.bf16.msra.mxu0 %v312
    %364 = vmatprep.subr.bf16.mxu0 0
    %365 = vmatpush1.bf16.msra.mxu0 0
    %366 = vmatprep.subr.bf16.mxu0 0
    %367 = vmatpush1.bf16.msra.mxu0 0
    %368 = vmatprep.subr.bf16.mxu0 0
    %369 = vmatpush1.bf16.msra.mxu0 0
    %370 = vmatprep.subr.bf16.mxu0 0
    %371 = vmatpush1.bf16.msra.mxu0 0
    %372 = vmatprep.subr.bf16.mxu0 0
    %373 = vmatpush1.bf16.msra.mxu0 0
    %374 = vmatprep.subr.bf16.mxu0 0
    %375 = vmatpush1.bf16.msra.mxu0 0
    %376 = vmatprep.subr.bf16.mxu0 0
    %377 = vmatpush1.bf16.msra.mxu0 0
    %378 = vmatprep.subr.bf16.mxu0 0
    %379 = vmatpush1.bf16.msra.mxu0 0
    %380 = vmatprep.mubr.bf16.mxu0 0
    %381 = vmatmul.mubr.bf16.gmra.mrb[0].mxu0 %v133
    %v382 = vpop.f32.mrb[0].mxu0
    %v383 = vadd.f32 %v171, %v382
    %v384 = vpop.f32.mrb[0].mxu0
    %v385 = vadd.f32 %v175, %v384
    %v386 = vpop.f32.mrb[0].mxu0
    %v387 = vadd.f32 %v171, %v386
    %v388 = vpop.f32.mrb[0].mxu0
    %v389 = vadd.f32 %v175, %v388
    %390 = vdwg.mxu0
    %391 = vmatprep.subr.bf16.mxu0 %v287
    %392 = vmatpush1.bf16.msra.mxu0 %v286
    %393 = vmatprep.subr.bf16.mxu0 %v291
    %394 = vmatpush1.bf16.msra.mxu0 %v290
    %395 = vmatprep.subr.bf16.mxu0 %v295
    %396 = vmatpush1.bf16.msra.mxu0 %v294
    %397 = vmatprep.subr.bf16.mxu0 %v299
    %398 = vmatpush1.bf16.msra.mxu0 %v298
    %399 = vmatprep.subr.bf16.mxu0 %v303
    %400 = vmatpush1.bf16.msra.mxu0 %v302
    %401 = vmatprep.subr.bf16.mxu0 %v307
    %402 = vmatpush1.bf16.msra.mxu0 %v306
    %403 = vmatprep.subr.bf16.mxu0 %v311
    %404 = vmatpush1.bf16.msra.mxu0 %v310
    %405 = vmatprep.subr.bf16.mxu0 %v315
    %406 = vmatpush1.bf16.msra.mxu0 %v314
    %407 = vmatprep.subr.bf16.mxu0 0
    %408 = vmatpush1.bf16.msra.mxu0 0
    %409 = vmatprep.subr.bf16.mxu0 0
    %410 = vmatpush1.bf16.msra.mxu0 0
    %411 = vmatprep.subr.bf16.mxu0 0
    %412 = vmatpush1.bf16.msra.mxu0 0
    %413 = vmatprep.subr.bf16.mxu0 0
    %414 = vmatpush1.bf16.msra.mxu0 0
    %415 = vmatprep.subr.bf16.mxu0 0
    %416 = vmatpush1.bf16.msra.mxu0 0
    %417 = vmatprep.subr.bf16.mxu0 0
    %418 = vmatpush1.bf16.msra.mxu0 0
    %419 = vmatprep.subr.bf16.mxu0 0
    %420 = vmatpush1.bf16.msra.mxu0 0
    %421 = vmatprep.subr.bf16.mxu0 0
    %422 = vmatpush1.bf16.msra.mxu0 0
    %423 = vmatprep.mubr.bf16.mxu0 0
    %424 = vmatmul.mubr.bf16.gmra.mrb[0].mxu0 %v133
    %v425 = vpop.f32.mrb[0].mxu0
    %v426 = vadd.f32 %v179, %v425
    %v427 = vpop.f32.mrb[0].mxu0
    %v428 = vadd.f32 %v183, %v427
    %v429 = vpop.f32.mrb[0].mxu0
    %v430 = vadd.f32 %v179, %v429
    %v431 = vpop.f32.mrb[0].mxu0
    %v432 = vadd.f32 %v183, %v431
    %433 = vdwg.mxu0
    %v434 = vmax.f32 %v383, 0.0
    %v435 = vmax.f32 %v385, 0.0
    %v436 = vmax.f32 %v426, 0.0
    %v437 = vmax.f32 %v428, 0.0
    %v438 = vmax.f32 %v387, 0.0
    %v439 = vmax.f32 %v389, 0.0
    %v440 = vmax.f32 %v430, 0.0
    %v441 = vmax.f32 %v432, 0.0
    %v442 = vpack.c.bf16 %v438, %v434
    %v443 = vpack.c.bf16 %v439, %v435
    %v444 = vpack.c.bf16 %v440, %v436
    %v445 = vpack.c.bf16 %v441, %v437
    %v446 = vld [vmem:[#allocation5] sm:$0xff]
    %v447 = vld [vmem:[#allocation5 + $0x8] sm:$0xf]
    %v448 = vld [vmem:[#allocation5 + $0xc] sm:$0xff]
    %v449 = vld [vmem:[#allocation5 + $0x14] sm:$0xf]
    %v450 = vld [vmem:[#allocation5 + $0x18] sm:$0xff]
    %v451 = vld [vmem:[#allocation5 + $0x20] sm:$0xf]
    %v452 = vld [vmem:[#allocation5 + $0x24] sm:$0xff]
    %v453 = vld [vmem:[#allocation5 + $0x2c] sm:$0xf]
    %v454 = vld [vmem:[#allocation5 + $0x30] sm:$0xff]
    %v455 = vld [vmem:[#allocation5 + $0x38] sm:$0xf]
    %v456 = vld [vmem:[#allocation5 + $0x3c] sm:$0xff]
    %v457 = vld [vmem:[#allocation5 + $0x44] sm:$0xf]
    %v458 = vld [vmem:[#allocation5 + $0x48] sm:$0xff]
    %v459 = vld [vmem:[#allocation5 + $0x50] sm:$0xf]
    %v460 = vld [vmem:[#allocation5 + $0x54] sm:$0xff]
    %v461 = vld [vmem:[#allocation5 + $0x5c] sm:$0xf]
    %v462 = vld [vmem:[#allocation5 + $0x60] sm:$0xff]
    %v463 = vld [vmem:[#allocation5 + $0x68] sm:$0xf]
    %v464 = vld [vmem:[#allocation5 + $0x6c] sm:$0xff]
    %v465 = vld [vmem:[#allocation5 + $0x74] sm:$0xf]
    %v466 = vld [vmem:[#allocation5 + $0x78] sm:$0xff]
    %v467 = vld [vmem:[#allocation5 + $0x80] sm:$0xf]
    %v468 = vld [vmem:[#allocation5 + $0x84] sm:$0xff]
    %v469 = vld [vmem:[#allocation5 + $0x8c] sm:$0xf]
    %v470 = vld [vmem:[#allocation5 + $0x90] sm:$0xff]
    %v471 = vld [vmem:[#allocation5 + $0x98] sm:$0xf]
    %v472 = vld [vmem:[#allocation5 + $0x9c] sm:$0xff]
    %v473 = vld [vmem:[#allocation5 + $0xa4] sm:$0xf]
    %v474 = vld [vmem:[#allocation5 + $0xa8] sm:$0xff]
    %v475 = vld [vmem:[#allocation5 + $0xb0] sm:$0xf]
    %v476 = vld [vmem:[#allocation5 + $0xb4] sm:$0xff]
    %v477 = vld [vmem:[#allocation5 + $0xbc] sm:$0xf]
    %v478 = vld [vmem:[#allocation5 + $0xc0] sm:$0xff]
    %v479 = vld [vmem:[#allocation5 + $0xc8] sm:$0xf]
    %v480 = vld [vmem:[#allocation5 + $0xcc] sm:$0xff]
    %v481 = vld [vmem:[#allocation5 + $0xd4] sm:$0xf]
    %v482 = vld [vmem:[#allocation5 + $0xd8] sm:$0xff]
    %v483 = vld [vmem:[#allocation5 + $0xe0] sm:$0xf]
    %v484 = vld [vmem:[#allocation5 + $0xe4] sm:$0xff]
    %v485 = vld [vmem:[#allocation5 + $0xec] sm:$0xf]
    %v486 = vld [vmem:[#allocation5 + $0xf0] sm:$0xff]
    %v487 = vld [vmem:[#allocation5 + $0xf8] sm:$0xf]
    %v488 = vld [vmem:[#allocation5 + $0xfc] sm:$0xff]
    %v489 = vld [vmem:[#allocation5 + $0x104] sm:$0xf]
    %v490 = vld [vmem:[#allocation5 + $0x108] sm:$0xff]
    %v491 = vld [vmem:[#allocation5 + $0x110] sm:$0xf]
    %v492 = vld [vmem:[#allocation5 + $0x114] sm:$0xff]
    %v493 = vld [vmem:[#allocation5 + $0x11c] sm:$0xf]
    %v494 = vld [vmem:[#allocation5 + $0x120] sm:$0xff]
    %v495 = vld [vmem:[#allocation5 + $0x128] sm:$0xf]
    %v496 = vld [vmem:[#allocation5 + $0x12c] sm:$0xff]
    %v497 = vld [vmem:[#allocation5 + $0x134] sm:$0xf]
    %v498 = vld [vmem:[#allocation5 + $0x138] sm:$0xff]
    %v499 = vld [vmem:[#allocation5 + $0x140] sm:$0xf]
    %v500 = vld [vmem:[#allocation5 + $0x144] sm:$0xff]
    %v501 = vld [vmem:[#allocation5 + $0x14c] sm:$0xf]
    %v502 = vld [vmem:[#allocation5 + $0x150] sm:$0xff]
    %v503 = vld [vmem:[#allocation5 + $0x158] sm:$0xf]
    %v504 = vld [vmem:[#allocation5 + $0x15c] sm:$0xff]
    %v505 = vld [vmem:[#allocation5 + $0x164] sm:$0xf]
    %v506 = vld [vmem:[#allocation5 + $0x168] sm:$0xff]
    %v507 = vld [vmem:[#allocation5 + $0x170] sm:$0xf]
    %v508 = vld [vmem:[#allocation5 + $0x174] sm:$0xff]
    %v509 = vld [vmem:[#allocation5 + $0x17c] sm:$0xf]
    %v510 = vld [vmem:[#allocation5 + $0x180] sm:$0xff]
    %v511 = vld [vmem:[#allocation5 + $0x188] sm:$0xf]
    %v512 = vld [vmem:[#allocation5 + $0x18c] sm:$0xff]
    %v513 = vld [vmem:[#allocation5 + $0x194] sm:$0xf]
    %v514 = vld [vmem:[#allocation5 + $0x198] sm:$0xff]
    %v515 = vld [vmem:[#allocation5 + $0x1a0] sm:$0xf]
    %v516 = vld [vmem:[#allocation5 + $0x1a4] sm:$0xff]
    %v517 = vld [vmem:[#allocation5 + $0x1ac] sm:$0xf]
    %v518 = vld [vmem:[#allocation5 + $0x1b0] sm:$0xff]
    %v519 = vld [vmem:[#allocation5 + $0x1b8] sm:$0xf]
    %v520 = vld [vmem:[#allocation5 + $0x1bc] sm:$0xff]
    %v521 = vld [vmem:[#allocation5 + $0x1c4] sm:$0xf]
    %v522 = vld [vmem:[#allocation5 + $0x1c8] sm:$0xff]
    %v523 = vld [vmem:[#allocation5 + $0x1d0] sm:$0xf]
    %v524 = vld [vmem:[#allocation5 + $0x1d4] sm:$0xff]
    %v525 = vld [vmem:[#allocation5 + $0x1dc] sm:$0xf]
    %v526 = vld [vmem:[#allocation5 + $0x1e0] sm:$0xff]
    %v527 = vld [vmem:[#allocation5 + $0x1e8] sm:$0xf]
    %v528 = vld [vmem:[#allocation5 + $0x1ec] sm:$0xff]
    %v529 = vld [vmem:[#allocation5 + $0x1f4] sm:$0xf]
    %v530 = vld [vmem:[#allocation5 + $0x1f8] sm:$0xff]
    %v531 = vld [vmem:[#allocation5 + $0x200] sm:$0xf]
    %v532 = vld [vmem:[#allocation5 + $0x204] sm:$0xff]
    %v533 = vld [vmem:[#allocation5 + $0x20c] sm:$0xf]
    %v534 = vld [vmem:[#allocation5 + $0x210] sm:$0xff]
    %v535 = vld [vmem:[#allocation5 + $0x218] sm:$0xf]
    %v536 = vld [vmem:[#allocation5 + $0x21c] sm:$0xff]
    %v537 = vld [vmem:[#allocation5 + $0x224] sm:$0xf]
    %v538 = vld [vmem:[#allocation5 + $0x228] sm:$0xff]
    %v539 = vld [vmem:[#allocation5 + $0x230] sm:$0xf]
    %v540 = vld [vmem:[#allocation5 + $0x234] sm:$0xff]
    %v541 = vld [vmem:[#allocation5 + $0x23c] sm:$0xf]
    %v542 = vld [vmem:[#allocation5 + $0x240] sm:$0xff]
    %v543 = vld [vmem:[#allocation5 + $0x248] sm:$0xf]
    %v544 = vld [vmem:[#allocation5 + $0x24c] sm:$0xff]
    %v545 = vld [vmem:[#allocation5 + $0x254] sm:$0xf]
    %v546 = vld [vmem:[#allocation5 + $0x258] sm:$0xff]
    %v547 = vld [vmem:[#allocation5 + $0x260] sm:$0xf]
    %v548 = vld [vmem:[#allocation5 + $0x264] sm:$0xff]
    %v549 = vld [vmem:[#allocation5 + $0x26c] sm:$0xf]
    %v550 = vld [vmem:[#allocation5 + $0x270] sm:$0xff]
    %v551 = vld [vmem:[#allocation5 + $0x278] sm:$0xf]
    %v552 = vld [vmem:[#allocation5 + $0x27c] sm:$0xff]
    %v553 = vld [vmem:[#allocation5 + $0x284] sm:$0xf]
    %v554 = vld [vmem:[#allocation5 + $0x288] sm:$0xff]
    %v555 = vld [vmem:[#allocation5 + $0x290] sm:$0xf]
    %v556 = vld [vmem:[#allocation5 + $0x294] sm:$0xff]
    %v557 = vld [vmem:[#allocation5 + $0x29c] sm:$0xf]
    %v558 = vld [vmem:[#allocation5 + $0x2a0] sm:$0xff]
    %v559 = vld [vmem:[#allocation5 + $0x2a8] sm:$0xf]
    %v560 = vld [vmem:[#allocation5 + $0x2ac] sm:$0xff]
    %v561 = vld [vmem:[#allocation5 + $0x2b4] sm:$0xf]
    %v562 = vld [vmem:[#allocation5 + $0x2b8] sm:$0xff]
    %v563 = vld [vmem:[#allocation5 + $0x2c0] sm:$0xf]
    %v564 = vld [vmem:[#allocation5 + $0x2c4] sm:$0xff]
    %v565 = vld [vmem:[#allocation5 + $0x2cc] sm:$0xf]
    %v566 = vld [vmem:[#allocation5 + $0x2d0] sm:$0xff]
    %v567 = vld [vmem:[#allocation5 + $0x2d8] sm:$0xf]
    %v568 = vld [vmem:[#allocation5 + $0x2dc] sm:$0xff]
    %v569 = vld [vmem:[#allocation5 + $0x2e4] sm:$0xf]
    %v570 = vld [vmem:[#allocation5 + $0x2e8] sm:$0xff]
    %v571 = vld [vmem:[#allocation5 + $0x2f0] sm:$0xf]
    %v572 = vld [vmem:[#allocation5 + $0x2f4] sm:$0xff]
    %v573 = vld [vmem:[#allocation5 + $0x2fc] sm:$0xf]
    %v574 = vld [vmem:[%s4] sm:$0x7]
    %v576 = vlaneseq
    %v577 = vshrl.u32 %v576, 7
    %v578 = vsub.s32 0, %v577
    %v579 = vrot.slane %v574, %v578
    %v580 = vlaneseq
    %v581 = vshrl.u32 %v580, 7
    %v582 = vsub.s32 1, %v581
    %v583 = vrot.slane %v574, %v582
    %v584 = vlaneseq
    %v585 = vshrl.u32 %v584, 7
    %v586 = vsub.s32 2, %v585
    %v587 = vrot.slane %v574, %v586
    %v719 = vunpack.c.l.b16 %v446
    %v720 = vunpack.c.h.b16 %v446
    %v721 = vunpack.c.l.b16 %v447
    %v722 = vunpack.c.l.b16 %v448
    %v723 = vunpack.c.h.b16 %v448
    %v724 = vunpack.c.l.b16 %v449
    %v725 = vunpack.c.l.b16 %v450
    %v726 = vunpack.c.h.b16 %v450
    %v727 = vunpack.c.l.b16 %v451
    %v728 = vunpack.c.l.b16 %v452
    %v729 = vunpack.c.h.b16 %v452
    %v730 = vunpack.c.l.b16 %v453
    %v731 = vunpack.c.l.b16 %v454
    %v732 = vunpack.c.h.b16 %v454
    %v733 = vunpack.c.l.b16 %v455
    %v734 = vunpack.c.l.b16 %v456
    %v735 = vunpack.c.h.b16 %v456
    %v736 = vunpack.c.l.b16 %v457
    %v737 = vunpack.c.l.b16 %v458
    %v738 = vunpack.c.h.b16 %v458
    %v739 = vunpack.c.l.b16 %v459
    %v740 = vunpack.c.l.b16 %v460
    %v741 = vunpack.c.h.b16 %v460
    %v742 = vunpack.c.l.b16 %v461
    %v743 = vunpack.c.l.b16 %v462
    %v744 = vunpack.c.h.b16 %v462
    %v745 = vunpack.c.l.b16 %v463
    %v746 = vunpack.c.l.b16 %v464
    %v747 = vunpack.c.h.b16 %v464
    %v748 = vunpack.c.l.b16 %v465
    %v749 = vunpack.c.l.b16 %v466
    %v750 = vunpack.c.h.b16 %v466
    %v751 = vunpack.c.l.b16 %v467
    %v752 = vunpack.c.l.b16 %v468
    %v753 = vunpack.c.h.b16 %v468
    %v754 = vunpack.c.l.b16 %v469
    %v755 = vunpack.c.l.b16 %v470
    %v756 = vunpack.c.h.b16 %v470
    %v757 = vunpack.c.l.b16 %v471
    %v758 = vunpack.c.l.b16 %v472
    %v759 = vunpack.c.h.b16 %v472
    %v760 = vunpack.c.l.b16 %v473
    %v761 = vunpack.c.l.b16 %v474
    %v762 = vunpack.c.h.b16 %v474
    %v763 = vunpack.c.l.b16 %v475
    %v764 = vunpack.c.l.b16 %v476
    %v765 = vunpack.c.h.b16 %v476
    %v766 = vunpack.c.l.b16 %v477
    %v767 = vunpack.c.l.b16 %v478
    %v768 = vunpack.c.h.b16 %v478
    %v769 = vunpack.c.l.b16 %v479
    %v770 = vunpack.c.l.b16 %v480
    %v771 = vunpack.c.h.b16 %v480
    %v772 = vunpack.c.l.b16 %v481
    %v773 = vunpack.c.l.b16 %v482
    %v774 = vunpack.c.h.b16 %v482
    %v775 = vunpack.c.l.b16 %v483
    %v776 = vunpack.c.l.b16 %v484
    %v777 = vunpack.c.h.b16 %v484
    %v778 = vunpack.c.l.b16 %v485
    %v779 = vunpack.c.l.b16 %v486
    %v780 = vunpack.c.h.b16 %v486
    %v781 = vunpack.c.l.b16 %v487
    %v782 = vunpack.c.l.b16 %v488
    %v783 = vunpack.c.h.b16 %v488
    %v784 = vunpack.c.l.b16 %v489
    %v785 = vunpack.c.l.b16 %v490
    %v786 = vunpack.c.h.b16 %v490
    %v787 = vunpack.c.l.b16 %v491
    %v788 = vunpack.c.l.b16 %v492
    %v789 = vunpack.c.h.b16 %v492
    %v790 = vunpack.c.l.b16 %v493
    %v791 = vunpack.c.l.b16 %v494
    %v792 = vunpack.c.h.b16 %v494
    %v793 = vunpack.c.l.b16 %v495
    %v794 = vunpack.c.l.b16 %v496
    %v795 = vunpack.c.h.b16 %v496
    %v796 = vunpack.c.l.b16 %v497
    %v797 = vunpack.c.l.b16 %v498
    %v798 = vunpack.c.h.b16 %v498
    %v799 = vunpack.c.l.b16 %v499
    %v800 = vunpack.c.l.b16 %v500
    %v801 = vunpack.c.h.b16 %v500
    %v802 = vunpack.c.l.b16 %v501
    %v803 = vunpack.c.l.b16 %v502
    %v804 = vunpack.c.h.b16 %v502
    %v805 = vunpack.c.l.b16 %v503
    %v806 = vunpack.c.l.b16 %v504
    %v807 = vunpack.c.h.b16 %v504
    %v808 = vunpack.c.l.b16 %v505
    %v809 = vunpack.c.l.b16 %v506
    %v810 = vunpack.c.h.b16 %v506
    %v811 = vunpack.c.l.b16 %v507
    %v812 = vunpack.c.l.b16 %v508
    %v813 = vunpack.c.h.b16 %v508
    %v814 = vunpack.c.l.b16 %v509
    %v815 = vunpack.c.l.b16 %v510
    %v816 = vunpack.c.h.b16 %v510
    %v817 = vunpack.c.l.b16 %v511
    %v818 = vunpack.c.l.b16 %v512
    %v819 = vunpack.c.h.b16 %v512
    %v820 = vunpack.c.l.b16 %v513
    %v821 = vunpack.c.l.b16 %v514
    %v822 = vunpack.c.h.b16 %v514
    %v823 = vunpack.c.l.b16 %v515
    %v824 = vunpack.c.l.b16 %v516
    %v825 = vunpack.c.h.b16 %v516
    %v826 = vunpack.c.l.b16 %v517
    %v827 = vunpack.c.l.b16 %v518
    %v828 = vunpack.c.h.b16 %v518
    %v829 = vunpack.c.l.b16 %v519
    %v830 = vunpack.c.l.b16 %v520
    %v831 = vunpack.c.h.b16 %v520
    %v832 = vunpack.c.l.b16 %v521
    %v833 = vunpack.c.l.b16 %v522
    %v834 = vunpack.c.h.b16 %v522
    %v835 = vunpack.c.l.b16 %v523
    %v836 = vunpack.c.l.b16 %v524
    %v837 = vunpack.c.h.b16 %v524
    %v838 = vunpack.c.l.b16 %v525
    %v839 = vunpack.c.l.b16 %v526
    %v840 = vunpack.c.h.b16 %v526
    %v841 = vunpack.c.l.b16 %v527
    %v842 = vunpack.c.l.b16 %v528
    %v843 = vunpack.c.h.b16 %v528
    %v844 = vunpack.c.l.b16 %v529
    %v845 = vunpack.c.l.b16 %v530
    %v846 = vunpack.c.h.b16 %v530
    %v847 = vunpack.c.l.b16 %v531
    %v848 = vunpack.c.l.b16 %v532
    %v849 = vunpack.c.h.b16 %v532
    %v850 = vunpack.c.l.b16 %v533
    %v851 = vunpack.c.l.b16 %v534
    %v852 = vunpack.c.h.b16 %v534
    %v853 = vunpack.c.l.b16 %v535
    %v854 = vunpack.c.l.b16 %v536
    %v855 = vunpack.c.h.b16 %v536
    %v856 = vunpack.c.l.b16 %v537
    %v857 = vunpack.c.l.b16 %v538
    %v858 = vunpack.c.h.b16 %v538
    %v859 = vunpack.c.l.b16 %v539
    %v860 = vunpack.c.l.b16 %v540
    %v861 = vunpack.c.h.b16 %v540
    %v862 = vunpack.c.l.b16 %v541
    %v863 = vunpack.c.l.b16 %v542
    %v864 = vunpack.c.h.b16 %v542
    %v865 = vunpack.c.l.b16 %v543
    %v866 = vunpack.c.l.b16 %v544
    %v867 = vunpack.c.h.b16 %v544
    %v868 = vunpack.c.l.b16 %v545
    %v869 = vunpack.c.l.b16 %v546
    %v870 = vunpack.c.h.b16 %v546
    %v871 = vunpack.c.l.b16 %v547
    %v872 = vunpack.c.l.b16 %v548
    %v873 = vunpack.c.h.b16 %v548
    %v874 = vunpack.c.l.b16 %v549
    %v875 = vunpack.c.l.b16 %v550
    %v876 = vunpack.c.h.b16 %v550
    %v877 = vunpack.c.l.b16 %v551
    %v878 = vunpack.c.l.b16 %v552
    %v879 = vunpack.c.h.b16 %v552
    %v880 = vunpack.c.l.b16 %v553
    %v881 = vunpack.c.l.b16 %v554
    %v882 = vunpack.c.h.b16 %v554
    %v883 = vunpack.c.l.b16 %v555
    %v884 = vunpack.c.l.b16 %v556
    %v885 = vunpack.c.h.b16 %v556
    %v886 = vunpack.c.l.b16 %v557
    %v887 = vunpack.c.l.b16 %v558
    %v888 = vunpack.c.h.b16 %v558
    %v889 = vunpack.c.l.b16 %v559
    %v890 = vunpack.c.l.b16 %v560
    %v891 = vunpack.c.h.b16 %v560
    %v892 = vunpack.c.l.b16 %v561
    %v893 = vunpack.c.l.b16 %v562
    %v894 = vunpack.c.h.b16 %v562
    %v895 = vunpack.c.l.b16 %v563
    %v896 = vunpack.c.l.b16 %v564
    %v897 = vunpack.c.h.b16 %v564
    %v898 = vunpack.c.l.b16 %v565
    %v899 = vunpack.c.l.b16 %v566
    %v900 = vunpack.c.h.b16 %v566
    %v901 = vunpack.c.l.b16 %v567
    %v902 = vunpack.c.l.b16 %v568
    %v903 = vunpack.c.h.b16 %v568
    %v904 = vunpack.c.l.b16 %v569
    %v905 = vunpack.c.l.b16 %v570
    %v906 = vunpack.c.h.b16 %v570
    %v907 = vunpack.c.l.b16 %v571
    %v908 = vunpack.c.l.b16 %v572
    %v909 = vunpack.c.h.b16 %v572
    %v910 = vunpack.c.l.b16 %v573
    %v911 = vpack.c.b16 %v722, %v719
    %v912 = vpack.c.b16 %v723, %v720
    %v913 = vpack.c.b16 %v724, %v721
    %v914 = vpack.c.b16 %v728, %v725
    %v915 = vpack.c.b16 %v729, %v726
    %v916 = vpack.c.b16 %v730, %v727
    %v917 = vpack.c.b16 %v734, %v731
    %v918 = vpack.c.b16 %v735, %v732
    %v919 = vpack.c.b16 %v736, %v733
    %v920 = vpack.c.b16 %v740, %v737
    %v921 = vpack.c.b16 %v741, %v738
    %v922 = vpack.c.b16 %v742, %v739
    %v923 = vpack.c.b16 %v746, %v743
    %v924 = vpack.c.b16 %v747, %v744
    %v925 = vpack.c.b16 %v748, %v745
    %v926 = vpack.c.b16 %v752, %v749
    %v927 = vpack.c.b16 %v753, %v750
    %v928 = vpack.c.b16 %v754, %v751
    %v929 = vpack.c.b16 %v758, %v755
    %v930 = vpack.c.b16 %v759, %v756
    %v931 = vpack.c.b16 %v760, %v757
    %v932 = vpack.c.b16 %v764, %v761
    %v933 = vpack.c.b16 %v765, %v762
    %v934 = vpack.c.b16 %v766, %v763
    %v935 = vpack.c.b16 %v770, %v767
    %v936 = vpack.c.b16 %v771, %v768
    %v937 = vpack.c.b16 %v772, %v769
    %v938 = vpack.c.b16 %v776, %v773
    %v939 = vpack.c.b16 %v777, %v774
    %v940 = vpack.c.b16 %v778, %v775
    %v941 = vpack.c.b16 %v782, %v779
    %v942 = vpack.c.b16 %v783, %v780
    %v943 = vpack.c.b16 %v784, %v781
    %v944 = vpack.c.b16 %v788, %v785
    %v945 = vpack.c.b16 %v789, %v786
    %v946 = vpack.c.b16 %v790, %v787
    %v947 = vpack.c.b16 %v794, %v791
    %v948 = vpack.c.b16 %v795, %v792
    %v949 = vpack.c.b16 %v796, %v793
    %v950 = vpack.c.b16 %v800, %v797
    %v951 = vpack.c.b16 %v801, %v798
    %v952 = vpack.c.b16 %v802, %v799
    %v953 = vpack.c.b16 %v806, %v803
    %v954 = vpack.c.b16 %v807, %v804
    %v955 = vpack.c.b16 %v808, %v805
    %v956 = vpack.c.b16 %v812, %v809
    %v957 = vpack.c.b16 %v813, %v810
    %v958 = vpack.c.b16 %v814, %v811
    %v959 = vpack.c.b16 %v818, %v815
    %v960 = vpack.c.b16 %v819, %v816
    %v961 = vpack.c.b16 %v820, %v817
    %v962 = vpack.c.b16 %v824, %v821
    %v963 = vpack.c.b16 %v825, %v822
    %v964 = vpack.c.b16 %v826, %v823
    %v965 = vpack.c.b16 %v830, %v827
    %v966 = vpack.c.b16 %v831, %v828
    %v967 = vpack.c.b16 %v832, %v829
    %v968 = vpack.c.b16 %v836, %v833
    %v969 = vpack.c.b16 %v837, %v834
    %v970 = vpack.c.b16 %v838, %v835
    %v971 = vpack.c.b16 %v842, %v839
    %v972 = vpack.c.b16 %v843, %v840
    %v973 = vpack.c.b16 %v844, %v841
    %v974 = vpack.c.b16 %v848, %v845
    %v975 = vpack.c.b16 %v849, %v846
    %v976 = vpack.c.b16 %v850, %v847
    %v977 = vpack.c.b16 %v854, %v851
    %v978 = vpack.c.b16 %v855, %v852
    %v979 = vpack.c.b16 %v856, %v853
    %v980 = vpack.c.b16 %v860, %v857
    %v981 = vpack.c.b16 %v861, %v858
    %v982 = vpack.c.b16 %v862, %v859
    %v983 = vpack.c.b16 %v866, %v863
    %v984 = vpack.c.b16 %v867, %v864
    %v985 = vpack.c.b16 %v868, %v865
    %v986 = vpack.c.b16 %v872, %v869
    %v987 = vpack.c.b16 %v873, %v870
    %v988 = vpack.c.b16 %v874, %v871
    %v989 = vpack.c.b16 %v878, %v875
    %v990 = vpack.c.b16 %v879, %v876
    %v991 = vpack.c.b16 %v880, %v877
    %v992 = vpack.c.b16 %v884, %v881
    %v993 = vpack.c.b16 %v885, %v882
    %v994 = vpack.c.b16 %v886, %v883
    %v995 = vpack.c.b16 %v890, %v887
    %v996 = vpack.c.b16 %v891, %v888
    %v997 = vpack.c.b16 %v892, %v889
    %v998 = vpack.c.b16 %v896, %v893
    %v999 = vpack.c.b16 %v897, %v894
    %v1000 = vpack.c.b16 %v898, %v895
    %v1001 = vpack.c.b16 %v902, %v899
    %v1002 = vpack.c.b16 %v903, %v900
    %v1003 = vpack.c.b16 %v904, %v901
    %v1004 = vpack.c.b16 %v908, %v905
    %v1005 = vpack.c.b16 %v909, %v906
    %v1006 = vpack.c.b16 %v910, %v907
    %1103 = vmatprep.subr.bf16.mxu0 %v912
    %1104 = vmatpush1.bf16.msra.mxu0 %v911
    %1105 = vmatprep.subr.bf16.mxu0 %v915
    %1106 = vmatpush1.bf16.msra.mxu0 %v914
    %1107 = vmatprep.subr.bf16.mxu0 %v918
    %1108 = vmatpush1.bf16.msra.mxu0 %v917
    %1109 = vmatprep.subr.bf16.mxu0 %v921
    %1110 = vmatpush1.bf16.msra.mxu0 %v920
    %1111 = vmatprep.subr.bf16.mxu0 %v924
    %1112 = vmatpush1.bf16.msra.mxu0 %v923
    %1113 = vmatprep.subr.bf16.mxu0 %v927
    %1114 = vmatpush1.bf16.msra.mxu0 %v926
    %1115 = vmatprep.subr.bf16.mxu0 %v930
    %1116 = vmatpush1.bf16.msra.mxu0 %v929
    %1117 = vmatprep.subr.bf16.mxu0 %v933
    %1118 = vmatpush1.bf16.msra.mxu0 %v932
    %1119 = vmatprep.subr.bf16.mxu0 %v936
    %1120 = vmatpush1.bf16.msra.mxu0 %v935
    %1121 = vmatprep.subr.bf16.mxu0 %v939
    %1122 = vmatpush1.bf16.msra.mxu0 %v938
    %1123 = vmatprep.subr.bf16.mxu0 %v942
    %1124 = vmatpush1.bf16.msra.mxu0 %v941
    %1125 = vmatprep.subr.bf16.mxu0 %v945
    %1126 = vmatpush1.bf16.msra.mxu0 %v944
    %1127 = vmatprep.subr.bf16.mxu0 %v948
    %1128 = vmatpush1.bf16.msra.mxu0 %v947
    %1129 = vmatprep.subr.bf16.mxu0 %v951
    %1130 = vmatpush1.bf16.msra.mxu0 %v950
    %1131 = vmatprep.subr.bf16.mxu0 %v954
    %1132 = vmatpush1.bf16.msra.mxu0 %v953
    %1133 = vmatprep.subr.bf16.mxu0 %v957
    %1134 = vmatpush1.bf16.msra.mxu0 %v956
    %1135 = vmatprep.mubr.bf16.mxu0 %v443
    %1136 = vmatmul.mubr.bf16.gmra.mrb[0].mxu0 %v442
    %v1137 = vpop.f32.mrb[0].mxu0
    %v1138 = vadd.f32 %v579, %v1137
    %v1139 = vpop.f32.mrb[0].mxu0
    %v1140 = vadd.f32 %v583, %v1139
    %v1141 = vpop.f32.mrb[0].mxu0
    %v1142 = vadd.f32 %v579, %v1141
    %v1143 = vpop.f32.mrb[0].mxu0
    %v1144 = vadd.f32 %v583, %v1143
    %1145 = vdwg.mxu0
    %1146 = vmatprep.subr.bf16.mxu0 %v960
    %1147 = vmatpush1.bf16.msra.mxu0 %v959
    %1148 = vmatprep.subr.bf16.mxu0 %v963
    %1149 = vmatpush1.bf16.msra.mxu0 %v962
    %1150 = vmatprep.subr.bf16.mxu0 %v966
    %1151 = vmatpush1.bf16.msra.mxu0 %v965
    %1152 = vmatprep.subr.bf16.mxu0 %v969
    %1153 = vmatpush1.bf16.msra.mxu0 %v968
    %1154 = vmatprep.subr.bf16.mxu0 %v972
    %1155 = vmatpush1.bf16.msra.mxu0 %v971
    %1156 = vmatprep.subr.bf16.mxu0 %v975
    %1157 = vmatpush1.bf16.msra.mxu0 %v974
    %1158 = vmatprep.subr.bf16.mxu0 %v978
    %1159 = vmatpush1.bf16.msra.mxu0 %v977
    %1160 = vmatprep.subr.bf16.mxu0 %v981
    %1161 = vmatpush1.bf16.msra.mxu0 %v980
    %1162 = vmatprep.subr.bf16.mxu0 %v984
    %1163 = vmatpush1.bf16.msra.mxu0 %v983
    %1164 = vmatprep.subr.bf16.mxu0 %v987
    %1165 = vmatpush1.bf16.msra.mxu0 %v986
    %1166 = vmatprep.subr.bf16.mxu0 %v990
    %1167 = vmatpush1.bf16.msra.mxu0 %v989
    %1168 = vmatprep.subr.bf16.mxu0 %v993
    %1169 = vmatpush1.bf16.msra.mxu0 %v992
    %1170 = vmatprep.subr.bf16.mxu0 %v996
    %1171 = vmatpush1.bf16.msra.mxu0 %v995
    %1172 = vmatprep.subr.bf16.mxu0 %v999
    %1173 = vmatpush1.bf16.msra.mxu0 %v998
    %1174 = vmatprep.subr.bf16.mxu0 %v1002
    %1175 = vmatpush1.bf16.msra.mxu0 %v1001
    %1176 = vmatprep.subr.bf16.mxu0 %v1005
    %1177 = vmatpush1.bf16.msra.mxu0 %v1004
    %1178 = vmatprep.mubr.bf16.mxu0 %v445
    %1179 = vmatmul.mubr.bf16.gmra.mrb[0].mxu0 %v444
    %v1180 = vpop.f32.mrb[0].mxu0
    %v1181 = vadd.f32 %v1138, %v1180
    %v1182 = vpop.f32.mrb[0].mxu0
    %v1183 = vadd.f32 %v1140, %v1182
    %v1184 = vpop.f32.mrb[0].mxu0
    %v1185 = vadd.f32 %v1142, %v1184
    %v1186 = vpop.f32.mrb[0].mxu0
    %v1187 = vadd.f32 %v1144, %v1186
    %1188 = vdwg.mxu0
    %1189 = vmatprep.subr.bf16.mxu0 0
    %1190 = vmatpush1.bf16.msra.mxu0 %v913
    %1191 = vmatprep.subr.bf16.mxu0 0
    %1192 = vmatpush1.bf16.msra.mxu0 %v916
    %1193 = vmatprep.subr.bf16.mxu0 0
    %1194 = vmatpush1.bf16.msra.mxu0 %v919
    %1195 = vmatprep.subr.bf16.mxu0 0
    %1196 = vmatpush1.bf16.msra.mxu0 %v922
    %1197 = vmatprep.subr.bf16.mxu0 0
    %1198 = vmatpush1.bf16.msra.mxu0 %v925
    %1199 = vmatprep.subr.bf16.mxu0 0
    %1200 = vmatpush1.bf16.msra.mxu0 %v928
    %1201 = vmatprep.subr.bf16.mxu0 0
    %1202 = vmatpush1.bf16.msra.mxu0 %v931
    %1203 = vmatprep.subr.bf16.mxu0 0
    %1204 = vmatpush1.bf16.msra.mxu0 %v934
    %1205 = vmatprep.subr.bf16.mxu0 0
    %1206 = vmatpush1.bf16.msra.mxu0 %v937
    %1207 = vmatprep.subr.bf16.mxu0 0
    %1208 = vmatpush1.bf16.msra.mxu0 %v940
    %1209 = vmatprep.subr.bf16.mxu0 0
    %1210 = vmatpush1.bf16.msra.mxu0 %v943
    %1211 = vmatprep.subr.bf16.mxu0 0
    %1212 = vmatpush1.bf16.msra.mxu0 %v946
    %1213 = vmatprep.subr.bf16.mxu0 0
    %1214 = vmatpush1.bf16.msra.mxu0 %v949
    %1215 = vmatprep.subr.bf16.mxu0 0
    %1216 = vmatpush1.bf16.msra.mxu0 %v952
    %1217 = vmatprep.subr.bf16.mxu0 0
    %1218 = vmatpush1.bf16.msra.mxu0 %v955
    %1219 = vmatprep.subr.bf16.mxu0 0
    %1220 = vmatpush1.bf16.msra.mxu0 %v958
    %1221 = vmatprep.mubr.bf16.mxu0 %v443
    %1222 = vmatmul.mubr.bf16.gmra.mrb[0].mxu0 %v442
    %v1223 = vpop.f32.mrb[0].mxu0
    %v1224 = vadd.f32 %v587, %v1223
    %v1225 = vpop.f32.mrb[0].mxu0
    %v1226 = vpop.f32.mrb[0].mxu0
    %v1227 = vadd.f32 %v587, %v1226
    %v1228 = vpop.f32.mrb[0].mxu0
    %1229 = vdwg.mxu0
    %1230 = vmatprep.subr.bf16.mxu0 0
    %1231 = vmatpush1.bf16.msra.mxu0 %v961
    %1232 = vmatprep.subr.bf16.mxu0 0
    %1233 = vmatpush1.bf16.msra.mxu0 %v964
    %1234 = vmatprep.subr.bf16.mxu0 0
    %1235 = vmatpush1.bf16.msra.mxu0 %v967
    %1236 = vmatprep.subr.bf16.mxu0 0
    %1237 = vmatpush1.bf16.msra.mxu0 %v970
    %1238 = vmatprep.subr.bf16.mxu0 0
    %1239 = vmatpush1.bf16.msra.mxu0 %v973
    %1240 = vmatprep.subr.bf16.mxu0 0
    %1241 = vmatpush1.bf16.msra.mxu0 %v976
    %1242 = vmatprep.subr.bf16.mxu0 0
    %1243 = vmatpush1.bf16.msra.mxu0 %v979
    %1244 = vmatprep.subr.bf16.mxu0 0
    %1245 = vmatpush1.bf16.msra.mxu0 %v982
    %1246 = vmatprep.subr.bf16.mxu0 0
    %1247 = vmatpush1.bf16.msra.mxu0 %v985
    %1248 = vmatprep.subr.bf16.mxu0 0
    %1249 = vmatpush1.bf16.msra.mxu0 %v988
    %1250 = vmatprep.subr.bf16.mxu0 0
    %1251 = vmatpush1.bf16.msra.mxu0 %v991
    %1252 = vmatprep.subr.bf16.mxu0 0
    %1253 = vmatpush1.bf16.msra.mxu0 %v994
    %1254 = vmatprep.subr.bf16.mxu0 0
    %1255 = vmatpush1.bf16.msra.mxu0 %v997
    %1256 = vmatprep.subr.bf16.mxu0 0
    %1257 = vmatpush1.bf16.msra.mxu0 %v1000
    %1258 = vmatprep.subr.bf16.mxu0 0
    %1259 = vmatpush1.bf16.msra.mxu0 %v1003
    %1260 = vmatprep.subr.bf16.mxu0 0
    %1261 = vmatpush1.bf16.msra.mxu0 %v1006
    %1262 = vmatprep.mubr.bf16.mxu0 %v445
    %1263 = vmatmul.mubr.bf16.gmra.mrb[0].mxu0 %v444
    %v1264 = vpop.f32.mrb[0].mxu0
    %v1265 = vadd.f32 %v1224, %v1264
    %v1266 = vpop.f32.mrb[0].mxu0
    %v1267 = vpop.f32.mrb[0].mxu0
    %v1268 = vadd.f32 %v1227, %v1267
    %v1269 = vpop.f32.mrb[0].mxu0
    %1270 = vdwg.mxu0
    %v1271 = vmax.f32 %v1181, 0.0
    %v1272 = vmax.f32 %v1183, 0.0
    %v1273 = vmax.f32 %v1265, 0.0
    %v1274 = vmax.f32 %v1185, 0.0
    %v1275 = vmax.f32 %v1187, 0.0
    %v1276 = vmax.f32 %v1268, 0.0
    %v1277 = vpack.c.bf16 %v1274, %v1271
    %v1278 = vpack.c.bf16 %v1275, %v1272
    %v1279 = vpack.c.bf16 %v1276, %v1273
    %v1280 = vld [vmem:[#allocation7] sm:$0xff]
    %v1281 = vld [vmem:[#allocation7 + $0x8] sm:$0xff]
    %v1282 = vld [vmem:[#allocation7 + $0x10] sm:$0xff]
    %v1283 = vld [vmem:[#allocation7 + $0x18] sm:$0xff]
    %v1284 = vld [vmem:[#allocation7 + $0x20] sm:$0xff]
    %v1285 = vld [vmem:[#allocation7 + $0x28] sm:$0xff]
    %v1286 = vld [vmem:[#allocation7 + $0x30] sm:$0xff]
    %v1287 = vld [vmem:[#allocation7 + $0x38] sm:$0xff]
    %v1288 = vld [vmem:[#allocation7 + $0x40] sm:$0xff]
    %v1289 = vld [vmem:[#allocation7 + $0x48] sm:$0xff]
    %v1290 = vld [vmem:[#allocation7 + $0x50] sm:$0xff]
    %v1291 = vld [vmem:[#allocation7 + $0x58] sm:$0xff]
    %v1292 = vld [vmem:[#allocation7 + $0x60] sm:$0xff]
    %v1293 = vld [vmem:[#allocation7 + $0x68] sm:$0xff]
    %v1294 = vld [vmem:[#allocation7 + $0x70] sm:$0xff]
    %v1295 = vld [vmem:[#allocation7 + $0x78] sm:$0xff]
    %v1296 = vld [vmem:[#allocation7 + $0x80] sm:$0xff]
    %v1297 = vld [vmem:[#allocation7 + $0x88] sm:$0xff]
    %v1298 = vld [vmem:[#allocation7 + $0x90] sm:$0xff]
    %v1299 = vld [vmem:[#allocation7 + $0x98] sm:$0xff]
    %v1300 = vld [vmem:[#allocation7 + $0xa0] sm:$0xff]
    %v1301 = vld [vmem:[#allocation7 + $0xa8] sm:$0xff]
    %v1302 = vld [vmem:[#allocation7 + $0xb0] sm:$0xff]
    %v1303 = vld [vmem:[#allocation7 + $0xb8] sm:$0xff]
    %v1304 = vld [vmem:[#allocation7 + $0xc0] sm:$0xff]
    %v1305 = vld [vmem:[#allocation7 + $0xc8] sm:$0xff]
    %v1306 = vld [vmem:[#allocation7 + $0xd0] sm:$0xff]
    %v1307 = vld [vmem:[#allocation7 + $0xd8] sm:$0xff]
    %v1308 = vld [vmem:[#allocation7 + $0xe0] sm:$0xff]
    %v1309 = vld [vmem:[#allocation7 + $0xe8] sm:$0xff]
    %v1310 = vld [vmem:[#allocation7 + $0xf0] sm:$0xff]
    %v1311 = vld [vmem:[#allocation7 + $0xf8] sm:$0xff]
    %v1312 = vld [vmem:[#allocation7 + $0x100] sm:$0xff]
    %v1313 = vld [vmem:[#allocation7 + $0x108] sm:$0xff]
    %v1314 = vld [vmem:[#allocation7 + $0x110] sm:$0xff]
    %v1315 = vld [vmem:[#allocation7 + $0x118] sm:$0xff]
    %v1316 = vld [vmem:[#allocation7 + $0x120] sm:$0xff]
    %v1317 = vld [vmem:[#allocation7 + $0x128] sm:$0xff]
    %v1318 = vld [vmem:[#allocation7 + $0x130] sm:$0xff]
    %v1319 = vld [vmem:[#allocation7 + $0x138] sm:$0xff]
    %v1320 = vld [vmem:[#allocation7 + $0x140] sm:$0xff]
    %v1321 = vld [vmem:[#allocation7 + $0x148] sm:$0xff]
    %v1322 = vld [vmem:[#allocation7 + $0x150] sm:$0xff]
    %v1323 = vld [vmem:[#allocation7 + $0x158] sm:$0xff]
    %v1324 = vld [vmem:[#allocation7 + $0x160] sm:$0xff]
    %v1325 = vld [vmem:[#allocation7 + $0x168] sm:$0xff]
    %v1326 = vld [vmem:[#allocation7 + $0x170] sm:$0xff]
    %v1327 = vld [vmem:[#allocation7 + $0x178] sm:$0xff]
    %v1328 = vld [vmem:[%s6] sm:$0x3]
    %v1330 = vlaneseq
    %v1331 = vshrl.u32 %v1330, 7
    %v1332 = vsub.s32 0, %v1331
    %v1333 = vrot.slane %v1328, %v1332
    %v1334 = vlaneseq
    %v1335 = vshrl.u32 %v1334, 7
    %v1336 = vsub.s32 1, %v1335
    %v1337 = vrot.slane %v1328, %v1336
    %v1388 = vunpack.c.l.b16 %v1280
    %v1389 = vunpack.c.h.b16 %v1280
    %v1390 = vunpack.c.l.b16 %v1281
    %v1391 = vunpack.c.h.b16 %v1281
    %v1392 = vunpack.c.l.b16 %v1282
    %v1393 = vunpack.c.h.b16 %v1282
    %v1394 = vunpack.c.l.b16 %v1283
    %v1395 = vunpack.c.h.b16 %v1283
    %v1396 = vunpack.c.l.b16 %v1284
    %v1397 = vunpack.c.h.b16 %v1284
    %v1398 = vunpack.c.l.b16 %v1285
    %v1399 = vunpack.c.h.b16 %v1285
    %v1400 = vunpack.c.l.b16 %v1286
    %v1401 = vunpack.c.h.b16 %v1286
    %v1402 = vunpack.c.l.b16 %v1287
    %v1403 = vunpack.c.h.b16 %v1287
    %v1404 = vunpack.c.l.b16 %v1288
    %v1405 = vunpack.c.h.b16 %v1288
    %v1406 = vunpack.c.l.b16 %v1289
    %v1407 = vunpack.c.h.b16 %v1289
    %v1408 = vunpack.c.l.b16 %v1290
    %v1409 = vunpack.c.h.b16 %v1290
    %v1410 = vunpack.c.l.b16 %v1291
    %v1411 = vunpack.c.h.b16 %v1291
    %v1412 = vunpack.c.l.b16 %v1292
    %v1413 = vunpack.c.h.b16 %v1292
    %v1414 = vunpack.c.l.b16 %v1293
    %v1415 = vunpack.c.h.b16 %v1293
    %v1416 = vunpack.c.l.b16 %v1294
    %v1417 = vunpack.c.h.b16 %v1294
    %v1418 = vunpack.c.l.b16 %v1295
    %v1419 = vunpack.c.h.b16 %v1295
    %v1420 = vunpack.c.l.b16 %v1296
    %v1421 = vunpack.c.h.b16 %v1296
    %v1422 = vunpack.c.l.b16 %v1297
    %v1423 = vunpack.c.h.b16 %v1297
    %v1424 = vunpack.c.l.b16 %v1298
    %v1425 = vunpack.c.h.b16 %v1298
    %v1426 = vunpack.c.l.b16 %v1299
    %v1427 = vunpack.c.h.b16 %v1299
    %v1428 = vunpack.c.l.b16 %v1300
    %v1429 = vunpack.c.h.b16 %v1300
    %v1430 = vunpack.c.l.b16 %v1301
    %v1431 = vunpack.c.h.b16 %v1301
    %v1432 = vunpack.c.l.b16 %v1302
    %v1433 = vunpack.c.h.b16 %v1302
    %v1434 = vunpack.c.l.b16 %v1303
    %v1435 = vunpack.c.h.b16 %v1303
    %v1436 = vunpack.c.l.b16 %v1304
    %v1437 = vunpack.c.h.b16 %v1304
    %v1438 = vunpack.c.l.b16 %v1305
    %v1439 = vunpack.c.h.b16 %v1305
    %v1440 = vunpack.c.l.b16 %v1306
    %v1441 = vunpack.c.h.b16 %v1306
    %v1442 = vunpack.c.l.b16 %v1307
    %v1443 = vunpack.c.h.b16 %v1307
    %v1444 = vunpack.c.l.b16 %v1308
    %v1445 = vunpack.c.h.b16 %v1308
    %v1446 = vunpack.c.l.b16 %v1309
    %v1447 = vunpack.c.h.b16 %v1309
    %v1448 = vunpack.c.l.b16 %v1310
    %v1449 = vunpack.c.h.b16 %v1310
    %v1450 = vunpack.c.l.b16 %v1311
    %v1451 = vunpack.c.h.b16 %v1311
    %v1452 = vunpack.c.l.b16 %v1312
    %v1453 = vunpack.c.h.b16 %v1312
    %v1454 = vunpack.c.l.b16 %v1313
    %v1455 = vunpack.c.h.b16 %v1313
    %v1456 = vunpack.c.l.b16 %v1314
    %v1457 = vunpack.c.h.b16 %v1314
    %v1458 = vunpack.c.l.b16 %v1315
    %v1459 = vunpack.c.h.b16 %v1315
    %v1460 = vunpack.c.l.b16 %v1316
    %v1461 = vunpack.c.h.b16 %v1316
    %v1462 = vunpack.c.l.b16 %v1317
    %v1463 = vunpack.c.h.b16 %v1317
    %v1464 = vunpack.c.l.b16 %v1318
    %v1465 = vunpack.c.h.b16 %v1318
    %v1466 = vunpack.c.l.b16 %v1319
    %v1467 = vunpack.c.h.b16 %v1319
    %v1468 = vunpack.c.l.b16 %v1320
    %v1469 = vunpack.c.h.b16 %v1320
    %v1470 = vunpack.c.l.b16 %v1321
    %v1471 = vunpack.c.h.b16 %v1321
    %v1472 = vunpack.c.l.b16 %v1322
    %v1473 = vunpack.c.h.b16 %v1322
    %v1474 = vunpack.c.l.b16 %v1323
    %v1475 = vunpack.c.h.b16 %v1323
    %v1476 = vunpack.c.l.b16 %v1324
    %v1477 = vunpack.c.h.b16 %v1324
    %v1478 = vunpack.c.l.b16 %v1325
    %v1479 = vunpack.c.h.b16 %v1325
    %v1480 = vunpack.c.l.b16 %v1326
    %v1481 = vunpack.c.h.b16 %v1326
    %v1482 = vunpack.c.l.b16 %v1327
    %v1483 = vunpack.c.h.b16 %v1327
    %v1484 = vpack.c.b16 %v1390, %v1388
    %v1485 = vpack.c.b16 %v1391, %v1389
    %v1486 = vpack.c.b16 %v1394, %v1392
    %v1487 = vpack.c.b16 %v1395, %v1393
    %v1488 = vpack.c.b16 %v1398, %v1396
    %v1489 = vpack.c.b16 %v1399, %v1397
    %v1490 = vpack.c.b16 %v1402, %v1400
    %v1491 = vpack.c.b16 %v1403, %v1401
    %v1492 = vpack.c.b16 %v1406, %v1404
    %v1493 = vpack.c.b16 %v1407, %v1405
    %v1494 = vpack.c.b16 %v1410, %v1408
    %v1495 = vpack.c.b16 %v1411, %v1409
    %v1496 = vpack.c.b16 %v1414, %v1412
    %v1497 = vpack.c.b16 %v1415, %v1413
    %v1498 = vpack.c.b16 %v1418, %v1416
    %v1499 = vpack.c.b16 %v1419, %v1417
    %v1500 = vpack.c.b16 %v1422, %v1420
    %v1501 = vpack.c.b16 %v1423, %v1421
    %v1502 = vpack.c.b16 %v1426, %v1424
    %v1503 = vpack.c.b16 %v1427, %v1425
    %v1504 = vpack.c.b16 %v1430, %v1428
    %v1505 = vpack.c.b16 %v1431, %v1429
    %v1506 = vpack.c.b16 %v1434, %v1432
    %v1507 = vpack.c.b16 %v1435, %v1433
    %v1508 = vpack.c.b16 %v1438, %v1436
    %v1509 = vpack.c.b16 %v1439, %v1437
    %v1510 = vpack.c.b16 %v1442, %v1440
    %v1511 = vpack.c.b16 %v1443, %v1441
    %v1512 = vpack.c.b16 %v1446, %v1444
    %v1513 = vpack.c.b16 %v1447, %v1445
    %v1514 = vpack.c.b16 %v1450, %v1448
    %v1515 = vpack.c.b16 %v1451, %v1449
    %v1516 = vpack.c.b16 %v1454, %v1452
    %v1517 = vpack.c.b16 %v1455, %v1453
    %v1518 = vpack.c.b16 %v1458, %v1456
    %v1519 = vpack.c.b16 %v1459, %v1457
    %v1520 = vpack.c.b16 %v1462, %v1460
    %v1521 = vpack.c.b16 %v1463, %v1461
    %v1522 = vpack.c.b16 %v1466, %v1464
    %v1523 = vpack.c.b16 %v1467, %v1465
    %v1524 = vpack.c.b16 %v1470, %v1468
    %v1525 = vpack.c.b16 %v1471, %v1469
    %v1526 = vpack.c.b16 %v1474, %v1472
    %v1527 = vpack.c.b16 %v1475, %v1473
    %v1528 = vpack.c.b16 %v1478, %v1476
    %v1529 = vpack.c.b16 %v1479, %v1477
    %v1530 = vpack.c.b16 %v1482, %v1480
    %v1531 = vpack.c.b16 %v1483, %v1481
    %1580 = vmatprep.subr.bf16.mxu0 %v1485
    %1581 = vmatpush1.bf16.msra.mxu0 %v1484
    %1582 = vmatprep.subr.bf16.mxu0 %v1487
    %1583 = vmatpush1.bf16.msra.mxu0 %v1486
    %1584 = vmatprep.subr.bf16.mxu0 %v1489
    %1585 = vmatpush1.bf16.msra.mxu0 %v1488
    %1586 = vmatprep.subr.bf16.mxu0 %v1491
    %1587 = vmatpush1.bf16.msra.mxu0 %v1490
    %1588 = vmatprep.subr.bf16.mxu0 %v1493
    %1589 = vmatpush1.bf16.msra.mxu0 %v1492
    %1590 = vmatprep.subr.bf16.mxu0 %v1495
    %1591 = vmatpush1.bf16.msra.mxu0 %v1494
    %1592 = vmatprep.subr.bf16.mxu0 %v1497
    %1593 = vmatpush1.bf16.msra.mxu0 %v1496
    %1594 = vmatprep.subr.bf16.mxu0 %v1499
    %1595 = vmatpush1.bf16.msra.mxu0 %v1498
    %1596 = vmatprep.subr.bf16.mxu0 %v1501
    %1597 = vmatpush1.bf16.msra.mxu0 %v1500
    %1598 = vmatprep.subr.bf16.mxu0 %v1503
    %1599 = vmatpush1.bf16.msra.mxu0 %v1502
    %1600 = vmatprep.subr.bf16.mxu0 %v1505
    %1601 = vmatpush1.bf16.msra.mxu0 %v1504
    %1602 = vmatprep.subr.bf16.mxu0 %v1507
    %1603 = vmatpush1.bf16.msra.mxu0 %v1506
    %1604 = vmatprep.subr.bf16.mxu0 %v1509
    %1605 = vmatpush1.bf16.msra.mxu0 %v1508
    %1606 = vmatprep.subr.bf16.mxu0 %v1511
    %1607 = vmatpush1.bf16.msra.mxu0 %v1510
    %1608 = vmatprep.subr.bf16.mxu0 %v1513
    %1609 = vmatpush1.bf16.msra.mxu0 %v1512
    %1610 = vmatprep.subr.bf16.mxu0 %v1515
    %1611 = vmatpush1.bf16.msra.mxu0 %v1514
    %1612 = vmatprep.mubr.bf16.mxu0 %v1278
    %1613 = vmatmul.mubr.bf16.gmra.mrb[0].mxu0 %v1277
    %v1614 = vpop.f32.mrb[0].mxu0
    %v1615 = vadd.f32 %v1333, %v1614
    %v1616 = vpop.f32.mrb[0].mxu0
    %v1617 = vadd.f32 %v1337, %v1616
    %v1618 = vpop.f32.mrb[0].mxu0
    %v1619 = vadd.f32 %v1333, %v1618
    %v1620 = vpop.f32.mrb[0].mxu0
    %v1621 = vadd.f32 %v1337, %v1620
    %1622 = vdwg.mxu0
    %1623 = vmatprep.subr.bf16.mxu0 %v1517
    %1624 = vmatpush1.bf16.msra.mxu0 %v1516
    %1625 = vmatprep.subr.bf16.mxu0 %v1519
    %1626 = vmatpush1.bf16.msra.mxu0 %v1518
    %1627 = vmatprep.subr.bf16.mxu0 %v1521
    %1628 = vmatpush1.bf16.msra.mxu0 %v1520
    %1629 = vmatprep.subr.bf16.mxu0 %v1523
    %1630 = vmatpush1.bf16.msra.mxu0 %v1522
    %1631 = vmatprep.subr.bf16.mxu0 %v1525
    %1632 = vmatpush1.bf16.msra.mxu0 %v1524
    %1633 = vmatprep.subr.bf16.mxu0 %v1527
    %1634 = vmatpush1.bf16.msra.mxu0 %v1526
    %1635 = vmatprep.subr.bf16.mxu0 %v1529
    %1636 = vmatpush1.bf16.msra.mxu0 %v1528
    %1637 = vmatprep.subr.bf16.mxu0 %v1531
    %1638 = vmatpush1.bf16.msra.mxu0 %v1530
    %1639 = vmatprep.subr.bf16.mxu0 0
    %1640 = vmatpush1.bf16.msra.mxu0 0
    %1641 = vmatprep.subr.bf16.mxu0 0
    %1642 = vmatpush1.bf16.msra.mxu0 0
    %1643 = vmatprep.subr.bf16.mxu0 0
    %1644 = vmatpush1.bf16.msra.mxu0 0
    %1645 = vmatprep.subr.bf16.mxu0 0
    %1646 = vmatpush1.bf16.msra.mxu0 0
    %1647 = vmatprep.subr.bf16.mxu0 0
    %1648 = vmatpush1.bf16.msra.mxu0 0
    %1649 = vmatprep.subr.bf16.mxu0 0
    %1650 = vmatpush1.bf16.msra.mxu0 0
    %1651 = vmatprep.subr.bf16.mxu0 0
    %1652 = vmatpush1.bf16.msra.mxu0 0
    %1653 = vmatprep.subr.bf16.mxu0 0
    %1654 = vmatpush1.bf16.msra.mxu0 0
    %1655 = vmatprep.mubr.bf16.mxu0 0
    %1656 = vmatmul.mubr.bf16.gmra.mrb[0].mxu0 %v1279
    %v1657 = vpop.f32.mrb[0].mxu0
    %v1658 = vadd.f32 %v1615, %v1657
    %v1659 = vpop.f32.mrb[0].mxu0
    %v1660 = vadd.f32 %v1617, %v1659
    %v1661 = vpop.f32.mrb[0].mxu0
    %v1662 = vadd.f32 %v1619, %v1661
    %v1663 = vpop.f32.mrb[0].mxu0
    %v1664 = vadd.f32 %v1621, %v1663
    %1665 = vdwg.mxu0
    %v1666 = vmax.f32 %v1658, 0.0
    %v1667 = vmax.f32 %v1660, 0.0
    %v1668 = vmax.f32 %v1662, 0.0
    %v1669 = vmax.f32 %v1664, 0.0
    %v1670 = vpack.c.bf16 %v1668, %v1666
    %v1671 = vpack.c.bf16 %v1669, %v1667
    %v1672 = vld [vmem:[#allocation8] sm:$0xf]
    %v1673 = vld [vmem:[#allocation8 + $0x4] sm:$0xf]
    %v1674 = vld [vmem:[#allocation8 + $0x8] sm:$0xf]
    %v1675 = vld [vmem:[#allocation8 + $0xc] sm:$0xf]
    %v1676 = vld [vmem:[#allocation8 + $0x10] sm:$0xf]
    %v1677 = vld [vmem:[#allocation8 + $0x14] sm:$0xf]
    %v1678 = vld [vmem:[#allocation8 + $0x18] sm:$0xf]
    %v1679 = vld [vmem:[#allocation8 + $0x1c] sm:$0xf]
    %v1680 = vld [vmem:[#allocation8 + $0x20] sm:$0xf]
    %v1681 = vld [vmem:[#allocation8 + $0x24] sm:$0xf]
    %v1682 = vld [vmem:[#allocation8 + $0x28] sm:$0xf]
    %v1683 = vld [vmem:[#allocation8 + $0x2c] sm:$0xf]
    %v1684 = vld [vmem:[#allocation8 + $0x30] sm:$0xf]
    %v1685 = vld [vmem:[#allocation8 + $0x34] sm:$0xf]
    %v1686 = vld [vmem:[#allocation8 + $0x38] sm:$0xf]
    %v1687 = vld [vmem:[#allocation8 + $0x3c] sm:$0xf]
    %v1688 = vld [vmem:[#allocation8 + $0x40] sm:$0xf]
    %v1689 = vld [vmem:[#allocation8 + $0x44] sm:$0xf]
    %v1690 = vld [vmem:[#allocation8 + $0x48] sm:$0xf]
    %v1691 = vld [vmem:[#allocation8 + $0x4c] sm:$0xf]
    %v1692 = vld [vmem:[#allocation8 + $0x50] sm:$0xf]
    %v1693 = vld [vmem:[#allocation8 + $0x54] sm:$0xf]
    %v1694 = vld [vmem:[#allocation8 + $0x58] sm:$0xf]
    %v1695 = vld [vmem:[#allocation8 + $0x5c] sm:$0xf]
    %v1696 = vld [vmem:[#allocation8 + $0x60] sm:$0xf]
    %v1697 = vld [vmem:[#allocation8 + $0x64] sm:$0xf]
    %v1698 = vld [vmem:[#allocation8 + $0x68] sm:$0xf]
    %v1699 = vld [vmem:[#allocation8 + $0x6c] sm:$0xf]
    %v1700 = vld [vmem:[#allocation8 + $0x70] sm:$0xf]
    %v1701 = vld [vmem:[#allocation8 + $0x74] sm:$0xf]
    %v1702 = vld [vmem:[#allocation8 + $0x78] sm:$0xf]
    %v1703 = vld [vmem:[#allocation8 + $0x7c] sm:$0xf]
    %v1704 = vld [vmem:[%s8] sm:$0x1]
    %v1706 = vlaneseq
    %v1707 = vshrl.u32 %v1706, 7
    %v1708 = vsub.s32 0, %v1707
    %v1709 = vrot.slane %v1704, %v1708
    %v1743 = vunpack.c.l.b16 %v1672
    %v1744 = vunpack.c.l.b16 %v1673
    %v1745 = vunpack.c.l.b16 %v1674
    %v1746 = vunpack.c.l.b16 %v1675
    %v1747 = vunpack.c.l.b16 %v1676
    %v1748 = vunpack.c.l.b16 %v1677
    %v1749 = vunpack.c.l.b16 %v1678
    %v1750 = vunpack.c.l.b16 %v1679
    %v1751 = vunpack.c.l.b16 %v1680
    %v1752 = vunpack.c.l.b16 %v1681
    %v1753 = vunpack.c.l.b16 %v1682
    %v1754 = vunpack.c.l.b16 %v1683
    %v1755 = vunpack.c.l.b16 %v1684
    %v1756 = vunpack.c.l.b16 %v1685
    %v1757 = vunpack.c.l.b16 %v1686
    %v1758 = vunpack.c.l.b16 %v1687
    %v1759 = vunpack.c.l.b16 %v1688
    %v1760 = vunpack.c.l.b16 %v1689
    %v1761 = vunpack.c.l.b16 %v1690
    %v1762 = vunpack.c.l.b16 %v1691
    %v1763 = vunpack.c.l.b16 %v1692
    %v1764 = vunpack.c.l.b16 %v1693
    %v1765 = vunpack.c.l.b16 %v1694
    %v1766 = vunpack.c.l.b16 %v1695
    %v1767 = vunpack.c.l.b16 %v1696
    %v1768 = vunpack.c.l.b16 %v1697
    %v1769 = vunpack.c.l.b16 %v1698
    %v1770 = vunpack.c.l.b16 %v1699
    %v1771 = vunpack.c.l.b16 %v1700
    %v1772 = vunpack.c.l.b16 %v1701
    %v1773 = vunpack.c.l.b16 %v1702
    %v1774 = vunpack.c.l.b16 %v1703
    %v1775 = vpack.c.b16 %v1744, %v1743
    %v1776 = vpack.c.b16 %v1746, %v1745
    %v1777 = vpack.c.b16 %v1748, %v1747
    %v1778 = vpack.c.b16 %v1750, %v1749
    %v1779 = vpack.c.b16 %v1752, %v1751
    %v1780 = vpack.c.b16 %v1754, %v1753
    %v1781 = vpack.c.b16 %v1756, %v1755
    %v1782 = vpack.c.b16 %v1758, %v1757
    %v1783 = vpack.c.b16 %v1760, %v1759
    %v1784 = vpack.c.b16 %v1762, %v1761
    %v1785 = vpack.c.b16 %v1764, %v1763
    %v1786 = vpack.c.b16 %v1766, %v1765
    %v1787 = vpack.c.b16 %v1768, %v1767
    %v1788 = vpack.c.b16 %v1770, %v1769
    %v1789 = vpack.c.b16 %v1772, %v1771
    %v1790 = vpack.c.b16 %v1774, %v1773
    %1807 = vmatprep.subr.bf16.mxu0 0
    %1808 = vmatpush1.bf16.msra.mxu0 %v1775
    %1809 = vmatprep.subr.bf16.mxu0 0
    %1810 = vmatpush1.bf16.msra.mxu0 %v1776
    %1811 = vmatprep.subr.bf16.mxu0 0
    %1812 = vmatpush1.bf16.msra.mxu0 %v1777
    %1813 = vmatprep.subr.bf16.mxu0 0
    %1814 = vmatpush1.bf16.msra.mxu0 %v1778
    %1815 = vmatprep.subr.bf16.mxu0 0
    %1816 = vmatpush1.bf16.msra.mxu0 %v1779
    %1817 = vmatprep.subr.bf16.mxu0 0
    %1818 = vmatpush1.bf16.msra.mxu0 %v1780
    %1819 = vmatprep.subr.bf16.mxu0 0
    %1820 = vmatpush1.bf16.msra.mxu0 %v1781
    %1821 = vmatprep.subr.bf16.mxu0 0
    %1822 = vmatpush1.bf16.msra.mxu0 %v1782
    %1823 = vmatprep.subr.bf16.mxu0 0
    %1824 = vmatpush1.bf16.msra.mxu0 %v1783
    %1825 = vmatprep.subr.bf16.mxu0 0
    %1826 = vmatpush1.bf16.msra.mxu0 %v1784
    %1827 = vmatprep.subr.bf16.mxu0 0
    %1828 = vmatpush1.bf16.msra.mxu0 %v1785
    %1829 = vmatprep.subr.bf16.mxu0 0
    %1830 = vmatpush1.bf16.msra.mxu0 %v1786
    %1831 = vmatprep.subr.bf16.mxu0 0
    %1832 = vmatpush1.bf16.msra.mxu0 %v1787
    %1833 = vmatprep.subr.bf16.mxu0 0
    %1834 = vmatpush1.bf16.msra.mxu0 %v1788
    %1835 = vmatprep.subr.bf16.mxu0 0
    %1836 = vmatpush1.bf16.msra.mxu0 %v1789
    %1837 = vmatprep.subr.bf16.mxu0 0
    %1838 = vmatpush1.bf16.msra.mxu0 %v1790
    %1839 = vmatprep.mubr.bf16.mxu0 %v1671
    %1840 = vmatmul.mubr.bf16.gmra.mrb[0].mxu0 %v1670
    %v1841 = vpop.f32.mrb[0].mxu0
    %v1842 = vadd.f32 %v1709, %v1841
    %v1843 = vpop.f32.mrb[0].mxu0
    %v1844 = vpop.f32.mrb[0].mxu0
    %v1845 = vadd.f32 %v1709, %v1844
    %v1846 = vpop.f32.mrb[0].mxu0
    %1847 = vdwg.mxu0
    %v1848 = vmax.f32 %v1842, 0.0
    %v1849 = vmax.f32 %v1845, 0.0
    %v1850 = vpack.c.bf16 %v1849, %v1848
    %v1851 = vld [vmem:[#allocation10] sm:$0xf]
    %v1852 = vld [vmem:[#allocation10 + $0x4] sm:$0xf]
    %v1853 = vld [vmem:[#allocation10 + $0x8] sm:$0xf]
    %v1854 = vld [vmem:[#allocation10 + $0xc] sm:$0xf]
    %v1855 = vld [vmem:[#allocation10 + $0x10] sm:$0xf]
    %v1856 = vld [vmem:[#allocation10 + $0x14] sm:$0xf]
    %v1857 = vld [vmem:[#allocation10 + $0x18] sm:$0xf]
    %v1858 = vld [vmem:[#allocation10 + $0x1c] sm:$0xf]
    %v1859 = vld [vmem:[#allocation10 + $0x20] sm:$0xf]
    %v1860 = vld [vmem:[#allocation10 + $0x24] sm:$0xf]
    %v1861 = vld [vmem:[#allocation10 + $0x28] sm:$0xf]
    %v1862 = vld [vmem:[#allocation10 + $0x2c] sm:$0xf]
    %v1863 = vld [vmem:[#allocation10 + $0x30] sm:$0xf]
    %v1864 = vld [vmem:[#allocation10 + $0x34] sm:$0xf]
    %v1865 = vld [vmem:[#allocation10 + $0x38] sm:$0xf]
    %v1866 = vld [vmem:[#allocation10 + $0x3c] sm:$0xf]
    %v1867 = vld [vmem:[%s10] sm:$0x1]
    %v1869 = vlaneseq
    %v1870 = vshrl.u32 %v1869, 7
    %v1871 = vsub.s32 0, %v1870
    %v1872 = vrot.slane %v1867, %v1871
    %v1890 = vunpack.c.l.b16 %v1851
    %v1891 = vunpack.c.l.b16 %v1852
    %v1892 = vunpack.c.l.b16 %v1853
    %v1893 = vunpack.c.l.b16 %v1854
    %v1894 = vunpack.c.l.b16 %v1855
    %v1895 = vunpack.c.l.b16 %v1856
    %v1896 = vunpack.c.l.b16 %v1857
    %v1897 = vunpack.c.l.b16 %v1858
    %v1898 = vunpack.c.l.b16 %v1859
    %v1899 = vunpack.c.l.b16 %v1860
    %v1900 = vunpack.c.l.b16 %v1861
    %v1901 = vunpack.c.l.b16 %v1862
    %v1902 = vunpack.c.l.b16 %v1863
    %v1903 = vunpack.c.l.b16 %v1864
    %v1904 = vunpack.c.l.b16 %v1865
    %v1905 = vunpack.c.l.b16 %v1866
    %v1906 = vpack.c.b16 %v1891, %v1890
    %v1907 = vpack.c.b16 %v1893, %v1892
    %v1908 = vpack.c.b16 %v1895, %v1894
    %v1909 = vpack.c.b16 %v1897, %v1896
    %v1910 = vpack.c.b16 %v1899, %v1898
    %v1911 = vpack.c.b16 %v1901, %v1900
    %v1912 = vpack.c.b16 %v1903, %v1902
    %v1913 = vpack.c.b16 %v1905, %v1904
    %1922 = vmatprep.subr.bf16.mxu0 0
    %1923 = vmatpush1.bf16.msra.mxu0 %v1906
    %1924 = vmatprep.subr.bf16.mxu0 0
    %1925 = vmatpush1.bf16.msra.mxu0 %v1907
    %1926 = vmatprep.subr.bf16.mxu0 0
    %1927 = vmatpush1.bf16.msra.mxu0 %v1908
    %1928 = vmatprep.subr.bf16.mxu0 0
    %1929 = vmatpush1.bf16.msra.mxu0 %v1909
    %1930 = vmatprep.subr.bf16.mxu0 0
    %1931 = vmatpush1.bf16.msra.mxu0 %v1910
    %1932 = vmatprep.subr.bf16.mxu0 0
    %1933 = vmatpush1.bf16.msra.mxu0 %v1911
    %1934 = vmatprep.subr.bf16.mxu0 0
    %1935 = vmatpush1.bf16.msra.mxu0 %v1912
    %1936 = vmatprep.subr.bf16.mxu0 0
    %1937 = vmatpush1.bf16.msra.mxu0 %v1913
    %1938 = vmatprep.subr.bf16.mxu0 0
    %1939 = vmatpush1.bf16.msra.mxu0 0
    %1940 = vmatprep.subr.bf16.mxu0 0
    %1941 = vmatpush1.bf16.msra.mxu0 0
    %1942 = vmatprep.subr.bf16.mxu0 0
    %1943 = vmatpush1.bf16.msra.mxu0 0
    %1944 = vmatprep.subr.bf16.mxu0 0
    %1945 = vmatpush1.bf16.msra.mxu0 0
    %1946 = vmatprep.subr.bf16.mxu0 0
    %1947 = vmatpush1.bf16.msra.mxu0 0
    %1948 = vmatprep.subr.bf16.mxu0 0
    %1949 = vmatpush1.bf16.msra.mxu0 0
    %1950 = vmatprep.subr.bf16.mxu0 0
    %1951 = vmatpush1.bf16.msra.mxu0 0
    %1952 = vmatprep.subr.bf16.mxu0 0
    %1953 = vmatpush1.bf16.msra.mxu0 0
    %1954 = vmatprep.mubr.bf16.mxu0 0
    %1955 = vmatmul.mubr.bf16.gmra.mrb[0].mxu0 %v1850
    %v1956 = vpop.f32.mrb[0].mxu0
    %v1957 = vadd.f32 %v1872, %v1956
    %v1958 = vpop.f32.mrb[0].mxu0
    %v1959 = vpop.f32.mrb[0].mxu0
    %v1960 = vadd.f32 %v1872, %v1959
    %v1961 = vpop.f32.mrb[0].mxu0
    %1962 = vdwg.mxu0
    %v1963 = vmax.f32 %v1957, 0.0
    %v1964 = vmax.f32 %v1960, 0.0
    %v1965 = vpack.c.bf16 %v1964, %v1963
    %v1966 = vld [vmem:[#allocation11] sm:$0xf]
    %v1967 = vld [vmem:[#allocation11 + $0x4] sm:$0xf]
    %v1968 = vld [vmem:[#allocation11 + $0x8] sm:$0xf]
    %v1969 = vld [vmem:[#allocation11 + $0xc] sm:$0xf]
    %v1970 = vld [vmem:[#allocation11 + $0x10] sm:$0xf]
    %v1971 = vld [vmem:[#allocation11 + $0x14] sm:$0xf]
    %v1972 = vld [vmem:[#allocation11 + $0x18] sm:$0xf]
    %v1973 = vld [vmem:[#allocation11 + $0x1c] sm:$0xf]
    %v1974 = vld [vmem:[#allocation11 + $0x20] sm:$0xf]
    %v1975 = vld [vmem:[#allocation11 + $0x24] sm:$0xf]
    %v1976 = vld [vmem:[#allocation11 + $0x28] sm:$0xf]
    %v1977 = vld [vmem:[#allocation11 + $0x2c] sm:$0xf]
    %v1978 = vld [vmem:[#allocation11 + $0x30] sm:$0xf]
    %v1979 = vld [vmem:[#allocation11 + $0x34] sm:$0xf]
    %v1980 = vld [vmem:[#allocation11 + $0x38] sm:$0xf]
    %v1981 = vld [vmem:[#allocation11 + $0x3c] sm:$0xf]
    %v1982 = vld [vmem:[%s12] sm:$0x1]
    %v1984 = vlaneseq
    %v1985 = vshrl.u32 %v1984, 7
    %v1986 = vsub.s32 0, %v1985
    %v1987 = vrot.slane %v1982, %v1986
    %v2005 = vunpack.c.l.b16 %v1966
    %v2006 = vunpack.c.l.b16 %v1967
    %v2007 = vunpack.c.l.b16 %v1968
    %v2008 = vunpack.c.l.b16 %v1969
    %v2009 = vunpack.c.l.b16 %v1970
    %v2010 = vunpack.c.l.b16 %v1971
    %v2011 = vunpack.c.l.b16 %v1972
    %v2012 = vunpack.c.l.b16 %v1973
    %v2013 = vunpack.c.l.b16 %v1974
    %v2014 = vunpack.c.l.b16 %v1975
    %v2015 = vunpack.c.l.b16 %v1976
    %v2016 = vunpack.c.l.b16 %v1977
    %v2017 = vunpack.c.l.b16 %v1978
    %v2018 = vunpack.c.l.b16 %v1979
    %v2019 = vunpack.c.l.b16 %v1980
    %v2020 = vunpack.c.l.b16 %v1981
    %v2021 = vpack.c.b16 %v2006, %v2005
    %v2022 = vpack.c.b16 %v2008, %v2007
    %v2023 = vpack.c.b16 %v2010, %v2009
    %v2024 = vpack.c.b16 %v2012, %v2011
    %v2025 = vpack.c.b16 %v2014, %v2013
    %v2026 = vpack.c.b16 %v2016, %v2015
    %v2027 = vpack.c.b16 %v2018, %v2017
    %v2028 = vpack.c.b16 %v2020, %v2019
    %2037 = vmatprep.subr.bf16.mxu0 0
    %2038 = vmatpush1.bf16.msra.mxu0 %v2021
    %2039 = vmatprep.subr.bf16.mxu0 0
    %2040 = vmatpush1.bf16.msra.mxu0 %v2022
    %2041 = vmatprep.subr.bf16.mxu0 0
    %2042 = vmatpush1.bf16.msra.mxu0 %v2023
    %2043 = vmatprep.subr.bf16.mxu0 0
    %2044 = vmatpush1.bf16.msra.mxu0 %v2024
    %2045 = vmatprep.subr.bf16.mxu0 0
    %2046 = vmatpush1.bf16.msra.mxu0 %v2025
    %2047 = vmatprep.subr.bf16.mxu0 0
    %2048 = vmatpush1.bf16.msra.mxu0 %v2026
    %2049 = vmatprep.subr.bf16.mxu0 0
    %2050 = vmatpush1.bf16.msra.mxu0 %v2027
    %2051 = vmatprep.subr.bf16.mxu0 0
    %2052 = vmatpush1.bf16.msra.mxu0 %v2028
    %2053 = vmatprep.subr.bf16.mxu0 0
    %2054 = vmatpush1.bf16.msra.mxu0 0
    %2055 = vmatprep.subr.bf16.mxu0 0
    %2056 = vmatpush1.bf16.msra.mxu0 0
    %2057 = vmatprep.subr.bf16.mxu0 0
    %2058 = vmatpush1.bf16.msra.mxu0 0
    %2059 = vmatprep.subr.bf16.mxu0 0
    %2060 = vmatpush1.bf16.msra.mxu0 0
    %2061 = vmatprep.subr.bf16.mxu0 0
    %2062 = vmatpush1.bf16.msra.mxu0 0
    %2063 = vmatprep.subr.bf16.mxu0 0
    %2064 = vmatpush1.bf16.msra.mxu0 0
    %2065 = vmatprep.subr.bf16.mxu0 0
    %2066 = vmatpush1.bf16.msra.mxu0 0
    %2067 = vmatprep.subr.bf16.mxu0 0
    %2068 = vmatpush1.bf16.msra.mxu0 0
    %2069 = vmatprep.mubr.bf16.mxu0 0
    %2070 = vmatmul.mubr.bf16.gmra.mrb[0].mxu0 %v1965
    %v2071 = vpop.f32.mrb[0].mxu0
    %v2072 = vadd.f32 %v1987, %v2071
    %v2073 = vpop.f32.mrb[0].mxu0
    %v2074 = vpop.f32.mrb[0].mxu0
    %v2075 = vadd.f32 %v1987, %v2074
    %v2076 = vpop.f32.mrb[0].mxu0
    %2077 = vdwg.mxu0
    %2078 = vst [vmem:[%s13] sm:$0xff] %v2072
    %2079 = vst [vmem:[%s13 + $0x8] sm:$0xff] %v2075
    // Predicated region
    $region78: #{_forward.1} parent=1 // pred_check
      _
    $region79: #{_forward.1} parent=1 // pred_check_branch
      %2081 = sbr.rel (0) target = $region81
    $region80: #{_forward.1} parent=1 // pred_region
      _
    $region81: #{_forward.1} parent=1 // pred_fallthru
      _
    // Predicated region
    $region82: #{_forward.1} parent=1 // pred_check
      _
    $region83: #{_forward.1} parent=1 // pred_check_branch
      %2083 = sbr.rel (0) target = $region85
    $region84: #{_forward.1} parent=1 // pred_region
      _
    $region85: #{_forward.1} parent=1 // pred_fallthru
      _
    %2084 = vsyncpa [#allocation4], 1
    %2085 = vsyncpa [#allocation6], 1
    %2086 = vsyncpa [#allocation9], 1
    %2087 = vsyncpa [#allocation12], 1

</llo_original>
